<compile_context>
chip_gen: v7x
topology: tpu7x:2x2x1
jax: 0.10.0
libtpu: 0.0.40
codegen_flags: <defaults>
</compile_context>

<pallas_src>
import functools

import numpy as np
import jax
import jax.numpy as jnp
from jax.experimental import pallas as pl
from jax.experimental.pallas import tpu as pltpu

BN_EPS = 1e-5
VMEM_LIMIT = 32 * 1024 * 1024     # explicit budget, safe on v5e / v6e / v7x.


def _round_up(x, m):
  return (x + m - 1) // m * m


def _pad_axis(x, axis, mult):
  pad = (-x.shape[axis]) % mult
  if pad == 0:
    return x
  pads = [(0, 0)] * x.ndim
  pads[axis] = (0, pad)
  return jnp.pad(x, pads)


def _pad_vec(v, c8, fill):
  c = v.shape[0]
  v = v.astype(jnp.float32)
  if c == c8:
    return v
  return jnp.concatenate([v, jnp.full((c8 - c,), fill, jnp.float32)])


# --------------------------- max(|x|) reduction ----------------------------

def _maxabs_kernel(x_ref, o_ref):
  m = jnp.max(jnp.abs(x_ref[...]))
  o_ref[...] = jnp.maximum(jnp.zeros_like(o_ref), m)


def maxabs(x):
  """max(|x|) as a single-step Pallas reduction (whole input is one VMEM block)."""
  flat = _pad_axis(x.reshape(-1), 0, 8 * 128)   # zero-pad: |0| never wins the max
  x2 = flat.reshape(-1, 128)
  rows = x2.shape[0]
  out = pl.pallas_call(
      _maxabs_kernel,
      grid=(1,),
      in_specs=[pl.BlockSpec((rows, 128), lambda i: (0, 0))],
      out_specs=pl.BlockSpec((1, 1), lambda i: (0, 0)),
      out_shape=jax.ShapeDtypeStruct((1, 1), jnp.float32),
      compiler_params=pltpu.CompilerParams(
          dimension_semantics=("arbitrary",), vmem_limit_bytes=VMEM_LIMIT),
  )(x2)
  return out[0, 0]


# ------------------ fused conv (+ bias + optional BatchNorm) ----------------

def _conv_kernel(pT_ref, wT_ref, b_ref, *rest, bn, m_valid):
  """One (whole-layer) M tile: bf16 matmul (f32 acc) -> bias -> [fused train BN]."""
  if bn:
    g_ref, t_ref, yT_ref = rest
  else:
    (yT_ref,) = rest
  y = jnp.dot(wT_ref[...], pT_ref[...],
              preferred_element_type=jnp.float32)          # (c8, m_pad) f32
  bias = b_ref[...]                                        # (c8, 1) lane-broadcast
  y = y + bias
  if bn:
    m_pad = y.shape[1]
    n_pad = m_pad - m_valid
    s1 = jnp.sum(y, axis=1, keepdims=True)                 # (c8, 1)
    s2 = jnp.sum(y * y, axis=1, keepdims=True)
    if n_pad:
      # Padded patch columns are all-zero, so y there equals the bias: correct the
      # partial sums analytically instead of masking the whole tile.
      s1 = s1 - n_pad * bias
      s2 = s2 - n_pad * (bias * bias)
    inv_m = 1.0 / m_valid
    mean = s1 * inv_m
    var = jnp.maximum(s2 * inv_m - mean * mean, 0.0)       # biased var (torch training)
    a = g_ref[...] * jax.lax.rsqrt(var + BN_EPS)
    y = (y - mean) * a + t_ref[...]
  yT_ref[...] = y.astype(yT_ref.dtype)                     # lane-dense bf16 store


def fused_conv(pT, wT, b, gamma=None, beta=None, *, bn, n_split=1):
  """pT: (K, M) patches^T, wT: (C_out, K), b: (C_out,).  Returns yT (c8, m_pad) bf16."""
  k_dim, m = pT.shape
  cout = wT.shape[0]
  c8 = _round_up(cout, 8)
  if bn:
    n_split = 1                       # fused BN needs the whole M in one resident tile
  m_pad = _round_up(m, 128 * n_split)
  tile_m = m_pad // n_split

  pT = _pad_axis(pT.astype(jnp.bfloat16), 1, 128 * n_split)
  wT = _pad_axis(wT.astype(jnp.bfloat16), 0, 8)
  b2 = _pad_axis(b.astype(jnp.float32).reshape(cout, 1), 0, 8)

  kernel = functools.partial(_conv_kernel, bn=bn, m_valid=m)
  in_specs = [pl.BlockSpec((k_dim, tile_m), lambda i: (0, i)),
              pl.BlockSpec((c8, k_dim), lambda i: (0, 0)),
              pl.BlockSpec((c8, 1), lambda i: (0, 0))]
  args = [pT, wT, b2]
  if bn:
    g2 = _pad_vec(gamma, c8, 1.0).reshape(c8, 1)
    t2 = _pad_vec(beta, c8, 0.0).reshape(c8, 1)
    in_specs += [pl.BlockSpec((c8, 1), lambda i: (0, 0)),
                 pl.BlockSpec((c8, 1), lambda i: (0, 0))]
    args += [g2, t2]

  yT = pl.pallas_call(
      kernel,
      grid=(n_split,),
      in_specs=in_specs,
      out_specs=pl.BlockSpec((c8, tile_m), lambda i: (0, i)),
      out_shape=jax.ShapeDtypeStruct((c8, m_pad), jnp.bfloat16),
      compiler_params=pltpu.CompilerParams(
          dimension_semantics=("parallel",), vmem_limit_bytes=VMEM_LIMIT),
  )(*args)
  return yT


# --------------------- fused ReLU + bilinear x2 upsample --------------------

def _relu_up_kernel(x_ref, u_ref, o_ref):
  x = jnp.maximum(x_ref[...], 0)
  if u_ref.shape[0] == 1:     # 1x1 spatial: align_corners upsample == replicate
    o_ref[...] = (jnp.broadcast_to(x, o_ref.shape)
                  * jnp.broadcast_to(u_ref[...], o_ref.shape))
  else:
    o_ref[...] = jnp.dot(x, u_ref[...],
                         preferred_element_type=jnp.float32).astype(o_ref.dtype)


def _upsample_matrix(h):
  """2x bilinear upsample matrix, align_corners=True (matches nn.Upsample)."""
  hout = 2 * h
  a = np.zeros((hout, h), dtype=np.float32)
  if h == 1:
    a[:, 0] = 1.0
    return a
  for i in range(hout):
    src = i * (h - 1) / (hout - 1)
    i0 = int(np.floor(src))
    i1 = min(i0 + 1, h - 1)
    w1 = src - i0
    a[i, i0] += 1.0 - w1
    a[i, i1] += w1
  return a


def relu_bilinear_up2(x_cm):
  """x_cm: (C, N, H, W) bf16 -> relu -> 2x bilinear upsample -> (C, N, 2H, 2W) bf16."""
  c, n, h, w = x_cm.shape
  ut = jnp.asarray(np.kron(_upsample_matrix(h), _upsample_matrix(w)).T,
                   dtype=jnp.bfloat16)                      # (HW, 4HW)
  rows = c * n
  x2 = x_cm.reshape(rows, h * w)
  y2 = pl.pallas_call(
      _relu_up_kernel,
      grid=(1,),
      in_specs=[pl.BlockSpec((rows, h * w), lambda i: (0, 0)),
                pl.BlockSpec((h * w, 4 * h * w), lambda i: (0, 0))],
      out_specs=pl.BlockSpec((rows, 4 * h * w), lambda i: (0, 0)),
      out_shape=jax.ShapeDtypeStruct((rows, 4 * h * w), jnp.bfloat16),
      compiler_params=pltpu.CompilerParams(
          dimension_semantics=("arbitrary",), vmem_limit_bytes=VMEM_LIMIT),
  )(x2, ut)
  return y2.reshape(c, n, 2 * h, 2 * w)


# ------------------------------- JAX glue -----------------------------------

def im2col_cm(x, k, stride, pad):
  """x: (C, N, H, W) -> patches^T (k*k*C, N*Ho*Wo); rows ordered (kh, kw, c_in)."""
  c, n, h, w = x.shape
  xp = jnp.pad(x, ((0, 0), (0, 0), (pad, pad), (pad, pad)))
  ho = (h + 2 * pad - k) // stride + 1
  wo = (w + 2 * pad - k) // stride + 1
  rows = []
  for i in range(k):
    for j in range(k):
      rows.append(xp[:, :, i:i + stride * ho:stride, j:j + stride * wo:stride])
  p = jnp.stack(rows, axis=0)            # (k*k, C, N, Ho, Wo)
  return p.reshape(k * k * c, n * ho * wo), (n, ho, wo)


def conv_w_T(w):
  """torch Conv2d weight (C_out, C_in, k, k) -> (C_out, k*k*C_in), cols (kh, kw, c)."""
  cout, cin, k, _ = w.shape
  return jnp.transpose(w, (0, 2, 3, 1)).reshape(cout, k * k * cin)


def _pre_act(x, act):
  """Apply the pre-activation once per element (glue; fuses into im2col)."""
  if act == "leaky":
    return jnp.where(x >= 0, x, 0.2 * x)
  if act == "relu":
    return jnp.maximum(x, 0)
  return x


def conv_block(x_cm, w, b, gamma=None, beta=None, *, k, stride, pad, act, bn,
               n_split=1):
  """[pre-act] -> Conv2d -> [fused BatchNorm(train)]; returns (C_out, N, Ho, Wo) bf16."""
  x_cm = _pre_act(x_cm, act)
  pT, (n, ho, wo) = im2col_cm(x_cm, k, stride, pad)
  m = n * ho * wo
  cout = w.shape[0]
  yT = fused_conv(pT, conv_w_T(w), b, gamma, beta, bn=bn, n_split=n_split)
  return yT[:cout, :m].reshape(cout, n, ho, wo)


def up_block(x_cm, prm, *, k, pad):
  """blockUNet(transposed=True): ReLU -> bilinear x2 -> Conv2d(k, s=1, pad) -> BN."""
  w, b, g, bt = prm
  xu = relu_bilinear_up2(x_cm)
  return conv_block(xu, w, b, g, bt, k=k, stride=1, pad=pad, act="none", bn=True)


def tconv_packed_wT(wt):
  """Sub-pixel decomposition of ConvTranspose2d(k=4, s=2, p=1).

  Returns (4*C_out, 9*C_in): the four 2x2 stride-phase kernels embedded into a 3x3
  window so a single k=3/pad=1 im2col + one matmul produces all four output phases."""
  cin, cout = wt.shape[0], wt.shape[1]
  sel = ((3, 1, -1), (-1, 2, 0))   # sel[phase][window_pos] -> kernel tap (-1 = zero)
  zero = jnp.zeros((cin, cout), wt.dtype)
  row_blocks = []
  for dh in range(3):
    for dw in range(3):
      cols = []
      for a in range(2):
        for bph in range(2):
          kh, kw = sel[a][dh], sel[bph][dw]
          cols.append(zero if (kh < 0 or kw < 0) else wt[:, :, kh, kw])
      row_blocks.append(jnp.stack(cols, axis=1).reshape(cin, 4 * cout))
  return jnp.concatenate(row_blocks, axis=0).T    # (4*C_out, 9*C_in)


def tconv_block(x_cm, wt, b, scale):
  """ReLU -> ConvTranspose2d(4, 2, 1) -> *scale (scale folded into weights/bias)."""
  cin, n, h, w = x_cm.shape
  cout = wt.shape[1]
  x_cm = _pre_act(x_cm, "relu")
  pT, _ = im2col_cm(x_cm, 3, 1, 1)
  wT = tconv_packed_wT(wt) * scale
  bias = jnp.tile(b, 4) * scale
  yT = fused_conv(pT, wT, bias, bn=False, n_split=2)
  m = n * h * w
  y = yT[:4 * cout, :m].reshape(2, 2, cout, n, h, w)
  # depth-to-space: out[c, n, 2i+a, 2j+b] = y[a, b, c, n, i, j]
  y = jnp.transpose(y, (2, 3, 4, 0, 5, 1)).reshape(cout, n, 2 * h, 2 * w)
  return y


# --------------------------- parameters & forward ---------------------------

def init_params(key):
  ca = [2, 4, 8, 16, 32, 32, 2]
  keys = iter(jax.random.split(key, 40))

  def conv_p(cin, cout, k):
    w = 0.1 * jax.random.normal(next(keys), (cout, cin, k, k), jnp.float32)
    b = 0.05 * jax.random.normal(next(keys), (cout,), jnp.float32)
    return w, b

  def bn_p(c):
    g = 1.0 + 0.1 * jax.random.normal(next(keys), (c,), jnp.float32)
    bt = 0.1 * jax.random.normal(next(keys), (c,), jnp.float32)
    return g, bt

  p = {}
  p["layer1"] = conv_p(ca[0], ca[1], 4)
  p["layer2"] = conv_p(ca[1], ca[2], 4) + bn_p(ca[2])
  p["layer3"] = conv_p(ca[2], ca[3], 4) + bn_p(ca[3])
  p["layer4"] = conv_p(ca[3], ca[4], 4) + bn_p(ca[4])
  p["layer5"] = conv_p(ca[4], ca[5], 2) + bn_p(ca[5])
  p["dlayer5"] = conv_p(ca[5], ca[4], 1) + bn_p(ca[4])
  p["dlayer4"] = conv_p(ca[4] * 2, ca[3], 3) + bn_p(ca[3])
  p["dlayer3"] = conv_p(ca[3] * 2, ca[2], 3) + bn_p(ca[2])
  p["dlayer2"] = conv_p(ca[2] * 2, ca[1], 3) + bn_p(ca[1])
  wt = 0.1 * jax.random.normal(next(keys), (ca[1] * 2, ca[6], 4, 4), jnp.float32)
  bt = 0.05 * jax.random.normal(next(keys), (ca[6],), jnp.float32)
  p["dlayer1"] = (wt, bt)
  return p


def unet_forward(x_nchw, params):
  x_nchw = x_nchw.astype(jnp.float32)

  # scale = max(|x|) (single-step Pallas reduction).  The x/scale and out*scale passes
  # are folded into layer1's / dlayer1's weights+bias (the convs are linear).
  s = maxabs(x_nchw)
  s = jnp.where(s > 0.0, s, 1.0)   # NOTE: torch would emit NaN for an all-zero input

  x = jnp.transpose(x_nchw, (1, 0, 2, 3)).astype(jnp.bfloat16)   # (C, N, H, W) bf16

  w1, b1 = params["layer1"]
  out1 = conv_block(x, w1 / s, b1, k=4, stride=2, pad=1, act="none", bn=False,
                    n_split=2)    # M=512: 2 "parallel" steps for v7x's 2nd TensorCore

  w2, b2, g2, t2 = params["layer2"]
  out2 = conv_block(out1, w2, b2, g2, t2, k=4, stride=2, pad=1, act="leaky", bn=True)
  w3, b3, g3, t3 = params["layer3"]
  out3 = conv_block(out2, w3, b3, g3, t3, k=4, stride=2, pad=1, act="leaky", bn=True)
  w4, b4, g4, t4 = params["layer4"]
  out4 = conv_block(out3, w4, b4, g4, t4, k=4, stride=2, pad=1, act="leaky", bn=True)
  w5, b5, g5, t5 = params["layer5"]
  out5 = conv_block(out4, w5, b5, g5, t5, k=2, stride=2, pad=0, act="leaky", bn=True)

  dout5 = up_block(out5, params["dlayer5"], k=1, pad=0)
  dout4 = up_block(jnp.concatenate([dout5, out4], axis=0), params["dlayer4"], k=3, pad=1)
  dout3 = up_block(jnp.concatenate([dout4, out3], axis=0), params["dlayer3"], k=3, pad=1)
  dout2 = up_block(jnp.concatenate([dout3, out2], axis=0), params["dlayer2"], k=3, pad=1)

  wt, bt1 = params["dlayer1"]
  dout1 = tconv_block(jnp.concatenate([dout2, out1], axis=0), wt, bt1, s)
  return jnp.transpose(dout1, (1, 0, 2, 3)).astype(jnp.float32)  # back to NCHW, f32


if __name__ == "__main__":
  key = jax.random.PRNGKey(0)
  kx, kp = jax.random.split(key)
  # in_channels = channel_array[0] = 2; spatial >= 32 so the 5-level encoder
  # bottoms out at 1x1 (as the module implies).
  x = jax.random.normal(kx, (2, 2, 32, 32), jnp.float32)  # NCHW
  params = init_params(kp)

  fwd = jax.jit(unet_forward)
  y = jax.block_until_ready(fwd(x, params))

  assert y.shape == (2, 2, 32, 32), y.shape
  assert bool(jnp.all(jnp.isfinite(y)))
  print("KERNEL_OK")
</pallas_src>

<mosaic_0001>
module attributes {stable_mosaic.version = 11 : i64} {
  func.func @_maxabs_kernel(%arg0: i32, %arg1: memref<32x128xf32, #tpu.memory_space<vmem>>, %arg2: memref<1x1xf32, #tpu.memory_space<vmem>>) attributes {dimension_semantics = [#tpu.dimension_semantics<arbitrary>], iteration_bounds = array<i64: 1>, scalar_prefetch = 0 : i64, scratch_operands = 0 : i64, tpu.core_type = #tpu.core_type<tc>, window_params = [{pipeline_mode = #tpu.pipeline_mode<synchronous>, transform_indices = @transform_0, window_bounds = array<i64: 32, 128>}, {pipeline_mode = #tpu.pipeline_mode<synchronous>, transform_indices = @transform_1, window_bounds = array<i64: 1, 1>}]} {
    %c0 = arith.constant 0 : index
    %c0_0 = arith.constant 0 : index
    %0 = vector.load %arg1[%c0, %c0_0] : memref<32x128xf32, #tpu.memory_space<vmem>>, vector<32x128xf32>
    %1 = math.absf %0 : vector<32x128xf32>
    %2 = vector.shape_cast %1 : vector<32x128xf32> to vector<1x32x128xf32>
    %cst = arith.constant dense<0xFF800000> : vector<1xf32>
    %3 = vector.multi_reduction <maximumf>, %2, %cst [1, 2] : vector<1x32x128xf32> to vector<1xf32>
    %4 = vector.shape_cast %3 : vector<1xf32> to vector<1x1x1xf32>
    %5 = vector.extract %4[0, 0, 0] : f32 from vector<1x1x1xf32>
    %cst_1 = arith.constant 0.000000e+00 : f32
    %6 = vector.broadcast %cst_1 : f32 to vector<1x1xf32>
    %7 = vector.broadcast %5 : f32 to vector<1x1xf32>
    %8 = arith.maximumf %6, %7 : vector<1x1xf32>
    %c0_2 = arith.constant 0 : index
    %c0_3 = arith.constant 0 : index
    %9 = vector.load %arg2[%c0_2, %c0_3] : memref<1x1xf32, #tpu.memory_space<vmem>>, vector<1x1xf32>
    tpu.vector_store %arg2[%c0_2, %c0_3], %8 {strides = array<i32>} : memref<1x1xf32, #tpu.memory_space<vmem>>, vector<1x1xf32>,
    return
  }
  func.func @transform_0(%arg0: i32) -> (i32, i32) {
    %c0_i32 = arith.constant 0 : i32
    %c0_i32_0 = arith.constant 0 : i32
    %c0_i32_1 = arith.constant 0 : i32
    return %c0_i32, %c0_i32_0 : i32, i32
  }
  func.func @transform_1(%arg0: i32) -> (i32, i32) {
    %c0_i32 = arith.constant 0 : i32
    %c0_i32_0 = arith.constant 0 : i32
    %c0_i32_1 = arith.constant 0 : i32
    return %c0_i32, %c0_i32_0 : i32, i32
  }
}

module attributes {stable_mosaic.version = 11 : i64} {
  func.func @_conv_kernel(%arg0: i32, %arg1: memref<32x256xbf16, #tpu.memory_space<vmem>>, %arg2: memref<8x32xbf16, #tpu.memory_space<vmem>>, %arg3: memref<8x1xf32, #tpu.memory_space<vmem>>, %arg4: memref<8x256xbf16, #tpu.memory_space<vmem>>) attributes {dimension_semantics = [#tpu.dimension_semantics<parallel>], iteration_bounds = array<i64: 2>, scalar_prefetch = 0 : i64, scratch_operands = 0 : i64, tpu.core_type = #tpu.core_type<tc>, window_params = [{transform_indices = @transform_0, window_bounds = array<i64: 32, 256>}, {pipeline_mode = #tpu.pipeline_mode<synchronous>, transform_indices = @transform_1, window_bounds = array<i64: 8, 32>}, {pipeline_mode = #tpu.pipeline_mode<synchronous>, transform_indices = @transform_2, window_bounds = array<i64: 8, 1>}, {transform_indices = @transform_3, window_bounds = array<i64: 8, 256>}]} {
    %c0 = arith.constant 0 : index
    %c0_0 = arith.constant 0 : index
    %0 = vector.load %arg2[%c0, %c0_0] : memref<8x32xbf16, #tpu.memory_space<vmem>>, vector<8x32xbf16>
    %c0_1 = arith.constant 0 : index
    %c0_2 = arith.constant 0 : index
    %1 = vector.load %arg1[%c0_1, %c0_2] : memref<32x256xbf16, #tpu.memory_space<vmem>>, vector<32x256xbf16>
    %cst = arith.constant dense<0.000000e+00> : vector<8x256xf32>
    %2 = tpu.matmul %0, %1, %cst {dimension_numbers = #tpu.dot_dimension_numbers<[1], [0], [0], [1], [0, 0, 1, 1], [], []>} : vector<8x32xbf16>, vector<32x256xbf16>, vector<8x256xf32> -> vector<8x256xf32>
    %c0_3 = arith.constant 0 : index
    %c0_4 = arith.constant 0 : index
    %3 = vector.load %arg3[%c0_3, %c0_4] : memref<8x1xf32, #tpu.memory_space<vmem>>, vector<8x1xf32>
    %4 = vector.broadcast %3 : vector<8x1xf32> to vector<8x256xf32>
    %5 = arith.addf %2, %4 : vector<8x256xf32>
    %6 = arith.truncf %5 : vector<8x256xf32> to vector<8x256xbf16>
    %c0_5 = arith.constant 0 : index
    %c0_6 = arith.constant 0 : index
    %7 = vector.load %arg4[%c0_5, %c0_6] : memref<8x256xbf16, #tpu.memory_space<vmem>>, vector<8x256xbf16>
    tpu.vector_store %arg4[%c0_5, %c0_6], %6 {strides = array<i32>} : memref<8x256xbf16, #tpu.memory_space<vmem>>, vector<8x256xbf16>,
    return
  }
  func.func @transform_0(%arg0: i32) -> (i32, i32) {
    %c0_i32 = arith.constant 0 : i32
    %c0_i32_0 = arith.constant 0 : i32
    return %c0_i32, %arg0 : i32, i32
  }
  func.func @transform_1(%arg0: i32) -> (i32, i32) {
    %c0_i32 = arith.constant 0 : i32
    %c0_i32_0 = arith.constant 0 : i32
    %c0_i32_1 = arith.constant 0 : i32
    return %c0_i32, %c0_i32_0 : i32, i32
  }
  func.func @transform_2(%arg0: i32) -> (i32, i32) {
    %c0_i32 = arith.constant 0 : i32
    %c0_i32_0 = arith.constant 0 : i32
    %c0_i32_1 = arith.constant 0 : i32
    return %c0_i32, %c0_i32_0 : i32, i32
  }
  func.func @transform_3(%arg0: i32) -> (i32, i32) {
    %c0_i32 = arith.constant 0 : i32
    %c0_i32_0 = arith.constant 0 : i32
    return %c0_i32, %arg0 : i32, i32
  }
}

module attributes {stable_mosaic.version = 11 : i64} {
  func.func @_conv_kernel(%arg0: i32, %arg1: memref<64x128xbf16, #tpu.memory_space<vmem>>, %arg2: memref<8x64xbf16, #tpu.memory_space<vmem>>, %arg3: memref<8x1xf32, #tpu.memory_space<vmem>>, %arg4: memref<8x1xf32, #tpu.memory_space<vmem>>, %arg5: memref<8x1xf32, #tpu.memory_space<vmem>>, %arg6: memref<8x128xbf16, #tpu.memory_space<vmem>>) attributes {dimension_semantics = [#tpu.dimension_semantics<parallel>], iteration_bounds = array<i64: 1>, scalar_prefetch = 0 : i64, scratch_operands = 0 : i64, tpu.core_type = #tpu.core_type<tc>, window_params = [{transform_indices = @transform_0, window_bounds = array<i64: 64, 128>}, {pipeline_mode = #tpu.pipeline_mode<synchronous>, transform_indices = @transform_1, window_bounds = array<i64: 8, 64>}, {pipeline_mode = #tpu.pipeline_mode<synchronous>, transform_indices = @transform_2, window_bounds = array<i64: 8, 1>}, {pipeline_mode = #tpu.pipeline_mode<synchronous>, transform_indices = @transform_3, window_bounds = array<i64: 8, 1>}, {pipeline_mode = #tpu.pipeline_mode<synchronous>, transform_indices = @transform_4, window_bounds = array<i64: 8, 1>}, {transform_indices = @transform_5, window_bounds = array<i64: 8, 128>}]} {
    %c0 = arith.constant 0 : index
    %c0_0 = arith.constant 0 : index
    %0 = vector.load %arg2[%c0, %c0_0] : memref<8x64xbf16, #tpu.memory_space<vmem>>, vector<8x64xbf16>
    %c0_1 = arith.constant 0 : index
    %c0_2 = arith.constant 0 : index
    %1 = vector.load %arg1[%c0_1, %c0_2] : memref<64x128xbf16, #tpu.memory_space<vmem>>, vector<64x128xbf16>
    %cst = arith.constant dense<0.000000e+00> : vector<8x128xf32>
    %2 = tpu.matmul %0, %1, %cst {dimension_numbers = #tpu.dot_dimension_numbers<[1], [0], [0], [1], [0, 0, 1, 1], [], []>} : vector<8x64xbf16>, vector<64x128xbf16>, vector<8x128xf32> -> vector<8x128xf32>
    %c0_3 = arith.constant 0 : index
    %c0_4 = arith.constant 0 : index
    %3 = vector.load %arg3[%c0_3, %c0_4] : memref<8x1xf32, #tpu.memory_space<vmem>>, vector<8x1xf32>
    %4 = vector.broadcast %3 : vector<8x1xf32> to vector<8x128xf32>
    %5 = arith.addf %2, %4 : vector<8x128xf32>
    %cst_5 = arith.constant dense<0.000000e+00> : vector<8xf32>
    %6 = vector.multi_reduction <add>, %5, %cst_5 [1] : vector<8x128xf32> to vector<8xf32>
    %7 = vector.shape_cast %6 : vector<8xf32> to vector<8x1xf32>
    %8 = arith.mulf %5, %5 : vector<8x128xf32>
    %cst_6 = arith.constant dense<0.000000e+00> : vector<8xf32>
    %9 = vector.multi_reduction <add>, %8, %cst_6 [1] : vector<8x128xf32> to vector<8xf32>
    %10 = vector.shape_cast %9 : vector<8xf32> to vector<8x1xf32>
    %cst_7 = arith.constant 7.812500e-03 : f32
    %11 = vector.broadcast %cst_7 : f32 to vector<8x1xf32>
    %12 = arith.mulf %7, %11 : vector<8x1xf32>
    %cst_8 = arith.constant 7.812500e-03 : f32
    %13 = vector.broadcast %cst_8 : f32 to vector<8x1xf32>
    %14 = arith.mulf %10, %13 : vector<8x1xf32>
    %15 = arith.mulf %12, %12 : vector<8x1xf32>
    %16 = arith.subf %14, %15 : vector<8x1xf32>
    %cst_9 = arith.constant 0.000000e+00 : f32
    %17 = vector.broadcast %cst_9 : f32 to vector<8x1xf32>
    %18 = arith.maximumf %16, %17 : vector<8x1xf32>
    %c0_10 = arith.constant 0 : index
    %c0_11 = arith.constant 0 : index
    %19 = vector.load %arg4[%c0_10, %c0_11] : memref<8x1xf32, #tpu.memory_space<vmem>>, vector<8x1xf32>
    %cst_12 = arith.constant 9.99999974E-6 : f32
    %20 = vector.broadcast %cst_12 : f32 to vector<8x1xf32>
    %21 = arith.addf %18, %20 : vector<8x1xf32>
    %22 = math.rsqrt %21 : vector<8x1xf32>
    %23 = arith.mulf %19, %22 : vector<8x1xf32>
    %24 = vector.broadcast %12 : vector<8x1xf32> to vector<8x128xf32>
    %25 = arith.subf %5, %24 : vector<8x128xf32>
    %26 = vector.broadcast %23 : vector<8x1xf32> to vector<8x128xf32>
    %27 = arith.mulf %25, %26 : vector<8x128xf32>
    %c0_13 = arith.constant 0 : index
    %c0_14 = arith.constant 0 : index
    %28 = vector.load %arg5[%c0_13, %c0_14] : memref<8x1xf32, #tpu.memory_space<vmem>>, vector<8x1xf32>
    %29 = vector.broadcast %28 : vector<8x1xf32> to vector<8x128xf32>
    %30 = arith.addf %27, %29 : vector<8x128xf32>
    %31 = arith.truncf %30 : vector<8x128xf32> to vector<8x128xbf16>
    %c0_15 = arith.constant 0 : index
    %c0_16 = arith.constant 0 : index
    %32 = vector.load %arg6[%c0_15, %c0_16] : memref<8x128xbf16, #tpu.memory_space<vmem>>, vector<8x128xbf16>
    tpu.vector_store %arg6[%c0_15, %c0_16], %31 {strides = array<i32>} : memref<8x128xbf16, #tpu.memory_space<vmem>>, vector<8x128xbf16>,
    return
  }
  func.func @transform_0(%arg0: i32) -> (i32, i32) {
    %c0_i32 = arith.constant 0 : i32
    %c0_i32_0 = arith.constant 0 : i32
    return %c0_i32, %arg0 : i32, i32
  }
  func.func @transform_1(%arg0: i32) -> (i32, i32) {
    %c0_i32 = arith.constant 0 : i32
    %c0_i32_0 = arith.constant 0 : i32
    %c0_i32_1 = arith.constant 0 : i32
    return %c0_i32, %c0_i32_0 : i32, i32
  }
  func.func @transform_2(%arg0: i32) -> (i32, i32) {
    %c0_i32 = arith.constant 0 : i32
    %c0_i32_0 = arith.constant 0 : i32
    %c0_i32_1 = arith.constant 0 : i32
    return %c0_i32, %c0_i32_0 : i32, i32
  }
  func.func @transform_3(%arg0: i32) -> (i32, i32) {
    %c0_i32 = arith.constant 0 : i32
    %c0_i32_0 = arith.constant 0 : i32
    %c0_i32_1 = arith.constant 0 : i32
    return %c0_i32, %c0_i32_0 : i32, i32
  }
  func.func @transform_4(%arg0: i32) -> (i32, i32) {
    %c0_i32 = arith.constant 0 : i32
    %c0_i32_0 = arith.constant 0 : i32
    %c0_i32_1 = arith.constant 0 : i32
    return %c0_i32, %c0_i32_0 : i32, i32
  }
  func.func @transform_5(%arg0: i32) -> (i32, i32) {
    %c0_i32 = arith.constant 0 : i32
    %c0_i32_0 = arith.constant 0 : i32
    return %c0_i32, %arg0 : i32, i32
  }
}

module attributes {stable_mosaic.version = 11 : i64} {
  func.func @_conv_kernel(%arg0: i32, %arg1: memref<128x128xbf16, #tpu.memory_space<vmem>>, %arg2: memref<16x128xbf16, #tpu.memory_space<vmem>>, %arg3: memref<16x1xf32, #tpu.memory_space<vmem>>, %arg4: memref<16x1xf32, #tpu.memory_space<vmem>>, %arg5: memref<16x1xf32, #tpu.memory_space<vmem>>, %arg6: memref<16x128xbf16, #tpu.memory_space<vmem>>) attributes {dimension_semantics = [#tpu.dimension_semantics<parallel>], iteration_bounds = array<i64: 1>, scalar_prefetch = 0 : i64, scratch_operands = 0 : i64, tpu.core_type = #tpu.core_type<tc>, window_params = [{transform_indices = @transform_0, window_bounds = array<i64: 128, 128>}, {pipeline_mode = #tpu.pipeline_mode<synchronous>, transform_indices = @transform_1, window_bounds = array<i64: 16, 128>}, {pipeline_mode = #tpu.pipeline_mode<synchronous>, transform_indices = @transform_2, window_bounds = array<i64: 16, 1>}, {pipeline_mode = #tpu.pipeline_mode<synchronous>, transform_indices = @transform_3, window_bounds = array<i64: 16, 1>}, {pipeline_mode = #tpu.pipeline_mode<synchronous>, transform_indices = @transform_4, window_bounds = array<i64: 16, 1>}, {transform_indices = @transform_5, window_bounds = array<i64: 16, 128>}]} {
    %c0 = arith.constant 0 : index
    %c0_0 = arith.constant 0 : index
    %0 = vector.load %arg2[%c0, %c0_0] : memref<16x128xbf16, #tpu.memory_space<vmem>>, vector<16x128xbf16>
    %c0_1 = arith.constant 0 : index
    %c0_2 = arith.constant 0 : index
    %1 = vector.load %arg1[%c0_1, %c0_2] : memref<128x128xbf16, #tpu.memory_space<vmem>>, vector<128x128xbf16>
    %cst = arith.constant dense<0.000000e+00> : vector<16x128xf32>
    %2 = tpu.matmul %0, %1, %cst {dimension_numbers = #tpu.dot_dimension_numbers<[1], [0], [0], [1], [0, 0, 1, 1], [], []>} : vector<16x128xbf16>, vector<128x128xbf16>, vector<16x128xf32> -> vector<16x128xf32>
    %c0_3 = arith.constant 0 : index
    %c0_4 = arith.constant 0 : index
    %3 = vector.load %arg3[%c0_3, %c0_4] : memref<16x1xf32, #tpu.memory_space<vmem>>, vector<16x1xf32>
    %4 = vector.broadcast %3 : vector<16x1xf32> to vector<16x128xf32>
    %5 = arith.addf %2, %4 : vector<16x128xf32>
    %cst_5 = arith.constant dense<0.000000e+00> : vector<16xf32>
    %6 = vector.multi_reduction <add>, %5, %cst_5 [1] : vector<16x128xf32> to vector<16xf32>
    %7 = vector.shape_cast %6 : vector<16xf32> to vector<16x1xf32>
    %8 = arith.mulf %5, %5 : vector<16x128xf32>
    %cst_6 = arith.constant dense<0.000000e+00> : vector<16xf32>
    %9 = vector.multi_reduction <add>, %8, %cst_6 [1] : vector<16x128xf32> to vector<16xf32>
    %10 = vector.shape_cast %9 : vector<16xf32> to vector<16x1xf32>
    %cst_7 = arith.constant 9.600000e+01 : f32
    %11 = vector.broadcast %cst_7 : f32 to vector<16x1xf32>
    %12 = arith.mulf %11, %3 : vector<16x1xf32>
    %13 = arith.subf %7, %12 : vector<16x1xf32>
    %14 = arith.mulf %3, %3 : vector<16x1xf32>
    %cst_8 = arith.constant 9.600000e+01 : f32
    %15 = vector.broadcast %cst_8 : f32 to vector<16x1xf32>
    %16 = arith.mulf %15, %14 : vector<16x1xf32>
    %17 = arith.subf %10, %16 : vector<16x1xf32>
    %cst_9 = arith.constant 3.125000e-02 : f32
    %18 = vector.broadcast %cst_9 : f32 to vector<16x1xf32>
    %19 = arith.mulf %13, %18 : vector<16x1xf32>
    %cst_10 = arith.constant 3.125000e-02 : f32
    %20 = vector.broadcast %cst_10 : f32 to vector<16x1xf32>
    %21 = arith.mulf %17, %20 : vector<16x1xf32>
    %22 = arith.mulf %19, %19 : vector<16x1xf32>
    %23 = arith.subf %21, %22 : vector<16x1xf32>
    %cst_11 = arith.constant 0.000000e+00 : f32
    %24 = vector.broadcast %cst_11 : f32 to vector<16x1xf32>
    %25 = arith.maximumf %23, %24 : vector<16x1xf32>
    %c0_12 = arith.constant 0 : index
    %c0_13 = arith.constant 0 : index
    %26 = vector.load %arg4[%c0_12, %c0_13] : memref<16x1xf32, #tpu.memory_space<vmem>>, vector<16x1xf32>
    %cst_14 = arith.constant 9.99999974E-6 : f32
    %27 = vector.broadcast %cst_14 : f32 to vector<16x1xf32>
    %28 = arith.addf %25, %27 : vector<16x1xf32>
    %29 = math.rsqrt %28 : vector<16x1xf32>
    %30 = arith.mulf %26, %29 : vector<16x1xf32>
    %31 = vector.broadcast %19 : vector<16x1xf32> to vector<16x128xf32>
    %32 = arith.subf %5, %31 : vector<16x128xf32>
    %33 = vector.broadcast %30 : vector<16x1xf32> to vector<16x128xf32>
    %34 = arith.mulf %32, %33 : vector<16x128xf32>
    %c0_15 = arith.constant 0 : index
    %c0_16 = arith.constant 0 : index
    %35 = vector.load %arg5[%c0_15, %c0_16] : memref<16x1xf32, #tpu.memory_space<vmem>>, vector<16x1xf32>
    %36 = vector.broadcast %35 : vector<16x1xf32> to vector<16x128xf32>
    %37 = arith.addf %34, %36 : vector<16x128xf32>
    %38 = arith.truncf %37 : vector<16x128xf32> to vector<16x128xbf16>
    %c0_17 = arith.constant 0 : index
    %c0_18 = arith.constant 0 : index
    %39 = vector.load %arg6[%c0_17, %c0_18] : memref<16x128xbf16, #tpu.memory_space<vmem>>, vector<16x128xbf16>
    tpu.vector_store %arg6[%c0_17, %c0_18], %38 {strides = array<i32>} : memref<16x128xbf16, #tpu.memory_space<vmem>>, vector<16x128xbf16>,
    return
  }
  func.func @transform_0(%arg0: i32) -> (i32, i32) {
    %c0_i32 = arith.constant 0 : i32
    %c0_i32_0 = arith.constant 0 : i32
    return %c0_i32, %arg0 : i32, i32
  }
  func.func @transform_1(%arg0: i32) -> (i32, i32) {
    %c0_i32 = arith.constant 0 : i32
    %c0_i32_0 = arith.constant 0 : i32
    %c0_i32_1 = arith.constant 0 : i32
    return %c0_i32, %c0_i32_0 : i32, i32
  }
  func.func @transform_2(%arg0: i32) -> (i32, i32) {
    %c0_i32 = arith.constant 0 : i32
    %c0_i32_0 = arith.constant 0 : i32
    %c0_i32_1 = arith.constant 0 : i32
    return %c0_i32, %c0_i32_0 : i32, i32
  }
  func.func @transform_3(%arg0: i32) -> (i32, i32) {
    %c0_i32 = arith.constant 0 : i32
    %c0_i32_0 = arith.constant 0 : i32
    %c0_i32_1 = arith.constant 0 : i32
    return %c0_i32, %c0_i32_0 : i32, i32
  }
  func.func @transform_4(%arg0: i32) -> (i32, i32) {
    %c0_i32 = arith.constant 0 : i32
    %c0_i32_0 = arith.constant 0 : i32
    %c0_i32_1 = arith.constant 0 : i32
    return %c0_i32, %c0_i32_0 : i32, i32
  }
  func.func @transform_5(%arg0: i32) -> (i32, i32) {
    %c0_i32 = arith.constant 0 : i32
    %c0_i32_0 = arith.constant 0 : i32
    return %c0_i32, %arg0 : i32, i32
  }
}

module attributes {stable_mosaic.version = 11 : i64} {
  func.func @_conv_kernel(%arg0: i32, %arg1: memref<256x128xbf16, #tpu.memory_space<vmem>>, %arg2: memref<32x256xbf16, #tpu.memory_space<vmem>>, %arg3: memref<32x1xf32, #tpu.memory_space<vmem>>, %arg4: memref<32x1xf32, #tpu.memory_space<vmem>>, %arg5: memref<32x1xf32, #tpu.memory_space<vmem>>, %arg6: memref<32x128xbf16, #tpu.memory_space<vmem>>) attributes {dimension_semantics = [#tpu.dimension_semantics<parallel>], iteration_bounds = array<i64: 1>, scalar_prefetch = 0 : i64, scratch_operands = 0 : i64, tpu.core_type = #tpu.core_type<tc>, window_params = [{transform_indices = @transform_0, window_bounds = array<i64: 256, 128>}, {pipeline_mode = #tpu.pipeline_mode<synchronous>, transform_indices = @transform_1, window_bounds = array<i64: 32, 256>}, {pipeline_mode = #tpu.pipeline_mode<synchronous>, transform_indices = @transform_2, window_bounds = array<i64: 32, 1>}, {pipeline_mode = #tpu.pipeline_mode<synchronous>, transform_indices = @transform_3, window_bounds = array<i64: 32, 1>}, {pipeline_mode = #tpu.pipeline_mode<synchronous>, transform_indices = @transform_4, window_bounds = array<i64: 32, 1>}, {transform_indices = @transform_5, window_bounds = array<i64: 32, 128>}]} {
    %c0 = arith.constant 0 : index
    %c0_0 = arith.constant 0 : index
    %0 = vector.load %arg2[%c0, %c0_0] : memref<32x256xbf16, #tpu.memory_space<vmem>>, vector<32x256xbf16>
    %c0_1 = arith.constant 0 : index
    %c0_2 = arith.constant 0 : index
    %1 = vector.load %arg1[%c0_1, %c0_2] : memref<256x128xbf16, #tpu.memory_space<vmem>>, vector<256x128xbf16>
    %cst = arith.constant dense<0.000000e+00> : vector<32x128xf32>
    %2 = tpu.matmul %0, %1, %cst {dimension_numbers = #tpu.dot_dimension_numbers<[1], [0], [0], [1], [0, 0, 1, 1], [], []>} : vector<32x256xbf16>, vector<256x128xbf16>, vector<32x128xf32> -> vector<32x128xf32>
    %c0_3 = arith.constant 0 : index
    %c0_4 = arith.constant 0 : index
    %3 = vector.load %arg3[%c0_3, %c0_4] : memref<32x1xf32, #tpu.memory_space<vmem>>, vector<32x1xf32>
    %4 = vector.broadcast %3 : vector<32x1xf32> to vector<32x128xf32>
    %5 = arith.addf %2, %4 : vector<32x128xf32>
    %cst_5 = arith.constant dense<0.000000e+00> : vector<32xf32>
    %6 = vector.multi_reduction <add>, %5, %cst_5 [1] : vector<32x128xf32> to vector<32xf32>
    %7 = vector.shape_cast %6 : vector<32xf32> to vector<32x1xf32>
    %8 = arith.mulf %5, %5 : vector<32x128xf32>
    %cst_6 = arith.constant dense<0.000000e+00> : vector<32xf32>
    %9 = vector.multi_reduction <add>, %8, %cst_6 [1] : vector<32x128xf32> to vector<32xf32>
    %10 = vector.shape_cast %9 : vector<32xf32> to vector<32x1xf32>
    %cst_7 = arith.constant 1.200000e+02 : f32
    %11 = vector.broadcast %cst_7 : f32 to vector<32x1xf32>
    %12 = arith.mulf %11, %3 : vector<32x1xf32>
    %13 = arith.subf %7, %12 : vector<32x1xf32>
    %14 = arith.mulf %3, %3 : vector<32x1xf32>
    %cst_8 = arith.constant 1.200000e+02 : f32
    %15 = vector.broadcast %cst_8 : f32 to vector<32x1xf32>
    %16 = arith.mulf %15, %14 : vector<32x1xf32>
    %17 = arith.subf %10, %16 : vector<32x1xf32>
    %cst_9 = arith.constant 1.250000e-01 : f32
    %18 = vector.broadcast %cst_9 : f32 to vector<32x1xf32>
    %19 = arith.mulf %13, %18 : vector<32x1xf32>
    %cst_10 = arith.constant 1.250000e-01 : f32
    %20 = vector.broadcast %cst_10 : f32 to vector<32x1xf32>
    %21 = arith.mulf %17, %20 : vector<32x1xf32>
    %22 = arith.mulf %19, %19 : vector<32x1xf32>
    %23 = arith.subf %21, %22 : vector<32x1xf32>
    %cst_11 = arith.constant 0.000000e+00 : f32
    %24 = vector.broadcast %cst_11 : f32 to vector<32x1xf32>
    %25 = arith.maximumf %23, %24 : vector<32x1xf32>
    %c0_12 = arith.constant 0 : index
    %c0_13 = arith.constant 0 : index
    %26 = vector.load %arg4[%c0_12, %c0_13] : memref<32x1xf32, #tpu.memory_space<vmem>>, vector<32x1xf32>
    %cst_14 = arith.constant 9.99999974E-6 : f32
    %27 = vector.broadcast %cst_14 : f32 to vector<32x1xf32>
    %28 = arith.addf %25, %27 : vector<32x1xf32>
    %29 = math.rsqrt %28 : vector<32x1xf32>
    %30 = arith.mulf %26, %29 : vector<32x1xf32>
    %31 = vector.broadcast %19 : vector<32x1xf32> to vector<32x128xf32>
    %32 = arith.subf %5, %31 : vector<32x128xf32>
    %33 = vector.broadcast %30 : vector<32x1xf32> to vector<32x128xf32>
    %34 = arith.mulf %32, %33 : vector<32x128xf32>
    %c0_15 = arith.constant 0 : index
    %c0_16 = arith.constant 0 : index
    %35 = vector.load %arg5[%c0_15, %c0_16] : memref<32x1xf32, #tpu.memory_space<vmem>>, vector<32x1xf32>
    %36 = vector.broadcast %35 : vector<32x1xf32> to vector<32x128xf32>
    %37 = arith.addf %34, %36 : vector<32x128xf32>
    %38 = arith.truncf %37 : vector<32x128xf32> to vector<32x128xbf16>
    %c0_17 = arith.constant 0 : index
    %c0_18 = arith.constant 0 : index
    %39 = vector.load %arg6[%c0_17, %c0_18] : memref<32x128xbf16, #tpu.memory_space<vmem>>, vector<32x128xbf16>
    tpu.vector_store %arg6[%c0_17, %c0_18], %38 {strides = array<i32>} : memref<32x128xbf16, #tpu.memory_space<vmem>>, vector<32x128xbf16>,
    return
  }
  func.func @transform_0(%arg0: i32) -> (i32, i32) {
    %c0_i32 = arith.constant 0 : i32
    %c0_i32_0 = arith.constant 0 : i32
    return %c0_i32, %arg0 : i32, i32
  }
  func.func @transform_1(%arg0: i32) -> (i32, i32) {
    %c0_i32 = arith.constant 0 : i32
    %c0_i32_0 = arith.constant 0 : i32
    %c0_i32_1 = arith.constant 0 : i32
    return %c0_i32, %c0_i32_0 : i32, i32
  }
  func.func @transform_2(%arg0: i32) -> (i32, i32) {
    %c0_i32 = arith.constant 0 : i32
    %c0_i32_0 = arith.constant 0 : i32
    %c0_i32_1 = arith.constant 0 : i32
    return %c0_i32, %c0_i32_0 : i32, i32
  }
  func.func @transform_3(%arg0: i32) -> (i32, i32) {
    %c0_i32 = arith.constant 0 : i32
    %c0_i32_0 = arith.constant 0 : i32
    %c0_i32_1 = arith.constant 0 : i32
    return %c0_i32, %c0_i32_0 : i32, i32
  }
  func.func @transform_4(%arg0: i32) -> (i32, i32) {
    %c0_i32 = arith.constant 0 : i32
    %c0_i32_0 = arith.constant 0 : i32
    %c0_i32_1 = arith.constant 0 : i32
    return %c0_i32, %c0_i32_0 : i32, i32
  }
  func.func @transform_5(%arg0: i32) -> (i32, i32) {
    %c0_i32 = arith.constant 0 : i32
    %c0_i32_0 = arith.constant 0 : i32
    return %c0_i32, %arg0 : i32, i32
  }
}

module attributes {stable_mosaic.version = 11 : i64} {
  func.func @_conv_kernel(%arg0: i32, %arg1: memref<128x128xbf16, #tpu.memory_space<vmem>>, %arg2: memref<32x128xbf16, #tpu.memory_space<vmem>>, %arg3: memref<32x1xf32, #tpu.memory_space<vmem>>, %arg4: memref<32x1xf32, #tpu.memory_space<vmem>>, %arg5: memref<32x1xf32, #tpu.memory_space<vmem>>, %arg6: memref<32x128xbf16, #tpu.memory_space<vmem>>) attributes {dimension_semantics = [#tpu.dimension_semantics<parallel>], iteration_bounds = array<i64: 1>, scalar_prefetch = 0 : i64, scratch_operands = 0 : i64, tpu.core_type = #tpu.core_type<tc>, window_params = [{transform_indices = @transform_0, window_bounds = array<i64: 128, 128>}, {pipeline_mode = #tpu.pipeline_mode<synchronous>, transform_indices = @transform_1, window_bounds = array<i64: 32, 128>}, {pipeline_mode = #tpu.pipeline_mode<synchronous>, transform_indices = @transform_2, window_bounds = array<i64: 32, 1>}, {pipeline_mode = #tpu.pipeline_mode<synchronous>, transform_indices = @transform_3, window_bounds = array<i64: 32, 1>}, {pipeline_mode = #tpu.pipeline_mode<synchronous>, transform_indices = @transform_4, window_bounds = array<i64: 32, 1>}, {transform_indices = @transform_5, window_bounds = array<i64: 32, 128>}]} {
    %c0 = arith.constant 0 : index
    %c0_0 = arith.constant 0 : index
    %0 = vector.load %arg2[%c0, %c0_0] : memref<32x128xbf16, #tpu.memory_space<vmem>>, vector<32x128xbf16>
    %c0_1 = arith.constant 0 : index
    %c0_2 = arith.constant 0 : index
    %1 = vector.load %arg1[%c0_1, %c0_2] : memref<128x128xbf16, #tpu.memory_space<vmem>>, vector<128x128xbf16>
    %cst = arith.constant dense<0.000000e+00> : vector<32x128xf32>
    %2 = tpu.matmul %0, %1, %cst {dimension_numbers = #tpu.dot_dimension_numbers<[1], [0], [0], [1], [0, 0, 1, 1], [], []>} : vector<32x128xbf16>, vector<128x128xbf16>, vector<32x128xf32> -> vector<32x128xf32>
    %c0_3 = arith.constant 0 : index
    %c0_4 = arith.constant 0 : index
    %3 = vector.load %arg3[%c0_3, %c0_4] : memref<32x1xf32, #tpu.memory_space<vmem>>, vector<32x1xf32>
    %4 = vector.broadcast %3 : vector<32x1xf32> to vector<32x128xf32>
    %5 = arith.addf %2, %4 : vector<32x128xf32>
    %cst_5 = arith.constant dense<0.000000e+00> : vector<32xf32>
    %6 = vector.multi_reduction <add>, %5, %cst_5 [1] : vector<32x128xf32> to vector<32xf32>
    %7 = vector.shape_cast %6 : vector<32xf32> to vector<32x1xf32>
    %8 = arith.mulf %5, %5 : vector<32x128xf32>
    %cst_6 = arith.constant dense<0.000000e+00> : vector<32xf32>
    %9 = vector.multi_reduction <add>, %8, %cst_6 [1] : vector<32x128xf32> to vector<32xf32>
    %10 = vector.shape_cast %9 : vector<32xf32> to vector<32x1xf32>
    %cst_7 = arith.constant 1.260000e+02 : f32
    %11 = vector.broadcast %cst_7 : f32 to vector<32x1xf32>
    %12 = arith.mulf %11, %3 : vector<32x1xf32>
    %13 = arith.subf %7, %12 : vector<32x1xf32>
    %14 = arith.mulf %3, %3 : vector<32x1xf32>
    %cst_8 = arith.constant 1.260000e+02 : f32
    %15 = vector.broadcast %cst_8 : f32 to vector<32x1xf32>
    %16 = arith.mulf %15, %14 : vector<32x1xf32>
    %17 = arith.subf %10, %16 : vector<32x1xf32>
    %cst_9 = arith.constant 5.000000e-01 : f32
    %18 = vector.broadcast %cst_9 : f32 to vector<32x1xf32>
    %19 = arith.mulf %13, %18 : vector<32x1xf32>
    %cst_10 = arith.constant 5.000000e-01 : f32
    %20 = vector.broadcast %cst_10 : f32 to vector<32x1xf32>
    %21 = arith.mulf %17, %20 : vector<32x1xf32>
    %22 = arith.mulf %19, %19 : vector<32x1xf32>
    %23 = arith.subf %21, %22 : vector<32x1xf32>
    %cst_11 = arith.constant 0.000000e+00 : f32
    %24 = vector.broadcast %cst_11 : f32 to vector<32x1xf32>
    %25 = arith.maximumf %23, %24 : vector<32x1xf32>
    %c0_12 = arith.constant 0 : index
    %c0_13 = arith.constant 0 : index
    %26 = vector.load %arg4[%c0_12, %c0_13] : memref<32x1xf32, #tpu.memory_space<vmem>>, vector<32x1xf32>
    %cst_14 = arith.constant 9.99999974E-6 : f32
    %27 = vector.broadcast %cst_14 : f32 to vector<32x1xf32>
    %28 = arith.addf %25, %27 : vector<32x1xf32>
    %29 = math.rsqrt %28 : vector<32x1xf32>
    %30 = arith.mulf %26, %29 : vector<32x1xf32>
    %31 = vector.broadcast %19 : vector<32x1xf32> to vector<32x128xf32>
    %32 = arith.subf %5, %31 : vector<32x128xf32>
    %33 = vector.broadcast %30 : vector<32x1xf32> to vector<32x128xf32>
    %34 = arith.mulf %32, %33 : vector<32x128xf32>
    %c0_15 = arith.constant 0 : index
    %c0_16 = arith.constant 0 : index
    %35 = vector.load %arg5[%c0_15, %c0_16] : memref<32x1xf32, #tpu.memory_space<vmem>>, vector<32x1xf32>
    %36 = vector.broadcast %35 : vector<32x1xf32> to vector<32x128xf32>
    %37 = arith.addf %34, %36 : vector<32x128xf32>
    %38 = arith.truncf %37 : vector<32x128xf32> to vector<32x128xbf16>
    %c0_17 = arith.constant 0 : index
    %c0_18 = arith.constant 0 : index
    %39 = vector.load %arg6[%c0_17, %c0_18] : memref<32x128xbf16, #tpu.memory_space<vmem>>, vector<32x128xbf16>
    tpu.vector_store %arg6[%c0_17, %c0_18], %38 {strides = array<i32>} : memref<32x128xbf16, #tpu.memory_space<vmem>>, vector<32x128xbf16>,
    return
  }
  func.func @transform_0(%arg0: i32) -> (i32, i32) {
    %c0_i32 = arith.constant 0 : i32
    %c0_i32_0 = arith.constant 0 : i32
    return %c0_i32, %arg0 : i32, i32
  }
  func.func @transform_1(%arg0: i32) -> (i32, i32) {
    %c0_i32 = arith.constant 0 : i32
    %c0_i32_0 = arith.constant 0 : i32
    %c0_i32_1 = arith.constant 0 : i32
    return %c0_i32, %c0_i32_0 : i32, i32
  }
  func.func @transform_2(%arg0: i32) -> (i32, i32) {
    %c0_i32 = arith.constant 0 : i32
    %c0_i32_0 = arith.constant 0 : i32
    %c0_i32_1 = arith.constant 0 : i32
    return %c0_i32, %c0_i32_0 : i32, i32
  }
  func.func @transform_3(%arg0: i32) -> (i32, i32) {
    %c0_i32 = arith.constant 0 : i32
    %c0_i32_0 = arith.constant 0 : i32
    %c0_i32_1 = arith.constant 0 : i32
    return %c0_i32, %c0_i32_0 : i32, i32
  }
  func.func @transform_4(%arg0: i32) -> (i32, i32) {
    %c0_i32 = arith.constant 0 : i32
    %c0_i32_0 = arith.constant 0 : i32
    %c0_i32_1 = arith.constant 0 : i32
    return %c0_i32, %c0_i32_0 : i32, i32
  }
  func.func @transform_5(%arg0: i32) -> (i32, i32) {
    %c0_i32 = arith.constant 0 : i32
    %c0_i32_0 = arith.constant 0 : i32
    return %c0_i32, %arg0 : i32, i32
  }
}

module attributes {stable_mosaic.version = 11 : i64} {
  func.func @_relu_up_kernel(%arg0: i32, %arg1: memref<64x1xbf16, #tpu.memory_space<vmem>>, %arg2: memref<1x4xbf16, #tpu.memory_space<vmem>>, %arg3: memref<64x4xbf16, #tpu.memory_space<vmem>>) attributes {dimension_semantics = [#tpu.dimension_semantics<arbitrary>], iteration_bounds = array<i64: 1>, scalar_prefetch = 0 : i64, scratch_operands = 0 : i64, tpu.core_type = #tpu.core_type<tc>, window_params = [{pipeline_mode = #tpu.pipeline_mode<synchronous>, transform_indices = @transform_0, window_bounds = array<i64: 64, 1>}, {pipeline_mode = #tpu.pipeline_mode<synchronous>, transform_indices = @transform_1, window_bounds = array<i64: 1, 4>}, {pipeline_mode = #tpu.pipeline_mode<synchronous>, transform_indices = @transform_2, window_bounds = array<i64: 64, 4>}]} {
    %c0 = arith.constant 0 : index
    %c0_0 = arith.constant 0 : index
    %0 = vector.load %arg1[%c0, %c0_0] : memref<64x1xbf16, #tpu.memory_space<vmem>>, vector<64x1xbf16>
    %cst = arith.constant 0.000000e+00 : bf16
    %1 = vector.broadcast %cst : bf16 to vector<64x1xbf16>
    %2 = arith.maximumf %0, %1 : vector<64x1xbf16>
    %3 = vector.shape_cast %2 : vector<64x1xbf16> to vector<64x1xbf16>
    %4 = vector.broadcast %3 : vector<64x1xbf16> to vector<64x4xbf16>
    %c0_1 = arith.constant 0 : index
    %c0_2 = arith.constant 0 : index
    %5 = vector.load %arg2[%c0_1, %c0_2] : memref<1x4xbf16, #tpu.memory_space<vmem>>, vector<1x4xbf16>
    %6 = vector.shape_cast %5 : vector<1x4xbf16> to vector<1x4xbf16>
    %7 = vector.broadcast %6 : vector<1x4xbf16> to vector<64x4xbf16>
    %8 = arith.mulf %4, %7 : vector<64x4xbf16>
    %c0_3 = arith.constant 0 : index
    %c0_4 = arith.constant 0 : index
    %9 = vector.load %arg3[%c0_3, %c0_4] : memref<64x4xbf16, #tpu.memory_space<vmem>>, vector<64x4xbf16>
    tpu.vector_store %arg3[%c0_3, %c0_4], %8 {strides = array<i32>} : memref<64x4xbf16, #tpu.memory_space<vmem>>, vector<64x4xbf16>,
    return
  }
  func.func @transform_0(%arg0: i32) -> (i32, i32) {
    %c0_i32 = arith.constant 0 : i32
    %c0_i32_0 = arith.constant 0 : i32
    %c0_i32_1 = arith.constant 0 : i32
    return %c0_i32, %c0_i32_0 : i32, i32
  }
  func.func @transform_1(%arg0: i32) -> (i32, i32) {
    %c0_i32 = arith.constant 0 : i32
    %c0_i32_0 = arith.constant 0 : i32
    %c0_i32_1 = arith.constant 0 : i32
    return %c0_i32, %c0_i32_0 : i32, i32
  }
  func.func @transform_2(%arg0: i32) -> (i32, i32) {
    %c0_i32 = arith.constant 0 : i32
    %c0_i32_0 = arith.constant 0 : i32
    %c0_i32_1 = arith.constant 0 : i32
    return %c0_i32, %c0_i32_0 : i32, i32
  }
}

module attributes {stable_mosaic.version = 11 : i64} {
  func.func @_conv_kernel(%arg0: i32, %arg1: memref<32x128xbf16, #tpu.memory_space<vmem>>, %arg2: memref<32x32xbf16, #tpu.memory_space<vmem>>, %arg3: memref<32x1xf32, #tpu.memory_space<vmem>>, %arg4: memref<32x1xf32, #tpu.memory_space<vmem>>, %arg5: memref<32x1xf32, #tpu.memory_space<vmem>>, %arg6: memref<32x128xbf16, #tpu.memory_space<vmem>>) attributes {dimension_semantics = [#tpu.dimension_semantics<parallel>], iteration_bounds = array<i64: 1>, scalar_prefetch = 0 : i64, scratch_operands = 0 : i64, tpu.core_type = #tpu.core_type<tc>, window_params = [{transform_indices = @transform_0, window_bounds = array<i64: 32, 128>}, {pipeline_mode = #tpu.pipeline_mode<synchronous>, transform_indices = @transform_1, window_bounds = array<i64: 32, 32>}, {pipeline_mode = #tpu.pipeline_mode<synchronous>, transform_indices = @transform_2, window_bounds = array<i64: 32, 1>}, {pipeline_mode = #tpu.pipeline_mode<synchronous>, transform_indices = @transform_3, window_bounds = array<i64: 32, 1>}, {pipeline_mode = #tpu.pipeline_mode<synchronous>, transform_indices = @transform_4, window_bounds = array<i64: 32, 1>}, {transform_indices = @transform_5, window_bounds = array<i64: 32, 128>}]} {
    %c0 = arith.constant 0 : index
    %c0_0 = arith.constant 0 : index
    %0 = vector.load %arg2[%c0, %c0_0] : memref<32x32xbf16, #tpu.memory_space<vmem>>, vector<32x32xbf16>
    %c0_1 = arith.constant 0 : index
    %c0_2 = arith.constant 0 : index
    %1 = vector.load %arg1[%c0_1, %c0_2] : memref<32x128xbf16, #tpu.memory_space<vmem>>, vector<32x128xbf16>
    %cst = arith.constant dense<0.000000e+00> : vector<32x128xf32>
    %2 = tpu.matmul %0, %1, %cst {dimension_numbers = #tpu.dot_dimension_numbers<[1], [0], [0], [1], [0, 0, 1, 1], [], []>} : vector<32x32xbf16>, vector<32x128xbf16>, vector<32x128xf32> -> vector<32x128xf32>
    %c0_3 = arith.constant 0 : index
    %c0_4 = arith.constant 0 : index
    %3 = vector.load %arg3[%c0_3, %c0_4] : memref<32x1xf32, #tpu.memory_space<vmem>>, vector<32x1xf32>
    %4 = vector.broadcast %3 : vector<32x1xf32> to vector<32x128xf32>
    %5 = arith.addf %2, %4 : vector<32x128xf32>
    %cst_5 = arith.constant dense<0.000000e+00> : vector<32xf32>
    %6 = vector.multi_reduction <add>, %5, %cst_5 [1] : vector<32x128xf32> to vector<32xf32>
    %7 = vector.shape_cast %6 : vector<32xf32> to vector<32x1xf32>
    %8 = arith.mulf %5, %5 : vector<32x128xf32>
    %cst_6 = arith.constant dense<0.000000e+00> : vector<32xf32>
    %9 = vector.multi_reduction <add>, %8, %cst_6 [1] : vector<32x128xf32> to vector<32xf32>
    %10 = vector.shape_cast %9 : vector<32xf32> to vector<32x1xf32>
    %cst_7 = arith.constant 1.200000e+02 : f32
    %11 = vector.broadcast %cst_7 : f32 to vector<32x1xf32>
    %12 = arith.mulf %11, %3 : vector<32x1xf32>
    %13 = arith.subf %7, %12 : vector<32x1xf32>
    %14 = arith.mulf %3, %3 : vector<32x1xf32>
    %cst_8 = arith.constant 1.200000e+02 : f32
    %15 = vector.broadcast %cst_8 : f32 to vector<32x1xf32>
    %16 = arith.mulf %15, %14 : vector<32x1xf32>
    %17 = arith.subf %10, %16 : vector<32x1xf32>
    %cst_9 = arith.constant 1.250000e-01 : f32
    %18 = vector.broadcast %cst_9 : f32 to vector<32x1xf32>
    %19 = arith.mulf %13, %18 : vector<32x1xf32>
    %cst_10 = arith.constant 1.250000e-01 : f32
    %20 = vector.broadcast %cst_10 : f32 to vector<32x1xf32>
    %21 = arith.mulf %17, %20 : vector<32x1xf32>
    %22 = arith.mulf %19, %19 : vector<32x1xf32>
    %23 = arith.subf %21, %22 : vector<32x1xf32>
    %cst_11 = arith.constant 0.000000e+00 : f32
    %24 = vector.broadcast %cst_11 : f32 to vector<32x1xf32>
    %25 = arith.maximumf %23, %24 : vector<32x1xf32>
    %c0_12 = arith.constant 0 : index
    %c0_13 = arith.constant 0 : index
    %26 = vector.load %arg4[%c0_12, %c0_13] : memref<32x1xf32, #tpu.memory_space<vmem>>, vector<32x1xf32>
    %cst_14 = arith.constant 9.99999974E-6 : f32
    %27 = vector.broadcast %cst_14 : f32 to vector<32x1xf32>
    %28 = arith.addf %25, %27 : vector<32x1xf32>
    %29 = math.rsqrt %28 : vector<32x1xf32>
    %30 = arith.mulf %26, %29 : vector<32x1xf32>
    %31 = vector.broadcast %19 : vector<32x1xf32> to vector<32x128xf32>
    %32 = arith.subf %5, %31 : vector<32x128xf32>
    %33 = vector.broadcast %30 : vector<32x1xf32> to vector<32x128xf32>
    %34 = arith.mulf %32, %33 : vector<32x128xf32>
    %c0_15 = arith.constant 0 : index
    %c0_16 = arith.constant 0 : index
    %35 = vector.load %arg5[%c0_15, %c0_16] : memref<32x1xf32, #tpu.memory_space<vmem>>, vector<32x1xf32>
    %36 = vector.broadcast %35 : vector<32x1xf32> to vector<32x128xf32>
    %37 = arith.addf %34, %36 : vector<32x128xf32>
    %38 = arith.truncf %37 : vector<32x128xf32> to vector<32x128xbf16>
    %c0_17 = arith.constant 0 : index
    %c0_18 = arith.constant 0 : index
    %39 = vector.load %arg6[%c0_17, %c0_18] : memref<32x128xbf16, #tpu.memory_space<vmem>>, vector<32x128xbf16>
    tpu.vector_store %arg6[%c0_17, %c0_18], %38 {strides = array<i32>} : memref<32x128xbf16, #tpu.memory_space<vmem>>, vector<32x128xbf16>,
    return
  }
  func.func @transform_0(%arg0: i32) -> (i32, i32) {
    %c0_i32 = arith.constant 0 : i32
    %c0_i32_0 = arith.constant 0 : i32
    return %c0_i32, %arg0 : i32, i32
  }
  func.func @transform_1(%arg0: i32) -> (i32, i32) {
    %c0_i32 = arith.constant 0 : i32
    %c0_i32_0 = arith.constant 0 : i32
    %c0_i32_1 = arith.constant 0 : i32
    return %c0_i32, %c0_i32_0 : i32, i32
  }
  func.func @transform_2(%arg0: i32) -> (i32, i32) {
    %c0_i32 = arith.constant 0 : i32
    %c0_i32_0 = arith.constant 0 : i32
    %c0_i32_1 = arith.constant 0 : i32
    return %c0_i32, %c0_i32_0 : i32, i32
  }
  func.func @transform_3(%arg0: i32) -> (i32, i32) {
    %c0_i32 = arith.constant 0 : i32
    %c0_i32_0 = arith.constant 0 : i32
    %c0_i32_1 = arith.constant 0 : i32
    return %c0_i32, %c0_i32_0 : i32, i32
  }
  func.func @transform_4(%arg0: i32) -> (i32, i32) {
    %c0_i32 = arith.constant 0 : i32
    %c0_i32_0 = arith.constant 0 : i32
    %c0_i32_1 = arith.constant 0 : i32
    return %c0_i32, %c0_i32_0 : i32, i32
  }
  func.func @transform_5(%arg0: i32) -> (i32, i32) {
    %c0_i32 = arith.constant 0 : i32
    %c0_i32_0 = arith.constant 0 : i32
    return %c0_i32, %arg0 : i32, i32
  }
}

module attributes {stable_mosaic.version = 11 : i64} {
  func.func @_relu_up_kernel(%arg0: i32, %arg1: memref<128x4xbf16, #tpu.memory_space<vmem>>, %arg2: memref<4x16xbf16, #tpu.memory_space<vmem>>, %arg3: memref<128x16xbf16, #tpu.memory_space<vmem>>) attributes {dimension_semantics = [#tpu.dimension_semantics<arbitrary>], iteration_bounds = array<i64: 1>, scalar_prefetch = 0 : i64, scratch_operands = 0 : i64, tpu.core_type = #tpu.core_type<tc>, window_params = [{pipeline_mode = #tpu.pipeline_mode<synchronous>, transform_indices = @transform_0, window_bounds = array<i64: 128, 4>}, {pipeline_mode = #tpu.pipeline_mode<synchronous>, transform_indices = @transform_1, window_bounds = array<i64: 4, 16>}, {pipeline_mode = #tpu.pipeline_mode<synchronous>, transform_indices = @transform_2, window_bounds = array<i64: 128, 16>}]} {
    %c0 = arith.constant 0 : index
    %c0_0 = arith.constant 0 : index
    %0 = vector.load %arg1[%c0, %c0_0] : memref<128x4xbf16, #tpu.memory_space<vmem>>, vector<128x4xbf16>
    %cst = arith.constant 0.000000e+00 : bf16
    %1 = vector.broadcast %cst : bf16 to vector<128x4xbf16>
    %2 = arith.maximumf %0, %1 : vector<128x4xbf16>
    %c0_1 = arith.constant 0 : index
    %c0_2 = arith.constant 0 : index
    %3 = vector.load %arg2[%c0_1, %c0_2] : memref<4x16xbf16, #tpu.memory_space<vmem>>, vector<4x16xbf16>
    %cst_3 = arith.constant dense<0.000000e+00> : vector<128x16xf32>
    %4 = tpu.matmul %2, %3, %cst_3 {dimension_numbers = #tpu.dot_dimension_numbers<[1], [0], [0], [1], [0, 0, 1, 1], [], []>} : vector<128x4xbf16>, vector<4x16xbf16>, vector<128x16xf32> -> vector<128x16xf32>
    %5 = arith.truncf %4 : vector<128x16xf32> to vector<128x16xbf16>
    %c0_4 = arith.constant 0 : index
    %c0_5 = arith.constant 0 : index
    %6 = vector.load %arg3[%c0_4, %c0_5] : memref<128x16xbf16, #tpu.memory_space<vmem>>, vector<128x16xbf16>
    tpu.vector_store %arg3[%c0_4, %c0_5], %5 {strides = array<i32>} : memref<128x16xbf16, #tpu.memory_space<vmem>>, vector<128x16xbf16>,
    return
  }
  func.func @transform_0(%arg0: i32) -> (i32, i32) {
    %c0_i32 = arith.constant 0 : i32
    %c0_i32_0 = arith.constant 0 : i32
    %c0_i32_1 = arith.constant 0 : i32
    return %c0_i32, %c0_i32_0 : i32, i32
  }
  func.func @transform_1(%arg0: i32) -> (i32, i32) {
    %c0_i32 = arith.constant 0 : i32
    %c0_i32_0 = arith.constant 0 : i32
    %c0_i32_1 = arith.constant 0 : i32
    return %c0_i32, %c0_i32_0 : i32, i32
  }
  func.func @transform_2(%arg0: i32) -> (i32, i32) {
    %c0_i32 = arith.constant 0 : i32
    %c0_i32_0 = arith.constant 0 : i32
    %c0_i32_1 = arith.constant 0 : i32
    return %c0_i32, %c0_i32_0 : i32, i32
  }
}

module attributes {stable_mosaic.version = 11 : i64} {
  func.func @_conv_kernel(%arg0: i32, %arg1: memref<576x128xbf16, #tpu.memory_space<vmem>>, %arg2: memref<16x576xbf16, #tpu.memory_space<vmem>>, %arg3: memref<16x1xf32, #tpu.memory_space<vmem>>, %arg4: memref<16x1xf32, #tpu.memory_space<vmem>>, %arg5: memref<16x1xf32, #tpu.memory_space<vmem>>, %arg6: memref<16x128xbf16, #tpu.memory_space<vmem>>) attributes {dimension_semantics = [#tpu.dimension_semantics<parallel>], iteration_bounds = array<i64: 1>, scalar_prefetch = 0 : i64, scratch_operands = 0 : i64, tpu.core_type = #tpu.core_type<tc>, window_params = [{transform_indices = @transform_0, window_bounds = array<i64: 576, 128>}, {pipeline_mode = #tpu.pipeline_mode<synchronous>, transform_indices = @transform_1, window_bounds = array<i64: 16, 576>}, {pipeline_mode = #tpu.pipeline_mode<synchronous>, transform_indices = @transform_2, window_bounds = array<i64: 16, 1>}, {pipeline_mode = #tpu.pipeline_mode<synchronous>, transform_indices = @transform_3, window_bounds = array<i64: 16, 1>}, {pipeline_mode = #tpu.pipeline_mode<synchronous>, transform_indices = @transform_4, window_bounds = array<i64: 16, 1>}, {transform_indices = @transform_5, window_bounds = array<i64: 16, 128>}]} {
    %c0 = arith.constant 0 : index
    %c0_0 = arith.constant 0 : index
    %0 = vector.load %arg2[%c0, %c0_0] : memref<16x576xbf16, #tpu.memory_space<vmem>>, vector<16x576xbf16>
    %c0_1 = arith.constant 0 : index
    %c0_2 = arith.constant 0 : index
    %1 = vector.load %arg1[%c0_1, %c0_2] : memref<576x128xbf16, #tpu.memory_space<vmem>>, vector<576x128xbf16>
    %cst = arith.constant dense<0.000000e+00> : vector<16x128xf32>
    %2 = tpu.matmul %0, %1, %cst {dimension_numbers = #tpu.dot_dimension_numbers<[1], [0], [0], [1], [0, 0, 1, 1], [], []>} : vector<16x576xbf16>, vector<576x128xbf16>, vector<16x128xf32> -> vector<16x128xf32>
    %c0_3 = arith.constant 0 : index
    %c0_4 = arith.constant 0 : index
    %3 = vector.load %arg3[%c0_3, %c0_4] : memref<16x1xf32, #tpu.memory_space<vmem>>, vector<16x1xf32>
    %4 = vector.broadcast %3 : vector<16x1xf32> to vector<16x128xf32>
    %5 = arith.addf %2, %4 : vector<16x128xf32>
    %cst_5 = arith.constant dense<0.000000e+00> : vector<16xf32>
    %6 = vector.multi_reduction <add>, %5, %cst_5 [1] : vector<16x128xf32> to vector<16xf32>
    %7 = vector.shape_cast %6 : vector<16xf32> to vector<16x1xf32>
    %8 = arith.mulf %5, %5 : vector<16x128xf32>
    %cst_6 = arith.constant dense<0.000000e+00> : vector<16xf32>
    %9 = vector.multi_reduction <add>, %8, %cst_6 [1] : vector<16x128xf32> to vector<16xf32>
    %10 = vector.shape_cast %9 : vector<16xf32> to vector<16x1xf32>
    %cst_7 = arith.constant 9.600000e+01 : f32
    %11 = vector.broadcast %cst_7 : f32 to vector<16x1xf32>
    %12 = arith.mulf %11, %3 : vector<16x1xf32>
    %13 = arith.subf %7, %12 : vector<16x1xf32>
    %14 = arith.mulf %3, %3 : vector<16x1xf32>
    %cst_8 = arith.constant 9.600000e+01 : f32
    %15 = vector.broadcast %cst_8 : f32 to vector<16x1xf32>
    %16 = arith.mulf %15, %14 : vector<16x1xf32>
    %17 = arith.subf %10, %16 : vector<16x1xf32>
    %cst_9 = arith.constant 3.125000e-02 : f32
    %18 = vector.broadcast %cst_9 : f32 to vector<16x1xf32>
    %19 = arith.mulf %13, %18 : vector<16x1xf32>
    %cst_10 = arith.constant 3.125000e-02 : f32
    %20 = vector.broadcast %cst_10 : f32 to vector<16x1xf32>
    %21 = arith.mulf %17, %20 : vector<16x1xf32>
    %22 = arith.mulf %19, %19 : vector<16x1xf32>
    %23 = arith.subf %21, %22 : vector<16x1xf32>
    %cst_11 = arith.constant 0.000000e+00 : f32
    %24 = vector.broadcast %cst_11 : f32 to vector<16x1xf32>
    %25 = arith.maximumf %23, %24 : vector<16x1xf32>
    %c0_12 = arith.constant 0 : index
    %c0_13 = arith.constant 0 : index
    %26 = vector.load %arg4[%c0_12, %c0_13] : memref<16x1xf32, #tpu.memory_space<vmem>>, vector<16x1xf32>
    %cst_14 = arith.constant 9.99999974E-6 : f32
    %27 = vector.broadcast %cst_14 : f32 to vector<16x1xf32>
    %28 = arith.addf %25, %27 : vector<16x1xf32>
    %29 = math.rsqrt %28 : vector<16x1xf32>
    %30 = arith.mulf %26, %29 : vector<16x1xf32>
    %31 = vector.broadcast %19 : vector<16x1xf32> to vector<16x128xf32>
    %32 = arith.subf %5, %31 : vector<16x128xf32>
    %33 = vector.broadcast %30 : vector<16x1xf32> to vector<16x128xf32>
    %34 = arith.mulf %32, %33 : vector<16x128xf32>
    %c0_15 = arith.constant 0 : index
    %c0_16 = arith.constant 0 : index
    %35 = vector.load %arg5[%c0_15, %c0_16] : memref<16x1xf32, #tpu.memory_space<vmem>>, vector<16x1xf32>
    %36 = vector.broadcast %35 : vector<16x1xf32> to vector<16x128xf32>
    %37 = arith.addf %34, %36 : vector<16x128xf32>
    %38 = arith.truncf %37 : vector<16x128xf32> to vector<16x128xbf16>
    %c0_17 = arith.constant 0 : index
    %c0_18 = arith.constant 0 : index
    %39 = vector.load %arg6[%c0_17, %c0_18] : memref<16x128xbf16, #tpu.memory_space<vmem>>, vector<16x128xbf16>
    tpu.vector_store %arg6[%c0_17, %c0_18], %38 {strides = array<i32>} : memref<16x128xbf16, #tpu.memory_space<vmem>>, vector<16x128xbf16>,
    return
  }
  func.func @transform_0(%arg0: i32) -> (i32, i32) {
    %c0_i32 = arith.constant 0 : i32
    %c0_i32_0 = arith.constant 0 : i32
    return %c0_i32, %arg0 : i32, i32
  }
  func.func @transform_1(%arg0: i32) -> (i32, i32) {
    %c0_i32 = arith.constant 0 : i32
    %c0_i32_0 = arith.constant 0 : i32
    %c0_i32_1 = arith.constant 0 : i32
    return %c0_i32, %c0_i32_0 : i32, i32
  }
  func.func @transform_2(%arg0: i32) -> (i32, i32) {
    %c0_i32 = arith.constant 0 : i32
    %c0_i32_0 = arith.constant 0 : i32
    %c0_i32_1 = arith.constant 0 : i32
    return %c0_i32, %c0_i32_0 : i32, i32
  }
  func.func @transform_3(%arg0: i32) -> (i32, i32) {
    %c0_i32 = arith.constant 0 : i32
    %c0_i32_0 = arith.constant 0 : i32
    %c0_i32_1 = arith.constant 0 : i32
    return %c0_i32, %c0_i32_0 : i32, i32
  }
  func.func @transform_4(%arg0: i32) -> (i32, i32) {
    %c0_i32 = arith.constant 0 : i32
    %c0_i32_0 = arith.constant 0 : i32
    %c0_i32_1 = arith.constant 0 : i32
    return %c0_i32, %c0_i32_0 : i32, i32
  }
  func.func @transform_5(%arg0: i32) -> (i32, i32) {
    %c0_i32 = arith.constant 0 : i32
    %c0_i32_0 = arith.constant 0 : i32
    return %c0_i32, %arg0 : i32, i32
  }
}

module attributes {stable_mosaic.version = 11 : i64} {
  func.func @_relu_up_kernel(%arg0: i32, %arg1: memref<64x16xbf16, #tpu.memory_space<vmem>>, %arg2: memref<16x64xbf16, #tpu.memory_space<vmem>>, %arg3: memref<64x64xbf16, #tpu.memory_space<vmem>>) attributes {dimension_semantics = [#tpu.dimension_semantics<arbitrary>], iteration_bounds = array<i64: 1>, scalar_prefetch = 0 : i64, scratch_operands = 0 : i64, tpu.core_type = #tpu.core_type<tc>, window_params = [{pipeline_mode = #tpu.pipeline_mode<synchronous>, transform_indices = @transform_0, window_bounds = array<i64: 64, 16>}, {pipeline_mode = #tpu.pipeline_mode<synchronous>, transform_indices = @transform_1, window_bounds = array<i64: 16, 64>}, {pipeline_mode = #tpu.pipeline_mode<synchronous>, transform_indices = @transform_2, window_bounds = array<i64: 64, 64>}]} {
    %c0 = arith.constant 0 : index
    %c0_0 = arith.constant 0 : index
    %0 = vector.load %arg1[%c0, %c0_0] : memref<64x16xbf16, #tpu.memory_space<vmem>>, vector<64x16xbf16>
    %cst = arith.constant 0.000000e+00 : bf16
    %1 = vector.broadcast %cst : bf16 to vector<64x16xbf16>
    %2 = arith.maximumf %0, %1 : vector<64x16xbf16>
    %c0_1 = arith.constant 0 : index
    %c0_2 = arith.constant 0 : index
    %3 = vector.load %arg2[%c0_1, %c0_2] : memref<16x64xbf16, #tpu.memory_space<vmem>>, vector<16x64xbf16>
    %cst_3 = arith.constant dense<0.000000e+00> : vector<64x64xf32>
    %4 = tpu.matmul %2, %3, %cst_3 {dimension_numbers = #tpu.dot_dimension_numbers<[1], [0], [0], [1], [0, 0, 1, 1], [], []>} : vector<64x16xbf16>, vector<16x64xbf16>, vector<64x64xf32> -> vector<64x64xf32>
    %5 = arith.truncf %4 : vector<64x64xf32> to vector<64x64xbf16>
    %c0_4 = arith.constant 0 : index
    %c0_5 = arith.constant 0 : index
    %6 = vector.load %arg3[%c0_4, %c0_5] : memref<64x64xbf16, #tpu.memory_space<vmem>>, vector<64x64xbf16>
    tpu.vector_store %arg3[%c0_4, %c0_5], %5 {strides = array<i32>} : memref<64x64xbf16, #tpu.memory_space<vmem>>, vector<64x64xbf16>,
    return
  }
  func.func @transform_0(%arg0: i32) -> (i32, i32) {
    %c0_i32 = arith.constant 0 : i32
    %c0_i32_0 = arith.constant 0 : i32
    %c0_i32_1 = arith.constant 0 : i32
    return %c0_i32, %c0_i32_0 : i32, i32
  }
  func.func @transform_1(%arg0: i32) -> (i32, i32) {
    %c0_i32 = arith.constant 0 : i32
    %c0_i32_0 = arith.constant 0 : i32
    %c0_i32_1 = arith.constant 0 : i32
    return %c0_i32, %c0_i32_0 : i32, i32
  }
  func.func @transform_2(%arg0: i32) -> (i32, i32) {
    %c0_i32 = arith.constant 0 : i32
    %c0_i32_0 = arith.constant 0 : i32
    %c0_i32_1 = arith.constant 0 : i32
    return %c0_i32, %c0_i32_0 : i32, i32
  }
}

module attributes {stable_mosaic.version = 11 : i64} {
  func.func @_conv_kernel(%arg0: i32, %arg1: memref<288x128xbf16, #tpu.memory_space<vmem>>, %arg2: memref<8x288xbf16, #tpu.memory_space<vmem>>, %arg3: memref<8x1xf32, #tpu.memory_space<vmem>>, %arg4: memref<8x1xf32, #tpu.memory_space<vmem>>, %arg5: memref<8x1xf32, #tpu.memory_space<vmem>>, %arg6: memref<8x128xbf16, #tpu.memory_space<vmem>>) attributes {dimension_semantics = [#tpu.dimension_semantics<parallel>], iteration_bounds = array<i64: 1>, scalar_prefetch = 0 : i64, scratch_operands = 0 : i64, tpu.core_type = #tpu.core_type<tc>, window_params = [{transform_indices = @transform_0, window_bounds = array<i64: 288, 128>}, {pipeline_mode = #tpu.pipeline_mode<synchronous>, transform_indices = @transform_1, window_bounds = array<i64: 8, 288>}, {pipeline_mode = #tpu.pipeline_mode<synchronous>, transform_indices = @transform_2, window_bounds = array<i64: 8, 1>}, {pipeline_mode = #tpu.pipeline_mode<synchronous>, transform_indices = @transform_3, window_bounds = array<i64: 8, 1>}, {pipeline_mode = #tpu.pipeline_mode<synchronous>, transform_indices = @transform_4, window_bounds = array<i64: 8, 1>}, {transform_indices = @transform_5, window_bounds = array<i64: 8, 128>}]} {
    %c0 = arith.constant 0 : index
    %c0_0 = arith.constant 0 : index
    %0 = vector.load %arg2[%c0, %c0_0] : memref<8x288xbf16, #tpu.memory_space<vmem>>, vector<8x288xbf16>
    %c0_1 = arith.constant 0 : index
    %c0_2 = arith.constant 0 : index
    %1 = vector.load %arg1[%c0_1, %c0_2] : memref<288x128xbf16, #tpu.memory_space<vmem>>, vector<288x128xbf16>
    %cst = arith.constant dense<0.000000e+00> : vector<8x128xf32>
    %2 = tpu.matmul %0, %1, %cst {dimension_numbers = #tpu.dot_dimension_numbers<[1], [0], [0], [1], [0, 0, 1, 1], [], []>} : vector<8x288xbf16>, vector<288x128xbf16>, vector<8x128xf32> -> vector<8x128xf32>
    %c0_3 = arith.constant 0 : index
    %c0_4 = arith.constant 0 : index
    %3 = vector.load %arg3[%c0_3, %c0_4] : memref<8x1xf32, #tpu.memory_space<vmem>>, vector<8x1xf32>
    %4 = vector.broadcast %3 : vector<8x1xf32> to vector<8x128xf32>
    %5 = arith.addf %2, %4 : vector<8x128xf32>
    %cst_5 = arith.constant dense<0.000000e+00> : vector<8xf32>
    %6 = vector.multi_reduction <add>, %5, %cst_5 [1] : vector<8x128xf32> to vector<8xf32>
    %7 = vector.shape_cast %6 : vector<8xf32> to vector<8x1xf32>
    %8 = arith.mulf %5, %5 : vector<8x128xf32>
    %cst_6 = arith.constant dense<0.000000e+00> : vector<8xf32>
    %9 = vector.multi_reduction <add>, %8, %cst_6 [1] : vector<8x128xf32> to vector<8xf32>
    %10 = vector.shape_cast %9 : vector<8xf32> to vector<8x1xf32>
    %cst_7 = arith.constant 7.812500e-03 : f32
    %11 = vector.broadcast %cst_7 : f32 to vector<8x1xf32>
    %12 = arith.mulf %7, %11 : vector<8x1xf32>
    %cst_8 = arith.constant 7.812500e-03 : f32
    %13 = vector.broadcast %cst_8 : f32 to vector<8x1xf32>
    %14 = arith.mulf %10, %13 : vector<8x1xf32>
    %15 = arith.mulf %12, %12 : vector<8x1xf32>
    %16 = arith.subf %14, %15 : vector<8x1xf32>
    %cst_9 = arith.constant 0.000000e+00 : f32
    %17 = vector.broadcast %cst_9 : f32 to vector<8x1xf32>
    %18 = arith.maximumf %16, %17 : vector<8x1xf32>
    %c0_10 = arith.constant 0 : index
    %c0_11 = arith.constant 0 : index
    %19 = vector.load %arg4[%c0_10, %c0_11] : memref<8x1xf32, #tpu.memory_space<vmem>>, vector<8x1xf32>
    %cst_12 = arith.constant 9.99999974E-6 : f32
    %20 = vector.broadcast %cst_12 : f32 to vector<8x1xf32>
    %21 = arith.addf %18, %20 : vector<8x1xf32>
    %22 = math.rsqrt %21 : vector<8x1xf32>
    %23 = arith.mulf %19, %22 : vector<8x1xf32>
    %24 = vector.broadcast %12 : vector<8x1xf32> to vector<8x128xf32>
    %25 = arith.subf %5, %24 : vector<8x128xf32>
    %26 = vector.broadcast %23 : vector<8x1xf32> to vector<8x128xf32>
    %27 = arith.mulf %25, %26 : vector<8x128xf32>
    %c0_13 = arith.constant 0 : index
    %c0_14 = arith.constant 0 : index
    %28 = vector.load %arg5[%c0_13, %c0_14] : memref<8x1xf32, #tpu.memory_space<vmem>>, vector<8x1xf32>
    %29 = vector.broadcast %28 : vector<8x1xf32> to vector<8x128xf32>
    %30 = arith.addf %27, %29 : vector<8x128xf32>
    %31 = arith.truncf %30 : vector<8x128xf32> to vector<8x128xbf16>
    %c0_15 = arith.constant 0 : index
    %c0_16 = arith.constant 0 : index
    %32 = vector.load %arg6[%c0_15, %c0_16] : memref<8x128xbf16, #tpu.memory_space<vmem>>, vector<8x128xbf16>
    tpu.vector_store %arg6[%c0_15, %c0_16], %31 {strides = array<i32>} : memref<8x128xbf16, #tpu.memory_space<vmem>>, vector<8x128xbf16>,
    return
  }
  func.func @transform_0(%arg0: i32) -> (i32, i32) {
    %c0_i32 = arith.constant 0 : i32
    %c0_i32_0 = arith.constant 0 : i32
    return %c0_i32, %arg0 : i32, i32
  }
  func.func @transform_1(%arg0: i32) -> (i32, i32) {
    %c0_i32 = arith.constant 0 : i32
    %c0_i32_0 = arith.constant 0 : i32
    %c0_i32_1 = arith.constant 0 : i32
    return %c0_i32, %c0_i32_0 : i32, i32
  }
  func.func @transform_2(%arg0: i32) -> (i32, i32) {
    %c0_i32 = arith.constant 0 : i32
    %c0_i32_0 = arith.constant 0 : i32
    %c0_i32_1 = arith.constant 0 : i32
    return %c0_i32, %c0_i32_0 : i32, i32
  }
  func.func @transform_3(%arg0: i32) -> (i32, i32) {
    %c0_i32 = arith.constant 0 : i32
    %c0_i32_0 = arith.constant 0 : i32
    %c0_i32_1 = arith.constant 0 : i32
    return %c0_i32, %c0_i32_0 : i32, i32
  }
  func.func @transform_4(%arg0: i32) -> (i32, i32) {
    %c0_i32 = arith.constant 0 : i32
    %c0_i32_0 = arith.constant 0 : i32
    %c0_i32_1 = arith.constant 0 : i32
    return %c0_i32, %c0_i32_0 : i32, i32
  }
  func.func @transform_5(%arg0: i32) -> (i32, i32) {
    %c0_i32 = arith.constant 0 : i32
    %c0_i32_0 = arith.constant 0 : i32
    return %c0_i32, %arg0 : i32, i32
  }
}

module attributes {stable_mosaic.version = 11 : i64} {
  func.func @_relu_up_kernel(%arg0: i32, %arg1: memref<32x64xbf16, #tpu.memory_space<vmem>>, %arg2: memref<64x256xbf16, #tpu.memory_space<vmem>>, %arg3: memref<32x256xbf16, #tpu.memory_space<vmem>>) attributes {dimension_semantics = [#tpu.dimension_semantics<arbitrary>], iteration_bounds = array<i64: 1>, scalar_prefetch = 0 : i64, scratch_operands = 0 : i64, tpu.core_type = #tpu.core_type<tc>, window_params = [{pipeline_mode = #tpu.pipeline_mode<synchronous>, transform_indices = @transform_0, window_bounds = array<i64: 32, 64>}, {pipeline_mode = #tpu.pipeline_mode<synchronous>, transform_indices = @transform_1, window_bounds = array<i64: 64, 256>}, {pipeline_mode = #tpu.pipeline_mode<synchronous>, transform_indices = @transform_2, window_bounds = array<i64: 32, 256>}]} {
    %c0 = arith.constant 0 : index
    %c0_0 = arith.constant 0 : index
    %0 = vector.load %arg1[%c0, %c0_0] : memref<32x64xbf16, #tpu.memory_space<vmem>>, vector<32x64xbf16>
    %cst = arith.constant 0.000000e+00 : bf16
    %1 = vector.broadcast %cst : bf16 to vector<32x64xbf16>
    %2 = arith.maximumf %0, %1 : vector<32x64xbf16>
    %c0_1 = arith.constant 0 : index
    %c0_2 = arith.constant 0 : index
    %3 = vector.load %arg2[%c0_1, %c0_2] : memref<64x256xbf16, #tpu.memory_space<vmem>>, vector<64x256xbf16>
    %cst_3 = arith.constant dense<0.000000e+00> : vector<32x256xf32>
    %4 = tpu.matmul %2, %3, %cst_3 {dimension_numbers = #tpu.dot_dimension_numbers<[1], [0], [0], [1], [0, 0, 1, 1], [], []>} : vector<32x64xbf16>, vector<64x256xbf16>, vector<32x256xf32> -> vector<32x256xf32>
    %5 = arith.truncf %4 : vector<32x256xf32> to vector<32x256xbf16>
    %c0_4 = arith.constant 0 : index
    %c0_5 = arith.constant 0 : index
    %6 = vector.load %arg3[%c0_4, %c0_5] : memref<32x256xbf16, #tpu.memory_space<vmem>>, vector<32x256xbf16>
    tpu.vector_store %arg3[%c0_4, %c0_5], %5 {strides = array<i32>} : memref<32x256xbf16, #tpu.memory_space<vmem>>, vector<32x256xbf16>,
    return
  }
  func.func @transform_0(%arg0: i32) -> (i32, i32) {
    %c0_i32 = arith.constant 0 : i32
    %c0_i32_0 = arith.constant 0 : i32
    %c0_i32_1 = arith.constant 0 : i32
    return %c0_i32, %c0_i32_0 : i32, i32
  }
  func.func @transform_1(%arg0: i32) -> (i32, i32) {
    %c0_i32 = arith.constant 0 : i32
    %c0_i32_0 = arith.constant 0 : i32
    %c0_i32_1 = arith.constant 0 : i32
    return %c0_i32, %c0_i32_0 : i32, i32
  }
  func.func @transform_2(%arg0: i32) -> (i32, i32) {
    %c0_i32 = arith.constant 0 : i32
    %c0_i32_0 = arith.constant 0 : i32
    %c0_i32_1 = arith.constant 0 : i32
    return %c0_i32, %c0_i32_0 : i32, i32
  }
}

module attributes {stable_mosaic.version = 11 : i64} {
  func.func @_conv_kernel(%arg0: i32, %arg1: memref<144x512xbf16, #tpu.memory_space<vmem>>, %arg2: memref<8x144xbf16, #tpu.memory_space<vmem>>, %arg3: memref<8x1xf32, #tpu.memory_space<vmem>>, %arg4: memref<8x1xf32, #tpu.memory_space<vmem>>, %arg5: memref<8x1xf32, #tpu.memory_space<vmem>>, %arg6: memref<8x512xbf16, #tpu.memory_space<vmem>>) attributes {dimension_semantics = [#tpu.dimension_semantics<parallel>], iteration_bounds = array<i64: 1>, scalar_prefetch = 0 : i64, scratch_operands = 0 : i64, tpu.core_type = #tpu.core_type<tc>, window_params = [{transform_indices = @transform_0, window_bounds = array<i64: 144, 512>}, {pipeline_mode = #tpu.pipeline_mode<synchronous>, transform_indices = @transform_1, window_bounds = array<i64: 8, 144>}, {pipeline_mode = #tpu.pipeline_mode<synchronous>, transform_indices = @transform_2, window_bounds = array<i64: 8, 1>}, {pipeline_mode = #tpu.pipeline_mode<synchronous>, transform_indices = @transform_3, window_bounds = array<i64: 8, 1>}, {pipeline_mode = #tpu.pipeline_mode<synchronous>, transform_indices = @transform_4, window_bounds = array<i64: 8, 1>}, {transform_indices = @transform_5, window_bounds = array<i64: 8, 512>}]} {
    %c0 = arith.constant 0 : index
    %c0_0 = arith.constant 0 : index
    %0 = vector.load %arg2[%c0, %c0_0] : memref<8x144xbf16, #tpu.memory_space<vmem>>, vector<8x144xbf16>
    %c0_1 = arith.constant 0 : index
    %c0_2 = arith.constant 0 : index
    %1 = vector.load %arg1[%c0_1, %c0_2] : memref<144x512xbf16, #tpu.memory_space<vmem>>, vector<144x512xbf16>
    %cst = arith.constant dense<0.000000e+00> : vector<8x512xf32>
    %2 = tpu.matmul %0, %1, %cst {dimension_numbers = #tpu.dot_dimension_numbers<[1], [0], [0], [1], [0, 0, 1, 1], [], []>} : vector<8x144xbf16>, vector<144x512xbf16>, vector<8x512xf32> -> vector<8x512xf32>
    %c0_3 = arith.constant 0 : index
    %c0_4 = arith.constant 0 : index
    %3 = vector.load %arg3[%c0_3, %c0_4] : memref<8x1xf32, #tpu.memory_space<vmem>>, vector<8x1xf32>
    %4 = vector.broadcast %3 : vector<8x1xf32> to vector<8x512xf32>
    %5 = arith.addf %2, %4 : vector<8x512xf32>
    %cst_5 = arith.constant dense<0.000000e+00> : vector<8xf32>
    %6 = vector.multi_reduction <add>, %5, %cst_5 [1] : vector<8x512xf32> to vector<8xf32>
    %7 = vector.shape_cast %6 : vector<8xf32> to vector<8x1xf32>
    %8 = arith.mulf %5, %5 : vector<8x512xf32>
    %cst_6 = arith.constant dense<0.000000e+00> : vector<8xf32>
    %9 = vector.multi_reduction <add>, %8, %cst_6 [1] : vector<8x512xf32> to vector<8xf32>
    %10 = vector.shape_cast %9 : vector<8xf32> to vector<8x1xf32>
    %cst_7 = arith.constant 0.001953125 : f32
    %11 = vector.broadcast %cst_7 : f32 to vector<8x1xf32>
    %12 = arith.mulf %7, %11 : vector<8x1xf32>
    %cst_8 = arith.constant 0.001953125 : f32
    %13 = vector.broadcast %cst_8 : f32 to vector<8x1xf32>
    %14 = arith.mulf %10, %13 : vector<8x1xf32>
    %15 = arith.mulf %12, %12 : vector<8x1xf32>
    %16 = arith.subf %14, %15 : vector<8x1xf32>
    %cst_9 = arith.constant 0.000000e+00 : f32
    %17 = vector.broadcast %cst_9 : f32 to vector<8x1xf32>
    %18 = arith.maximumf %16, %17 : vector<8x1xf32>
    %c0_10 = arith.constant 0 : index
    %c0_11 = arith.constant 0 : index
    %19 = vector.load %arg4[%c0_10, %c0_11] : memref<8x1xf32, #tpu.memory_space<vmem>>, vector<8x1xf32>
    %cst_12 = arith.constant 9.99999974E-6 : f32
    %20 = vector.broadcast %cst_12 : f32 to vector<8x1xf32>
    %21 = arith.addf %18, %20 : vector<8x1xf32>
    %22 = math.rsqrt %21 : vector<8x1xf32>
    %23 = arith.mulf %19, %22 : vector<8x1xf32>
    %24 = vector.broadcast %12 : vector<8x1xf32> to vector<8x512xf32>
    %25 = arith.subf %5, %24 : vector<8x512xf32>
    %26 = vector.broadcast %23 : vector<8x1xf32> to vector<8x512xf32>
    %27 = arith.mulf %25, %26 : vector<8x512xf32>
    %c0_13 = arith.constant 0 : index
    %c0_14 = arith.constant 0 : index
    %28 = vector.load %arg5[%c0_13, %c0_14] : memref<8x1xf32, #tpu.memory_space<vmem>>, vector<8x1xf32>
    %29 = vector.broadcast %28 : vector<8x1xf32> to vector<8x512xf32>
    %30 = arith.addf %27, %29 : vector<8x512xf32>
    %31 = arith.truncf %30 : vector<8x512xf32> to vector<8x512xbf16>
    %c0_15 = arith.constant 0 : index
    %c0_16 = arith.constant 0 : index
    %32 = vector.load %arg6[%c0_15, %c0_16] : memref<8x512xbf16, #tpu.memory_space<vmem>>, vector<8x512xbf16>
    tpu.vector_store %arg6[%c0_15, %c0_16], %31 {strides = array<i32>} : memref<8x512xbf16, #tpu.memory_space<vmem>>, vector<8x512xbf16>,
    return
  }
  func.func @transform_0(%arg0: i32) -> (i32, i32) {
    %c0_i32 = arith.constant 0 : i32
    %c0_i32_0 = arith.constant 0 : i32
    return %c0_i32, %arg0 : i32, i32
  }
  func.func @transform_1(%arg0: i32) -> (i32, i32) {
    %c0_i32 = arith.constant 0 : i32
    %c0_i32_0 = arith.constant 0 : i32
    %c0_i32_1 = arith.constant 0 : i32
    return %c0_i32, %c0_i32_0 : i32, i32
  }
  func.func @transform_2(%arg0: i32) -> (i32, i32) {
    %c0_i32 = arith.constant 0 : i32
    %c0_i32_0 = arith.constant 0 : i32
    %c0_i32_1 = arith.constant 0 : i32
    return %c0_i32, %c0_i32_0 : i32, i32
  }
  func.func @transform_3(%arg0: i32) -> (i32, i32) {
    %c0_i32 = arith.constant 0 : i32
    %c0_i32_0 = arith.constant 0 : i32
    %c0_i32_1 = arith.constant 0 : i32
    return %c0_i32, %c0_i32_0 : i32, i32
  }
  func.func @transform_4(%arg0: i32) -> (i32, i32) {
    %c0_i32 = arith.constant 0 : i32
    %c0_i32_0 = arith.constant 0 : i32
    %c0_i32_1 = arith.constant 0 : i32
    return %c0_i32, %c0_i32_0 : i32, i32
  }
  func.func @transform_5(%arg0: i32) -> (i32, i32) {
    %c0_i32 = arith.constant 0 : i32
    %c0_i32_0 = arith.constant 0 : i32
    return %c0_i32, %arg0 : i32, i32
  }
}

module attributes {stable_mosaic.version = 11 : i64} {
  func.func @_conv_kernel(%arg0: i32, %arg1: memref<72x256xbf16, #tpu.memory_space<vmem>>, %arg2: memref<8x72xbf16, #tpu.memory_space<vmem>>, %arg3: memref<8x1xf32, #tpu.memory_space<vmem>>, %arg4: memref<8x256xbf16, #tpu.memory_space<vmem>>) attributes {dimension_semantics = [#tpu.dimension_semantics<parallel>], iteration_bounds = array<i64: 2>, scalar_prefetch = 0 : i64, scratch_operands = 0 : i64, tpu.core_type = #tpu.core_type<tc>, window_params = [{transform_indices = @transform_0, window_bounds = array<i64: 72, 256>}, {pipeline_mode = #tpu.pipeline_mode<synchronous>, transform_indices = @transform_1, window_bounds = array<i64: 8, 72>}, {pipeline_mode = #tpu.pipeline_mode<synchronous>, transform_indices = @transform_2, window_bounds = array<i64: 8, 1>}, {transform_indices = @transform_3, window_bounds = array<i64: 8, 256>}]} {
    %c0 = arith.constant 0 : index
    %c0_0 = arith.constant 0 : index
    %0 = vector.load %arg2[%c0, %c0_0] : memref<8x72xbf16, #tpu.memory_space<vmem>>, vector<8x72xbf16>
    %c0_1 = arith.constant 0 : index
    %c0_2 = arith.constant 0 : index
    %1 = vector.load %arg1[%c0_1, %c0_2] : memref<72x256xbf16, #tpu.memory_space<vmem>>, vector<72x256xbf16>
    %cst = arith.constant dense<0.000000e+00> : vector<8x256xf32>
    %2 = tpu.matmul %0, %1, %cst {dimension_numbers = #tpu.dot_dimension_numbers<[1], [0], [0], [1], [0, 0, 1, 1], [], []>} : vector<8x72xbf16>, vector<72x256xbf16>, vector<8x256xf32> -> vector<8x256xf32>
    %c0_3 = arith.constant 0 : index
    %c0_4 = arith.constant 0 : index
    %3 = vector.load %arg3[%c0_3, %c0_4] : memref<8x1xf32, #tpu.memory_space<vmem>>, vector<8x1xf32>
    %4 = vector.broadcast %3 : vector<8x1xf32> to vector<8x256xf32>
    %5 = arith.addf %2, %4 : vector<8x256xf32>
    %6 = arith.truncf %5 : vector<8x256xf32> to vector<8x256xbf16>
    %c0_5 = arith.constant 0 : index
    %c0_6 = arith.constant 0 : index
    %7 = vector.load %arg4[%c0_5, %c0_6] : memref<8x256xbf16, #tpu.memory_space<vmem>>, vector<8x256xbf16>
    tpu.vector_store %arg4[%c0_5, %c0_6], %6 {strides = array<i32>} : memref<8x256xbf16, #tpu.memory_space<vmem>>, vector<8x256xbf16>,
    return
  }
  func.func @transform_0(%arg0: i32) -> (i32, i32) {
    %c0_i32 = arith.constant 0 : i32
    %c0_i32_0 = arith.constant 0 : i32
    return %c0_i32, %arg0 : i32, i32
  }
  func.func @transform_1(%arg0: i32) -> (i32, i32) {
    %c0_i32 = arith.constant 0 : i32
    %c0_i32_0 = arith.constant 0 : i32
    %c0_i32_1 = arith.constant 0 : i32
    return %c0_i32, %c0_i32_0 : i32, i32
  }
  func.func @transform_2(%arg0: i32) -> (i32, i32) {
    %c0_i32 = arith.constant 0 : i32
    %c0_i32_0 = arith.constant 0 : i32
    %c0_i32_1 = arith.constant 0 : i32
    return %c0_i32, %c0_i32_0 : i32, i32
  }
  func.func @transform_3(%arg0: i32) -> (i32, i32) {
    %c0_i32 = arith.constant 0 : i32
    %c0_i32_0 = arith.constant 0 : i32
    return %c0_i32, %arg0 : i32, i32
  }
}

</mosaic_0001>

<llo_original>
// kernel: unet_forward.15
$region0: #{unet_forward.15}
  #allocation0 [shape = 'u32[]', space=smem, size = 0x4, offset = 0x4, fixed_abs, tag = 'smem constant byte address 0x4 - core index']
  #allocation1 [shape = 'u32[144,128]{1,0:T(1,128)}', space=vmem, size = 0x12000, scoped, tag = 'internal scratch']
  %s0 = inlined_call_operand.vmem [shape: f32[32,128], index: 0, kind: input, shape index: {}]
  %s1 = inlined_call_operand.hbm [shape: f32[1,1], index: 1, kind: output, shape index: {}]
  %s2 = sld [smem:[#allocation0]]
  $region14: #{unet_forward.15} parent=0
    _
  %s4 = ssub.s32 1, %s2
  %s5 = scalar_select 0, %s4, %s2
  $region1: #{unet_forward.15} parent=0
    #allocation2 [shape = 'u8[512]{0}', space=vmem, size = 0x400, scoped, tag = 'output window, operand 0, single buffered']
    #allocation3 [shape = 's32[1]{0}', space=sflag, size = 0x4, scoped, tag = 'scoped memory for unet_forward.15']
    %6 = vsyncpa [#allocation3], 0
    // Predicated region
    $region2: #{unet_forward.15} parent=1 // pred_check
      _
    $region3: #{unet_forward.15} parent=1 // pred_check_branch
      %8 = sbr.rel (0) target = $region5
    $region4: #{unet_forward.15} parent=1 // pred_region
      _
    $region5: #{unet_forward.15} parent=1 // pred_fallthru
      _
    %v9 = vld [vmem:[%s0] sm:$0xff]
    %v10 = vld [vmem:[%s0 + $0x8] sm:$0xff]
    %v11 = vld [vmem:[%s0 + $0x10] sm:$0xff]
    %v12 = vld [vmem:[%s0 + $0x18] sm:$0xff]
    %v13 = vand.u32 2147483647, %v9
    %v14 = vand.u32 2147483647, %v10
    %v15 = vand.u32 2147483647, %v11
    %v16 = vand.u32 2147483647, %v12
    %v17 = vmax.f32 %v13, %v14
    %v18 = vmax.f32 %v15, %v16
    %v19 = vmax.f32 %v17, %v18
    %20 = vmax.xlane.f32.xlu0 %v19
    %v21 = vpop.xlane.xlu0 %20
    %v22 = vrot.slane %v21, 4
    %v23 = vmax.f32 %v21, %v22
    %v24 = vrot.slane %v23, 2
    %v25 = vmax.f32 %v23, %v24
    %v26 = vrot.slane %v25, 1
    %v27 = vmax.f32 %v25, %v26
    %s28 = vtos %v27
    %v29 = vstv %s28
    %v30 = vmax.f32 %v29, 0.0
    %vm31 = vcmask 0
    %32 = vst.msk [vmem:[#allocation2] sm:$0x1] %vm31, %v30
    // Predicated region
    $region6: #{unet_forward.15} parent=1 // pred_check
      _
    $region7: #{unet_forward.15} parent=1 // pred_check_branch
      %34 = sbr.rel (0) target = $region9
    $region8: #{unet_forward.15} parent=1 // pred_region
      %s36 = ssub.s32 16, 16
      %37 = vsyncadd [#allocation3], %s36
      %s39 = sshll.u32 [#allocation2], 4
      %s40 = int_to_ptr.vmem [resolvable:$true] %s39
      %42 = dma.vmem_to_hbm [thread:$0]  %s40, 16, %s1, [#allocation3]
    $region9: #{unet_forward.15} parent=1 // pred_fallthru
      _
    // Predicated region
    $region10: #{unet_forward.15} parent=1 // pred_check
      _
    $region11: #{unet_forward.15} parent=1 // pred_check_branch
      %44 = sbr.rel (0) target = $region13
    $region12: #{unet_forward.15} parent=1 // pred_region
      %45 = dma.done [#allocation3], 16
    $region13: #{unet_forward.15} parent=1 // pred_fallthru
      _
    %46 = vsyncpa [#allocation3], 1

// kernel: unet_forward.16
$region0: #{unet_forward.16}
  #allocation0 [shape = 'u32[]', space=smem, size = 0x4, offset = 0x4, fixed_abs, tag = 'smem constant byte address 0x4 - core index']
  #allocation1 [shape = 'u32[144,128]{1,0:T(1,128)}', space=vmem, size = 0x12000, scoped, tag = 'internal scratch']
  %s0 = inlined_call_operand.vmem [shape: bf16[32,512], index: 0, kind: input, shape index: {}]
  %s1 = inlined_call_operand.vmem [shape: bf16[8,32], index: 1, kind: input, shape index: {}]
  %s2 = inlined_call_operand.vmem [shape: f32[8,1], index: 2, kind: input, shape index: {}]
  %s3 = inlined_call_operand.vmem [shape: bf16[8,512], index: 3, kind: output, shape index: {}]
  %s4 = sld [smem:[#allocation0]]
  $region83: #{unet_forward.16} parent=0
    _
  %s6 = ssub.s32 1, %s4
  %s7 = scalar_select 0, %s6, %s4
  $region1: #{unet_forward.16} parent=0
    #allocation2 [shape = 'u8[32768]{0}', space=vmem, size = 0x8000, scoped, tag = 'input window, operand 0']
    loop: start=0, step=1, limit=4
    $region2: #{unet_forward.16} parent=1 // loop_pre_header
      _
    $region3: #{unet_forward.16} parent=1 // loop_header
      %s9 = sphi 0, %s13
      %p10 = scmp.ge.s32.totalorder %s9, 4
      %s19 = sphi 0, %s21
      %s22 = sphi 0, %s19
      %s23 = sphi 0, %s22
      %s39 = sphi 0, %s23
      %s43 = sphi 0, %s43
      %s45 = sphi 0, %s43
      %s46 = sphi 0, %s45
      %s60 = sphi 0, %s46
      %s64 = sphi 0, %s64
      %s66 = sphi 0, %s64
      %s67 = sphi 0, %s66
      %s81 = sphi 0, %s67
      %s87 = sphi 0, %s89
      %s90 = sphi 0, %s87
      %s91 = sphi 0, %s90
      %s107 = sphi 0, %s91
    $region4: #{unet_forward.16} parent=1 // loop_header_branch
      %12 = sbr.rel (%p10) target = $region8
    $region5: #{unet_forward.16} parent=1 // loop_body
      %s14 = ssub.s32 %s9, 1
      %s15 = ssub.s32 %s9, 2
      %s16 = sadd.s32 %s9, 1
      %s17 = ssub.s32 %s9, %s16
      %p18 = scmp.eq.s32.totalorder %s17, 0
      %s20 = sadd.s32 %s19, 1
      %s21 = scalar_select %p18, %s19, %s20
      %p24 = pneg %p18
      %p25 = scmp.eq.s32.totalorder %s9, 1
      %p26 = por %p24, %p25
      %p27 = scmp.ne.s32.totalorder %s19, %s22
      %p28 = scmp.eq.s32.totalorder %s9, 0
      %p29 = por %p27, %p28
      %p30 = scmp.ne.s32.totalorder %s19, %s22
      %p31 = scmp.eq.s32.totalorder %s14, 1
      %p32 = por %p30, %p31
      %p33 = scmp.ne.s32.totalorder %s22, %s23
      %p34 = scmp.eq.s32.totalorder %s14, 0
      %p35 = por %p33, %p34
      %p36 = scmp.ne.s32.totalorder %s22, %s23
      %p37 = scmp.eq.s32.totalorder %s15, 1
      %p38 = por %p36, %p37
      %p40 = scmp.ne.s32.totalorder %s23, %s39
      %p41 = scmp.eq.s32.totalorder %s15, 0
      %p42 = por %p40, %p41
      %s44 = sadd.s32 %s43, 1
      %p47 = scmp.eq.s32.totalorder %s9, 1
      %p48 = scmp.ne.s32.totalorder %s43, %s45
      %p49 = scmp.eq.s32.totalorder %s9, 0
      %p50 = por %p48, %p49
      %p51 = scmp.ne.s32.totalorder %s43, %s45
      %p52 = scmp.eq.s32.totalorder %s14, 1
      %p53 = por %p51, %p52
      %p54 = scmp.ne.s32.totalorder %s45, %s46
      %p55 = scmp.eq.s32.totalorder %s14, 0
      %p56 = por %p54, %p55
      %p57 = scmp.ne.s32.totalorder %s45, %s46
      %p58 = scmp.eq.s32.totalorder %s15, 1
      %p59 = por %p57, %p58
      %p61 = scmp.ne.s32.totalorder %s46, %s60
      %p62 = scmp.eq.s32.totalorder %s15, 0
      %p63 = por %p61, %p62
      %s65 = sadd.s32 %s64, 1
      %p68 = scmp.eq.s32.totalorder %s9, 1
      %p69 = scmp.ne.s32.totalorder %s64, %s66
      %p70 = scmp.eq.s32.totalorder %s9, 0
      %p71 = por %p69, %p70
      %p72 = scmp.ne.s32.totalorder %s64, %s66
      %p73 = scmp.eq.s32.totalorder %s14, 1
      %p74 = por %p72, %p73
      %p75 = scmp.ne.s32.totalorder %s66, %s67
      %p76 = scmp.eq.s32.totalorder %s14, 0
      %p77 = por %p75, %p76
      %p78 = scmp.ne.s32.totalorder %s66, %s67
      %p79 = scmp.eq.s32.totalorder %s15, 1
      %p80 = por %p78, %p79
      %p82 = scmp.ne.s32.totalorder %s67, %s81
      %p83 = scmp.eq.s32.totalorder %s15, 0
      %p84 = por %p82, %p83
      %s85 = ssub.s32 %s9, %s16
      %p86 = scmp.eq.s32.totalorder %s85, 0
      %s88 = sadd.s32 %s87, 1
      %s89 = scalar_select %p86, %s87, %s88
      %p92 = pneg %p86
      %p93 = scmp.eq.s32.totalorder %s9, 1
      %p94 = por %p92, %p93
      %p95 = scmp.ne.s32.totalorder %s87, %s90
      %p96 = scmp.eq.s32.totalorder %s9, 0
      %p97 = por %p95, %p96
      %p98 = scmp.ne.s32.totalorder %s87, %s90
      %p99 = scmp.eq.s32.totalorder %s14, 1
      %p100 = por %p98, %p99
      %p101 = scmp.ne.s32.totalorder %s90, %s91
      %p102 = scmp.eq.s32.totalorder %s14, 0
      %p103 = por %p101, %p102
      %p104 = scmp.ne.s32.totalorder %s90, %s91
      %p105 = scmp.eq.s32.totalorder %s15, 1
      %p106 = por %p104, %p105
      %p108 = scmp.ne.s32.totalorder %s91, %s107
      %p109 = scmp.eq.s32.totalorder %s15, 0
      %p110 = por %p108, %p109
      %p111 = scmp.le.s32.totalorder 1, %s9
      %p112 = scmp.lt.s32.totalorder %s9, 3
      %p113 = pnand %p111, %p112
      %p114 = pneg %p113
      // Predicated region
      $region9: #{unet_forward.16} parent=5 // pred_check
        _
      $region10: #{unet_forward.16} parent=5 // pred_check_branch
        %116 = sbr.rel (%p113) target = $region12
      $region11: #{unet_forward.16} parent=5 // pred_region
        %s117 = ssub.s32 %s9, 1
        // Predicated region
        $region13: #{unet_forward.16} parent=11 // pred_check
          %p118 = pneg %p56
        $region14: #{unet_forward.16} parent=11 // pred_check_branch
          %120 = sbr.rel (%p118) target = $region16
        $region15: #{unet_forward.16} parent=11 // pred_region
          _
        $region16: #{unet_forward.16} parent=11 // pred_fallthru
          _
        // Predicated region
        $region17: #{unet_forward.16} parent=11 // pred_check
          %p121 = pneg %p77
        $region18: #{unet_forward.16} parent=11 // pred_check_branch
          %123 = sbr.rel (%p121) target = $region20
        $region19: #{unet_forward.16} parent=11 // pred_region
          _
        $region20: #{unet_forward.16} parent=11 // pred_fallthru
          _
      $region12: #{unet_forward.16} parent=5 // pred_fallthru
        _
      %p124 = scmp.lt.s32.totalorder %s9, 2
      // Predicated region
      $region21: #{unet_forward.16} parent=5 // pred_check
        %p125 = pneg %p124
      $region22: #{unet_forward.16} parent=5 // pred_check_branch
        %127 = sbr.rel (%p125) target = $region24
      $region23: #{unet_forward.16} parent=5 // pred_region
        // Predicated region
        $region25: #{unet_forward.16} parent=23 // pred_check
          %p128 = pneg %p29
        $region26: #{unet_forward.16} parent=23 // pred_check_branch
          %130 = sbr.rel (%p128) target = $region28
        $region27: #{unet_forward.16} parent=23 // pred_region
          %s131 = sand.u32 %s19, 1
          %s132 = sand.u32 %s19, 1
          %s133 = smul.addr %s132, 32
          %s134 = scalar_lea.vmem [#allocation2], %s133
          %s135 = smul.u32 2, %s9
          %s136 = smul.addr %s135, 4
          %s137 = scalar_lea.vmem %s0, %s136
          // Predicated region
          $region29: #{unet_forward.16} parent=27 // pred_check
            _
          $region30: #{unet_forward.16} parent=27 // pred_check_branch
            %139 = sbr.rel (0) target = $region32
          $region31: #{unet_forward.16} parent=27 // pred_region
            // Predicated region
            $region33: #{unet_forward.16} parent=31 // pred_check
              _
            $region34: #{unet_forward.16} parent=31 // pred_check_branch
              %141 = sbr.rel (0) target = $region36
            $region35: #{unet_forward.16} parent=31 // pred_region
              // Predicated region
              $region48: #{unet_forward.16} parent=35 // pred_check
                _
              $region49: #{unet_forward.16} parent=35 // pred_check_branch
                %162 = sbr.rel (0) target = $region51
              $region50: #{unet_forward.16} parent=35 // pred_region
                loop: start=0, step=1, limit=1
                $region52: #{unet_forward.16} parent=50 // loop_pre_header
                  _
                $region53: #{unet_forward.16} parent=50 // loop_header
                  %s164 = sphi 0, %s168
                  %p165 = scmp.ge.s32.totalorder %s164, 1
                  %s169 = sphi %s137, %s137
                  %s170 = sphi %s134, %s134
                $region54: #{unet_forward.16} parent=50 // loop_header_branch
                  %167 = sbr.rel (%p165) target = $region58
                $region55: #{unet_forward.16} parent=50 // loop_body
                  %v171 = vld [vmem:[%s169] sm:$0xff]
                  %172 = vst [vmem:[%s170] sm:$0xff] %v171
                  %v173 = vld [vmem:[%s169 + $0x10] sm:$0xff]
                  %174 = vst [vmem:[%s170 + $0x8] sm:$0xff] %v173
                  %v175 = vld [vmem:[%s169 + $0x20] sm:$0xff]
                  %176 = vst [vmem:[%s170 + $0x10] sm:$0xff] %v175
                  %v177 = vld [vmem:[%s169 + $0x30] sm:$0xff]
                  %178 = vst [vmem:[%s170 + $0x18] sm:$0xff] %v177
                $region56: #{unet_forward.16} parent=50 // loop_footer
                  %s168 = sadd.s32 1, %s164
                $region57: #{unet_forward.16} parent=50 // loop_footer_branch
                  %163 = sbr.rel target = $region53
                $region58: #{unet_forward.16} parent=50 // loop_exit
                  _
              $region51: #{unet_forward.16} parent=35 // pred_fallthru
                _
              // Predicated region
              $region59: #{unet_forward.16} parent=35 // pred_check
                _
              $region60: #{unet_forward.16} parent=35 // pred_check_branch
                %180 = sbr.rel target = $region62
              $region61: #{unet_forward.16} parent=35 // pred_region
                _
              $region62: #{unet_forward.16} parent=35 // pred_fallthru
                _
            $region36: #{unet_forward.16} parent=31 // pred_fallthru
              _
            // Predicated region
            $region37: #{unet_forward.16} parent=31 // pred_check
              _
            $region38: #{unet_forward.16} parent=31 // pred_check_branch
              %143 = sbr.rel target = $region40
            $region39: #{unet_forward.16} parent=31 // pred_region
              loop: start=0, step=1, limit=1
              $region41: #{unet_forward.16} parent=39 // loop_pre_header
                _
              $region42: #{unet_forward.16} parent=39 // loop_header
                %s146 = sphi 0, %s150
                %p147 = scmp.ge.s32.totalorder %s146, 1
                %s151 = sphi %s137, %s137
                %s152 = sphi %s134, %s134
              $region43: #{unet_forward.16} parent=39 // loop_header_branch
                %149 = sbr.rel (%p147) target = $region47
              $region44: #{unet_forward.16} parent=39 // loop_body
                %v153 = vld [vmem:[%s151] sm:$0xff]
                %154 = vst [vmem:[%s152] sm:$0xff] %v153
                %v155 = vld [vmem:[%s151 + $0x10] sm:$0xff]
                %156 = vst [vmem:[%s152 + $0x8] sm:$0xff] %v155
                %v157 = vld [vmem:[%s151 + $0x20] sm:$0xff]
                %158 = vst [vmem:[%s152 + $0x10] sm:$0xff] %v157
                %v159 = vld [vmem:[%s151 + $0x30] sm:$0xff]
                %160 = vst [vmem:[%s152 + $0x18] sm:$0xff] %v159
              $region45: #{unet_forward.16} parent=39 // loop_footer
                %s150 = sadd.s32 1, %s146
              $region46: #{unet_forward.16} parent=39 // loop_footer_branch
                %145 = sbr.rel target = $region42
              $region47: #{unet_forward.16} parent=39 // loop_exit
                _
            $region40: #{unet_forward.16} parent=31 // pred_fallthru
              _
          $region32: #{unet_forward.16} parent=27 // pred_fallthru
            _
          %181 = vnop
        $region28: #{unet_forward.16} parent=23 // pred_fallthru
          _
      $region24: #{unet_forward.16} parent=5 // pred_fallthru
        _
      %p182 = scmp.le.s32.totalorder 1, %s9
      %p183 = scmp.lt.s32.totalorder %s9, 3
      %p184 = pnand %p182, %p183
      %p185 = pneg %p184
      // Predicated region
      $region63: #{unet_forward.16} parent=5 // pred_check
        _
      $region64: #{unet_forward.16} parent=5 // pred_check_branch
        %187 = sbr.rel (%p184) target = $region66
      $region65: #{unet_forward.16} parent=5 // pred_region
        %s188 = ssub.s32 %s9, 1
        %s189 = sand.u32 %s22, 1
        %s190 = sand.u32 %s22, 1
        %s191 = smul.addr %s190, 32
        %s192 = scalar_lea.vmem [#allocation2], %s191
        // Predicated region
        $region67: #{unet_forward.16} parent=65 // pred_check
          %p193 = pneg %p35
        $region68: #{unet_forward.16} parent=65 // pred_check_branch
          %195 = sbr.rel (%p193) target = $region70
        $region69: #{unet_forward.16} parent=65 // pred_region
          _
        $region70: #{unet_forward.16} parent=65 // pred_fallthru
          _
        %s196 = sand.u32 %s22, 1
        %s197 = sand.u32 %s22, 1
        %s198 = smul.addr %s197, 32
        %s199 = scalar_lea.vmem [#allocation2], %s198
        %p200 = pneg %p35
        %p201 = pneg %p32
        %p202 = pneg %p56
        %p203 = pneg %p53
        %p204 = pneg %p77
        %p205 = pneg %p74
        %p206 = pneg %p103
        %p207 = pneg %p100
        %s208 = smul.u32 2, %s14
        %p209 = scmp.lt.s32.totalorder %s208, 3
        %s210 = scalar_select %p209, %s208, 3
        %s211 = smul.addr %s210, 4
        %s212 = scalar_lea.vmem %s3, %s211
        %s213 = smul.u32 2, %s14
        %s214 = smul.u32 2, %s14
        %p215 = scmp.lt.s32.totalorder %s214, 3
        %s216 = scalar_select %p215, %s214, 3
        %s217 = smul.addr %s216, 4
        %s218 = scalar_lea.vmem %s3, %s217
        %s219 = smul.u32 2, %s14
        %v221 = vld [vmem:[%s1] sm:$0xf]
        %v222 = vld [vmem:[%s192] sm:$0xff]
        %v223 = vld [vmem:[%s192 + $0x8] sm:$0xff]
        %v224 = vld [vmem:[%s192 + $0x10] sm:$0xff]
        %v225 = vld [vmem:[%s192 + $0x18] sm:$0xff]
        %v226 = vld [vmem:[%s2] sm:$0xff]
        %228 = vset.pattern.permute.xlu0 0
        %229 = vperm.xlu0 %228, %v226
        %v230 = vpop.permute.xlu0 %229
        %v236 = vunpack.c.l.b16 %v222
        %v237 = vunpack.c.h.b16 %v222
        %v238 = vunpack.c.l.b16 %v223
        %v239 = vunpack.c.h.b16 %v223
        %v240 = vunpack.c.l.b16 %v224
        %v241 = vunpack.c.h.b16 %v224
        %v242 = vunpack.c.l.b16 %v225
        %v243 = vunpack.c.h.b16 %v225
        %v244 = vpack.c.b16 %v238, %v236
        %v245 = vpack.c.b16 %v239, %v237
        %v246 = vpack.c.b16 %v242, %v240
        %v247 = vpack.c.b16 %v243, %v241
        %vm252 = vcmask 261120
        %v254 = vsel %vm252, %v221, 0
        %256 = vmatprep.subr.bf16.mxu0 %v245
        %257 = vmatpush1.bf16.msra.mxu0 %v244
        %258 = vmatprep.subr.bf16.mxu0 %v247
        %259 = vmatpush1.bf16.msra.mxu0 %v246
        %260 = vmatprep.subr.bf16.mxu0 0
        %261 = vmatpush1.bf16.msra.mxu0 0
        %262 = vmatprep.subr.bf16.mxu0 0
        %263 = vmatpush1.bf16.msra.mxu0 0
        %264 = vmatprep.subr.bf16.mxu0 0
        %265 = vmatpush1.bf16.msra.mxu0 0
        %266 = vmatprep.subr.bf16.mxu0 0
        %267 = vmatpush1.bf16.msra.mxu0 0
        %268 = vmatprep.subr.bf16.mxu0 0
        %269 = vmatpush1.bf16.msra.mxu0 0
        %270 = vmatprep.subr.bf16.mxu0 0
        %271 = vmatpush1.bf16.msra.mxu0 0
        %272 = vmatprep.subr.bf16.mxu0 0
        %273 = vmatpush1.bf16.msra.mxu0 0
        %274 = vmatprep.subr.bf16.mxu0 0
        %275 = vmatpush1.bf16.msra.mxu0 0
        %276 = vmatprep.subr.bf16.mxu0 0
        %277 = vmatpush1.bf16.msra.mxu0 0
        %278 = vmatprep.subr.bf16.mxu0 0
        %279 = vmatpush1.bf16.msra.mxu0 0
        %280 = vmatprep.subr.bf16.mxu0 0
        %281 = vmatpush1.bf16.msra.mxu0 0
        %282 = vmatprep.subr.bf16.mxu0 0
        %283 = vmatpush1.bf16.msra.mxu0 0
        %284 = vmatprep.subr.bf16.mxu0 0
        %285 = vmatpush1.bf16.msra.mxu0 0
        %286 = vmatprep.subr.bf16.mxu0 0
        %287 = vmatpush1.bf16.msra.mxu0 0
        %288 = vmatprep.mubr.bf16.mxu0 0
        %289 = vmatmul.mubr.bf16.gmra.mrb[0].mxu0 %v254
        %v290 = vpop.f32.mrb[0].mxu0
        %v291 = vadd.f32 %v230, %v290
        %v292 = vpop.f32.mrb[0].mxu0
        %v293 = vadd.f32 %v230, %v292
        %v294 = vpop.f32.mrb[0].mxu0
        %v295 = vpop.f32.mrb[0].mxu0
        %296 = vdwg.mxu0
        %v297 = vpack.c.bf16 %v291, %v291
        %v298 = vpack.c.bf16 %v293, %v293
        %v301 = vunpack.c.l.b16 %v297
        %v302 = vunpack.c.l.b16 %v298
        %v303 = vpack.c.b16 %v302, %v301
        %305 = vst [vmem:[%s218] sm:$0xff] %v303
        %s306 = smul.u32 2, %s14
        %p307 = scmp.lt.s32.totalorder %s306, 3
        %s308 = scalar_select %p307, %s306, 3
        %s309 = smul.addr %s308, 4
        %s310 = scalar_lea.vmem %s3, %s309
        // Predicated region
        $region71: #{unet_forward.16} parent=65 // pred_check
          %p311 = pneg %p100
        $region72: #{unet_forward.16} parent=65 // pred_check_branch
          %313 = sbr.rel (%p311) target = $region74
        $region73: #{unet_forward.16} parent=65 // pred_region
          %s314 = smul.u32 2, %s14
        $region74: #{unet_forward.16} parent=65 // pred_fallthru
          _
      $region66: #{unet_forward.16} parent=5 // pred_fallthru
        _
      %p315 = scmp.le.s32.totalorder 2, %s9
      // Predicated region
      $region75: #{unet_forward.16} parent=5 // pred_check
        %p316 = pneg %p315
      $region76: #{unet_forward.16} parent=5 // pred_check_branch
        %318 = sbr.rel (%p316) target = $region78
      $region77: #{unet_forward.16} parent=5 // pred_region
        %s319 = ssub.s32 %s9, 2
        // Predicated region
        $region79: #{unet_forward.16} parent=77 // pred_check
          %p320 = pneg %p106
        $region80: #{unet_forward.16} parent=77 // pred_check_branch
          %322 = sbr.rel (%p320) target = $region82
        $region81: #{unet_forward.16} parent=77 // pred_region
          %s323 = smul.u32 2, %s15
          %p324 = scmp.lt.s32.totalorder %s323, 3
          %s325 = scalar_select %p324, %s323, 3
          %s326 = smul.addr %s325, 4
          %s327 = scalar_lea.vmem %s3, %s326
        $region82: #{unet_forward.16} parent=77 // pred_fallthru
          _
      $region78: #{unet_forward.16} parent=5 // pred_fallthru
        _
    $region6: #{unet_forward.16} parent=1 // loop_footer
      %s13 = sadd.s32 1, %s9
    $region7: #{unet_forward.16} parent=1 // loop_footer_branch
      %8 = sbr.rel target = $region3
    $region8: #{unet_forward.16} parent=1 // loop_exit
      _

// kernel: unet_forward.17
$region0: #{unet_forward.17}
  #allocation0 [shape = 'u32[]', space=smem, size = 0x4, offset = 0x4, fixed_abs, tag = 'smem constant byte address 0x4 - core index']
  #allocation1 [shape = 'u32[144,128]{1,0:T(1,128)}', space=vmem, size = 0x12000, scoped, tag = 'internal scratch']
  %s0 = inlined_call_operand.vmem [shape: bf16[64,128], index: 0, kind: input, shape index: {}]
  %s1 = inlined_call_operand.vmem [shape: bf16[8,64], index: 1, kind: input, shape index: {}]
  %s2 = inlined_call_operand.vmem [shape: f32[8,1], index: 2, kind: input, shape index: {}]
  %s3 = inlined_call_operand.vmem [shape: f32[8,1], index: 3, kind: input, shape index: {}]
  %s4 = inlined_call_operand.vmem [shape: f32[8,1], index: 4, kind: input, shape index: {}]
  %s5 = inlined_call_operand.vmem [shape: bf16[8,128], index: 5, kind: output, shape index: {}]
  %s6 = sld [smem:[#allocation0]]
  $region30: #{unet_forward.17} parent=0
    _
  %s8 = ssub.s32 1, %s6
  %s9 = scalar_select 0, %s8, %s6
  // Predicated region
  $region2: #{unet_forward.17} parent=0 // pred_check
    _
  $region3: #{unet_forward.17} parent=0 // pred_check_branch
    %11 = sbr.rel (0) target = $region5
  $region4: #{unet_forward.17} parent=0 // pred_region
    _
  $region5: #{unet_forward.17} parent=0 // pred_fallthru
    _
  // Predicated region
  $region6: #{unet_forward.17} parent=0 // pred_check
    _
  $region7: #{unet_forward.17} parent=0 // pred_check_branch
    %13 = sbr.rel (0) target = $region9
  $region8: #{unet_forward.17} parent=0 // pred_region
    _
  $region9: #{unet_forward.17} parent=0 // pred_fallthru
    _
  // Predicated region
  $region10: #{unet_forward.17} parent=0 // pred_check
    _
  $region11: #{unet_forward.17} parent=0 // pred_check_branch
    %15 = sbr.rel (0) target = $region13
  $region12: #{unet_forward.17} parent=0 // pred_region
    _
  $region13: #{unet_forward.17} parent=0 // pred_fallthru
    _
  // Predicated region
  $region14: #{unet_forward.17} parent=0 // pred_check
    _
  $region15: #{unet_forward.17} parent=0 // pred_check_branch
    %17 = sbr.rel (0) target = $region17
  $region16: #{unet_forward.17} parent=0 // pred_region
    _
  $region17: #{unet_forward.17} parent=0 // pred_fallthru
    _
  // Predicated region
  $region18: #{unet_forward.17} parent=0 // pred_check
    _
  $region19: #{unet_forward.17} parent=0 // pred_check_branch
    %19 = sbr.rel (0) target = $region21
  $region20: #{unet_forward.17} parent=0 // pred_region
    _
  $region21: #{unet_forward.17} parent=0 // pred_fallthru
    _
  %v21 = vld [vmem:[%s1] sm:$0xf]
  %v22 = vld [vmem:[%s0] sm:$0xf]
  %v23 = vld [vmem:[%s0 + $0x4] sm:$0xf]
  %v24 = vld [vmem:[%s0 + $0x8] sm:$0xf]
  %v25 = vld [vmem:[%s0 + $0xc] sm:$0xf]
  %v26 = vld [vmem:[%s0 + $0x10] sm:$0xf]
  %v27 = vld [vmem:[%s0 + $0x14] sm:$0xf]
  %v28 = vld [vmem:[%s0 + $0x18] sm:$0xf]
  %v29 = vld [vmem:[%s0 + $0x1c] sm:$0xf]
  %v30 = vld [vmem:[%s2] sm:$0xff]
  %32 = vset.pattern.permute.xlu0 0
  %33 = vperm.xlu0 %32, %v30
  %v34 = vpop.permute.xlu0 %33
  %v44 = vunpack.c.l.b16 %v22
  %v45 = vunpack.c.l.b16 %v23
  %v46 = vunpack.c.l.b16 %v24
  %v47 = vunpack.c.l.b16 %v25
  %v48 = vunpack.c.l.b16 %v26
  %v49 = vunpack.c.l.b16 %v27
  %v50 = vunpack.c.l.b16 %v28
  %v51 = vunpack.c.l.b16 %v29
  %v52 = vpack.c.b16 %v45, %v44
  %v53 = vpack.c.b16 %v47, %v46
  %v54 = vpack.c.b16 %v49, %v48
  %v55 = vpack.c.b16 %v51, %v50
  %vm60 = vcmask 523264
  %v62 = vsel %vm60, %v21, 0
  %64 = vmatprep.subr.bf16.mxu0 0
  %65 = vmatpush1.bf16.msra.mxu0 %v52
  %66 = vmatprep.subr.bf16.mxu0 0
  %67 = vmatpush1.bf16.msra.mxu0 %v53
  %68 = vmatprep.subr.bf16.mxu0 0
  %69 = vmatpush1.bf16.msra.mxu0 %v54
  %70 = vmatprep.subr.bf16.mxu0 0
  %71 = vmatpush1.bf16.msra.mxu0 %v55
  %72 = vmatprep.subr.bf16.mxu0 0
  %73 = vmatpush1.bf16.msra.mxu0 0
  %74 = vmatprep.subr.bf16.mxu0 0
  %75 = vmatpush1.bf16.msra.mxu0 0
  %76 = vmatprep.subr.bf16.mxu0 0
  %77 = vmatpush1.bf16.msra.mxu0 0
  %78 = vmatprep.subr.bf16.mxu0 0
  %79 = vmatpush1.bf16.msra.mxu0 0
  %80 = vmatprep.subr.bf16.mxu0 0
  %81 = vmatpush1.bf16.msra.mxu0 0
  %82 = vmatprep.subr.bf16.mxu0 0
  %83 = vmatpush1.bf16.msra.mxu0 0
  %84 = vmatprep.subr.bf16.mxu0 0
  %85 = vmatpush1.bf16.msra.mxu0 0
  %86 = vmatprep.subr.bf16.mxu0 0
  %87 = vmatpush1.bf16.msra.mxu0 0
  %88 = vmatprep.subr.bf16.mxu0 0
  %89 = vmatpush1.bf16.msra.mxu0 0
  %90 = vmatprep.subr.bf16.mxu0 0
  %91 = vmatpush1.bf16.msra.mxu0 0
  %92 = vmatprep.subr.bf16.mxu0 0
  %93 = vmatpush1.bf16.msra.mxu0 0
  %94 = vmatprep.subr.bf16.mxu0 0
  %95 = vmatpush1.bf16.msra.mxu0 0
  %96 = vmatprep.mubr.bf16.mxu0 0
  %97 = vmatmul.mubr.bf16.gmra.mrb[0].mxu0 %v62
  %v98 = vpop.f32.mrb[0].mxu0
  %v99 = vadd.f32 %v34, %v98
  %v100 = vpop.f32.mrb[0].mxu0
  %v101 = vpop.f32.mrb[0].mxu0
  %v102 = vpop.f32.mrb[0].mxu0
  %103 = vdwg.mxu0
  %104 = vadd.xlane.f32.xlu0 %v99
  %v105 = vpop.xlane.xlu0 %104
  %v106 = vmul.f32 %v99, %v99
  %107 = vadd.xlane.f32.xlu0 %v106
  %v108 = vpop.xlane.xlu0 %107
  %v109 = vmul.f32 %v105, 0.0078125
  %v110 = vmul.f32 %v108, 0.0078125
  %v111 = vmul.f32 %v109, %v109
  %v112 = vsub.f32 %v110, %v111
  %v113 = vmax.f32 %v112, 0.0
  %v114 = vld [vmem:[%s3] sm:$0xff]
  %v115 = vadd.f32 %v113, 1e-05
  %v116 = vrsqrt.pop %v115
  %v117 = vmul.f32 %v114, %v116
  %v118 = vsub.f32 %v99, %v109
  %120 = vset.pattern.permute.xlu0 0
  %121 = vperm.xlu0 %120, %v117
  %v122 = vpop.permute.xlu0 %121
  %v124 = vmul.f32 %v118, %v122
  %v125 = vld [vmem:[%s4] sm:$0xff]
  %127 = vset.pattern.permute.xlu0 0
  %128 = vperm.xlu0 %127, %v125
  %v129 = vpop.permute.xlu0 %128
  %v131 = vadd.f32 %v124, %v129
  %v132 = vpack.c.bf16 %v131, %v131
  %133 = vst [vmem:[%s5] sm:$0xf] %v132
  // Predicated region
  $region22: #{unet_forward.17} parent=0 // pred_check
    _
  $region23: #{unet_forward.17} parent=0 // pred_check_branch
    %135 = sbr.rel (0) target = $region25
  $region24: #{unet_forward.17} parent=0 // pred_region
    _
  $region25: #{unet_forward.17} parent=0 // pred_fallthru
    _
  // Predicated region
  $region26: #{unet_forward.17} parent=0 // pred_check
    _
  $region27: #{unet_forward.17} parent=0 // pred_check_branch
    %137 = sbr.rel (0) target = $region29
  $region28: #{unet_forward.17} parent=0 // pred_region
    _
  $region29: #{unet_forward.17} parent=0 // pred_fallthru
    _

// kernel: unet_forward.18
$region0: #{unet_forward.18}
  #allocation0 [shape = 'u32[]', space=smem, size = 0x4, offset = 0x4, fixed_abs, tag = 'smem constant byte address 0x4 - core index']
  #allocation1 [shape = 'u32[144,128]{1,0:T(1,128)}', space=vmem, size = 0x12000, scoped, tag = 'internal scratch']
  %s0 = inlined_call_operand.vmem [shape: bf16[128,128], index: 0, kind: input, shape index: {}]
  %s1 = inlined_call_operand.vmem [shape: bf16[16,128], index: 1, kind: input, shape index: {}]
  %s2 = inlined_call_operand.vmem [shape: f32[16,1], index: 2, kind: input, shape index: {}]
  %s3 = inlined_call_operand.vmem [shape: f32[16,1], index: 3, kind: input, shape index: {}]
  %s4 = inlined_call_operand.vmem [shape: f32[16,1], index: 4, kind: input, shape index: {}]
  %s5 = inlined_call_operand.vmem [shape: bf16[16,128], index: 5, kind: output, shape index: {}]
  %s6 = sld [smem:[#allocation0]]
  $region30: #{unet_forward.18} parent=0
    _
  %s8 = ssub.s32 1, %s6
  %s9 = scalar_select 0, %s8, %s6
  // Predicated region
  $region2: #{unet_forward.18} parent=0 // pred_check
    _
  $region3: #{unet_forward.18} parent=0 // pred_check_branch
    %11 = sbr.rel (0) target = $region5
  $region4: #{unet_forward.18} parent=0 // pred_region
    _
  $region5: #{unet_forward.18} parent=0 // pred_fallthru
    _
  // Predicated region
  $region6: #{unet_forward.18} parent=0 // pred_check
    _
  $region7: #{unet_forward.18} parent=0 // pred_check_branch
    %13 = sbr.rel (0) target = $region9
  $region8: #{unet_forward.18} parent=0 // pred_region
    _
  $region9: #{unet_forward.18} parent=0 // pred_fallthru
    _
  // Predicated region
  $region10: #{unet_forward.18} parent=0 // pred_check
    _
  $region11: #{unet_forward.18} parent=0 // pred_check_branch
    %15 = sbr.rel (0) target = $region13
  $region12: #{unet_forward.18} parent=0 // pred_region
    _
  $region13: #{unet_forward.18} parent=0 // pred_fallthru
    _
  // Predicated region
  $region14: #{unet_forward.18} parent=0 // pred_check
    _
  $region15: #{unet_forward.18} parent=0 // pred_check_branch
    %17 = sbr.rel (0) target = $region17
  $region16: #{unet_forward.18} parent=0 // pred_region
    _
  $region17: #{unet_forward.18} parent=0 // pred_fallthru
    _
  // Predicated region
  $region18: #{unet_forward.18} parent=0 // pred_check
    _
  $region19: #{unet_forward.18} parent=0 // pred_check_branch
    %19 = sbr.rel (0) target = $region21
  $region20: #{unet_forward.18} parent=0 // pred_region
    _
  $region21: #{unet_forward.18} parent=0 // pred_fallthru
    _
  %v21 = vld [vmem:[%s1] sm:$0xf]
  %v22 = vld [vmem:[%s1 + $0x4] sm:$0xf]
  %v23 = vld [vmem:[%s0] sm:$0xf]
  %v24 = vld [vmem:[%s0 + $0x4] sm:$0xf]
  %v25 = vld [vmem:[%s0 + $0x8] sm:$0xf]
  %v26 = vld [vmem:[%s0 + $0xc] sm:$0xf]
  %v27 = vld [vmem:[%s0 + $0x10] sm:$0xf]
  %v28 = vld [vmem:[%s0 + $0x14] sm:$0xf]
  %v29 = vld [vmem:[%s0 + $0x18] sm:$0xf]
  %v30 = vld [vmem:[%s0 + $0x1c] sm:$0xf]
  %v31 = vld [vmem:[%s0 + $0x20] sm:$0xf]
  %v32 = vld [vmem:[%s0 + $0x24] sm:$0xf]
  %v33 = vld [vmem:[%s0 + $0x28] sm:$0xf]
  %v34 = vld [vmem:[%s0 + $0x2c] sm:$0xf]
  %v35 = vld [vmem:[%s0 + $0x30] sm:$0xf]
  %v36 = vld [vmem:[%s0 + $0x34] sm:$0xf]
  %v37 = vld [vmem:[%s0 + $0x38] sm:$0xf]
  %v38 = vld [vmem:[%s0 + $0x3c] sm:$0xf]
  %v39 = vld [vmem:[%s2] sm:$0xff]
  %v40 = vld [vmem:[%s2 + $0x8] sm:$0xff]
  %42 = vset.pattern.permute.xlu0 0
  %43 = vperm.xlu0 %42, %v39
  %v44 = vpop.permute.xlu0 %43
  %47 = vset.pattern.permute.xlu0 0
  %48 = vperm.xlu0 %47, %v40
  %v49 = vpop.permute.xlu0 %48
  %v53 = vunpack.c.l.b16 %v21
  %v54 = vunpack.c.l.b16 %v22
  %v55 = vpack.c.b16 %v54, %v53
  %v73 = vunpack.c.l.b16 %v23
  %v74 = vunpack.c.l.b16 %v24
  %v75 = vunpack.c.l.b16 %v25
  %v76 = vunpack.c.l.b16 %v26
  %v77 = vunpack.c.l.b16 %v27
  %v78 = vunpack.c.l.b16 %v28
  %v79 = vunpack.c.l.b16 %v29
  %v80 = vunpack.c.l.b16 %v30
  %v81 = vunpack.c.l.b16 %v31
  %v82 = vunpack.c.l.b16 %v32
  %v83 = vunpack.c.l.b16 %v33
  %v84 = vunpack.c.l.b16 %v34
  %v85 = vunpack.c.l.b16 %v35
  %v86 = vunpack.c.l.b16 %v36
  %v87 = vunpack.c.l.b16 %v37
  %v88 = vunpack.c.l.b16 %v38
  %v89 = vpack.c.b16 %v74, %v73
  %v90 = vpack.c.b16 %v76, %v75
  %v91 = vpack.c.b16 %v78, %v77
  %v92 = vpack.c.b16 %v80, %v79
  %v93 = vpack.c.b16 %v82, %v81
  %v94 = vpack.c.b16 %v84, %v83
  %v95 = vpack.c.b16 %v86, %v85
  %v96 = vpack.c.b16 %v88, %v87
  %105 = vmatprep.subr.bf16.mxu0 0
  %106 = vmatpush1.bf16.msra.mxu0 %v89
  %107 = vmatprep.subr.bf16.mxu0 0
  %108 = vmatpush1.bf16.msra.mxu0 %v90
  %109 = vmatprep.subr.bf16.mxu0 0
  %110 = vmatpush1.bf16.msra.mxu0 %v91
  %111 = vmatprep.subr.bf16.mxu0 0
  %112 = vmatpush1.bf16.msra.mxu0 %v92
  %113 = vmatprep.subr.bf16.mxu0 0
  %114 = vmatpush1.bf16.msra.mxu0 %v93
  %115 = vmatprep.subr.bf16.mxu0 0
  %116 = vmatpush1.bf16.msra.mxu0 %v94
  %117 = vmatprep.subr.bf16.mxu0 0
  %118 = vmatpush1.bf16.msra.mxu0 %v95
  %119 = vmatprep.subr.bf16.mxu0 0
  %120 = vmatpush1.bf16.msra.mxu0 %v96
  %121 = vmatprep.subr.bf16.mxu0 0
  %122 = vmatpush1.bf16.msra.mxu0 0
  %123 = vmatprep.subr.bf16.mxu0 0
  %124 = vmatpush1.bf16.msra.mxu0 0
  %125 = vmatprep.subr.bf16.mxu0 0
  %126 = vmatpush1.bf16.msra.mxu0 0
  %127 = vmatprep.subr.bf16.mxu0 0
  %128 = vmatpush1.bf16.msra.mxu0 0
  %129 = vmatprep.subr.bf16.mxu0 0
  %130 = vmatpush1.bf16.msra.mxu0 0
  %131 = vmatprep.subr.bf16.mxu0 0
  %132 = vmatpush1.bf16.msra.mxu0 0
  %133 = vmatprep.subr.bf16.mxu0 0
  %134 = vmatpush1.bf16.msra.mxu0 0
  %135 = vmatprep.subr.bf16.mxu0 0
  %136 = vmatpush1.bf16.msra.mxu0 0
  %137 = vmatprep.mubr.bf16.mxu0 0
  %138 = vmatmul.mubr.bf16.gmra.mrb[0].mxu0 %v55
  %v139 = vpop.f32.mrb[0].mxu0
  %v140 = vadd.f32 %v44, %v139
  %v141 = vpop.f32.mrb[0].mxu0
  %v142 = vpop.f32.mrb[0].mxu0
  %v143 = vadd.f32 %v49, %v142
  %v144 = vpop.f32.mrb[0].mxu0
  %145 = vdwg.mxu0
  %146 = vadd.xlane.f32.xlu0 %v140
  %v147 = vpop.xlane.xlu0 %146
  %148 = vadd.xlane.f32.xlu0 %v143
  %v149 = vpop.xlane.xlu0 %148
  %v150 = vmul.f32 %v140, %v140
  %v151 = vmul.f32 %v143, %v143
  %152 = vadd.xlane.f32.xlu0 %v150
  %v153 = vpop.xlane.xlu0 %152
  %154 = vadd.xlane.f32.xlu0 %v151
  %v155 = vpop.xlane.xlu0 %154
  %v156 = vmul.f32 %v39, 96.0
  %v157 = vmul.f32 %v40, 96.0
  %v158 = vsub.f32 %v147, %v156
  %v159 = vsub.f32 %v149, %v157
  %v160 = vmul.f32 %v39, %v39
  %v161 = vmul.f32 %v40, %v40
  %v162 = vmul.f32 %v160, 96.0
  %v163 = vmul.f32 %v161, 96.0
  %v164 = vsub.f32 %v153, %v162
  %v165 = vsub.f32 %v155, %v163
  %v166 = vmul.f32 %v158, 0.03125
  %v167 = vmul.f32 %v159, 0.03125
  %v168 = vmul.f32 %v164, 0.03125
  %v169 = vmul.f32 %v165, 0.03125
  %v170 = vmul.f32 %v166, %v166
  %v171 = vmul.f32 %v167, %v167
  %v172 = vsub.f32 %v168, %v170
  %v173 = vsub.f32 %v169, %v171
  %v174 = vmax.f32 %v172, 0.0
  %v175 = vmax.f32 %v173, 0.0
  %v176 = vld [vmem:[%s3] sm:$0xff]
  %v177 = vld [vmem:[%s3 + $0x8] sm:$0xff]
  %v178 = vadd.f32 %v174, 1e-05
  %v179 = vadd.f32 %v175, 1e-05
  %v180 = vrsqrt.pop %v178
  %v181 = vrsqrt.pop %v179
  %v182 = vmul.f32 %v176, %v180
  %v183 = vmul.f32 %v177, %v181
  %185 = vset.pattern.permute.xlu0 0
  %186 = vperm.xlu0 %185, %v166
  %v187 = vpop.permute.xlu0 %186
  %190 = vset.pattern.permute.xlu0 0
  %191 = vperm.xlu0 %190, %v167
  %v192 = vpop.permute.xlu0 %191
  %v194 = vsub.f32 %v140, %v187
  %v195 = vsub.f32 %v143, %v192
  %197 = vset.pattern.permute.xlu0 0
  %198 = vperm.xlu0 %197, %v182
  %v199 = vpop.permute.xlu0 %198
  %202 = vset.pattern.permute.xlu0 0
  %203 = vperm.xlu0 %202, %v183
  %v204 = vpop.permute.xlu0 %203
  %v206 = vmul.f32 %v194, %v199
  %v207 = vmul.f32 %v195, %v204
  %v208 = vld [vmem:[%s4] sm:$0xff]
  %v209 = vld [vmem:[%s4 + $0x8] sm:$0xff]
  %211 = vset.pattern.permute.xlu0 0
  %212 = vperm.xlu0 %211, %v208
  %v213 = vpop.permute.xlu0 %212
  %216 = vset.pattern.permute.xlu0 0
  %217 = vperm.xlu0 %216, %v209
  %v218 = vpop.permute.xlu0 %217
  %v220 = vadd.f32 %v206, %v213
  %v221 = vadd.f32 %v207, %v218
  %v222 = vpack.c.bf16 %v221, %v220
  %v224 = vunpack.c.l.b16 %v222
  %v225 = vunpack.c.h.b16 %v222
  %v226 = vpack.c.b16 %v224, %v224
  %v227 = vpack.c.b16 %v225, %v225
  %230 = vst [vmem:[%s5] sm:$0xf] %v226
  %231 = vst [vmem:[%s5 + $0x4] sm:$0xf] %v227
  // Predicated region
  $region22: #{unet_forward.18} parent=0 // pred_check
    _
  $region23: #{unet_forward.18} parent=0 // pred_check_branch
    %233 = sbr.rel (0) target = $region25
  $region24: #{unet_forward.18} parent=0 // pred_region
    _
  $region25: #{unet_forward.18} parent=0 // pred_fallthru
    _
  // Predicated region
  $region26: #{unet_forward.18} parent=0 // pred_check
    _
  $region27: #{unet_forward.18} parent=0 // pred_check_branch
    %235 = sbr.rel (0) target = $region29
  $region28: #{unet_forward.18} parent=0 // pred_region
    _
  $region29: #{unet_forward.18} parent=0 // pred_fallthru
    _

// kernel: unet_forward.19
$region0: #{unet_forward.19}
  #allocation0 [shape = 'u32[]', space=smem, size = 0x4, offset = 0x4, fixed_abs, tag = 'smem constant byte address 0x4 - core index']
  #allocation1 [shape = 'u32[144,128]{1,0:T(1,128)}', space=vmem, size = 0x12000, scoped, tag = 'internal scratch']
  %s0 = inlined_call_operand.vmem [shape: bf16[256,128], index: 0, kind: input, shape index: {}]
  %s1 = inlined_call_operand.vmem [shape: bf16[32,256], index: 1, kind: input, shape index: {}]
  %s2 = inlined_call_operand.vmem [shape: f32[32,1], index: 2, kind: input, shape index: {}]
  %s3 = inlined_call_operand.vmem [shape: f32[32,1], index: 3, kind: input, shape index: {}]
  %s4 = inlined_call_operand.vmem [shape: f32[32,1], index: 4, kind: input, shape index: {}]
  %s5 = inlined_call_operand.vmem [shape: bf16[32,128], index: 5, kind: output, shape index: {}]
  %s6 = sld [smem:[#allocation0]]
  $region30: #{unet_forward.19} parent=0
    _
  %s8 = ssub.s32 1, %s6
  %s9 = scalar_select 0, %s8, %s6
  // Predicated region
  $region2: #{unet_forward.19} parent=0 // pred_check
    _
  $region3: #{unet_forward.19} parent=0 // pred_check_branch
    %11 = sbr.rel (0) target = $region5
  $region4: #{unet_forward.19} parent=0 // pred_region
    _
  $region5: #{unet_forward.19} parent=0 // pred_fallthru
    _
  // Predicated region
  $region6: #{unet_forward.19} parent=0 // pred_check
    _
  $region7: #{unet_forward.19} parent=0 // pred_check_branch
    %13 = sbr.rel (0) target = $region9
  $region8: #{unet_forward.19} parent=0 // pred_region
    _
  $region9: #{unet_forward.19} parent=0 // pred_fallthru
    _
  // Predicated region
  $region10: #{unet_forward.19} parent=0 // pred_check
    _
  $region11: #{unet_forward.19} parent=0 // pred_check_branch
    %15 = sbr.rel (0) target = $region13
  $region12: #{unet_forward.19} parent=0 // pred_region
    _
  $region13: #{unet_forward.19} parent=0 // pred_fallthru
    _
  // Predicated region
  $region14: #{unet_forward.19} parent=0 // pred_check
    _
  $region15: #{unet_forward.19} parent=0 // pred_check_branch
    %17 = sbr.rel (0) target = $region17
  $region16: #{unet_forward.19} parent=0 // pred_region
    _
  $region17: #{unet_forward.19} parent=0 // pred_fallthru
    _
  // Predicated region
  $region18: #{unet_forward.19} parent=0 // pred_check
    _
  $region19: #{unet_forward.19} parent=0 // pred_check_branch
    %19 = sbr.rel (0) target = $region21
  $region20: #{unet_forward.19} parent=0 // pred_region
    _
  $region21: #{unet_forward.19} parent=0 // pred_fallthru
    _
  %v21 = vld [vmem:[%s1] sm:$0xff]
  %v22 = vld [vmem:[%s1 + $0x8] sm:$0xff]
  %v23 = vld [vmem:[%s1 + $0x10] sm:$0xff]
  %v24 = vld [vmem:[%s1 + $0x18] sm:$0xff]
  %v25 = vld [vmem:[%s0] sm:$0xf]
  %v26 = vld [vmem:[%s0 + $0x4] sm:$0xf]
  %v27 = vld [vmem:[%s0 + $0x8] sm:$0xf]
  %v28 = vld [vmem:[%s0 + $0xc] sm:$0xf]
  %v29 = vld [vmem:[%s0 + $0x10] sm:$0xf]
  %v30 = vld [vmem:[%s0 + $0x14] sm:$0xf]
  %v31 = vld [vmem:[%s0 + $0x18] sm:$0xf]
  %v32 = vld [vmem:[%s0 + $0x1c] sm:$0xf]
  %v33 = vld [vmem:[%s0 + $0x20] sm:$0xf]
  %v34 = vld [vmem:[%s0 + $0x24] sm:$0xf]
  %v35 = vld [vmem:[%s0 + $0x28] sm:$0xf]
  %v36 = vld [vmem:[%s0 + $0x2c] sm:$0xf]
  %v37 = vld [vmem:[%s0 + $0x30] sm:$0xf]
  %v38 = vld [vmem:[%s0 + $0x34] sm:$0xf]
  %v39 = vld [vmem:[%s0 + $0x38] sm:$0xf]
  %v40 = vld [vmem:[%s0 + $0x3c] sm:$0xf]
  %v41 = vld [vmem:[%s0 + $0x40] sm:$0xf]
  %v42 = vld [vmem:[%s0 + $0x44] sm:$0xf]
  %v43 = vld [vmem:[%s0 + $0x48] sm:$0xf]
  %v44 = vld [vmem:[%s0 + $0x4c] sm:$0xf]
  %v45 = vld [vmem:[%s0 + $0x50] sm:$0xf]
  %v46 = vld [vmem:[%s0 + $0x54] sm:$0xf]
  %v47 = vld [vmem:[%s0 + $0x58] sm:$0xf]
  %v48 = vld [vmem:[%s0 + $0x5c] sm:$0xf]
  %v49 = vld [vmem:[%s0 + $0x60] sm:$0xf]
  %v50 = vld [vmem:[%s0 + $0x64] sm:$0xf]
  %v51 = vld [vmem:[%s0 + $0x68] sm:$0xf]
  %v52 = vld [vmem:[%s0 + $0x6c] sm:$0xf]
  %v53 = vld [vmem:[%s0 + $0x70] sm:$0xf]
  %v54 = vld [vmem:[%s0 + $0x74] sm:$0xf]
  %v55 = vld [vmem:[%s0 + $0x78] sm:$0xf]
  %v56 = vld [vmem:[%s0 + $0x7c] sm:$0xf]
  %v57 = vld [vmem:[%s2] sm:$0xff]
  %v58 = vld [vmem:[%s2 + $0x8] sm:$0xff]
  %v59 = vld [vmem:[%s2 + $0x10] sm:$0xff]
  %v60 = vld [vmem:[%s2 + $0x18] sm:$0xff]
  %62 = vset.pattern.permute.xlu0 0
  %63 = vperm.xlu0 %62, %v57
  %v64 = vpop.permute.xlu0 %63
  %67 = vset.pattern.permute.xlu0 0
  %68 = vperm.xlu0 %67, %v58
  %v69 = vpop.permute.xlu0 %68
  %72 = vset.pattern.permute.xlu0 0
  %73 = vperm.xlu0 %72, %v59
  %v74 = vpop.permute.xlu0 %73
  %77 = vset.pattern.permute.xlu0 0
  %78 = vperm.xlu0 %77, %v60
  %v79 = vpop.permute.xlu0 %78
  %v85 = vunpack.c.l.b16 %v21
  %v86 = vunpack.c.h.b16 %v21
  %v87 = vunpack.c.l.b16 %v22
  %v88 = vunpack.c.h.b16 %v22
  %v89 = vunpack.c.l.b16 %v23
  %v90 = vunpack.c.h.b16 %v23
  %v91 = vunpack.c.l.b16 %v24
  %v92 = vunpack.c.h.b16 %v24
  %v93 = vpack.c.b16 %v87, %v85
  %v94 = vpack.c.b16 %v88, %v86
  %v95 = vpack.c.b16 %v91, %v89
  %v96 = vpack.c.b16 %v92, %v90
  %v133 = vunpack.c.l.b16 %v25
  %v134 = vunpack.c.l.b16 %v26
  %v135 = vunpack.c.l.b16 %v27
  %v136 = vunpack.c.l.b16 %v28
  %v137 = vunpack.c.l.b16 %v29
  %v138 = vunpack.c.l.b16 %v30
  %v139 = vunpack.c.l.b16 %v31
  %v140 = vunpack.c.l.b16 %v32
  %v141 = vunpack.c.l.b16 %v33
  %v142 = vunpack.c.l.b16 %v34
  %v143 = vunpack.c.l.b16 %v35
  %v144 = vunpack.c.l.b16 %v36
  %v145 = vunpack.c.l.b16 %v37
  %v146 = vunpack.c.l.b16 %v38
  %v147 = vunpack.c.l.b16 %v39
  %v148 = vunpack.c.l.b16 %v40
  %v149 = vunpack.c.l.b16 %v41
  %v150 = vunpack.c.l.b16 %v42
  %v151 = vunpack.c.l.b16 %v43
  %v152 = vunpack.c.l.b16 %v44
  %v153 = vunpack.c.l.b16 %v45
  %v154 = vunpack.c.l.b16 %v46
  %v155 = vunpack.c.l.b16 %v47
  %v156 = vunpack.c.l.b16 %v48
  %v157 = vunpack.c.l.b16 %v49
  %v158 = vunpack.c.l.b16 %v50
  %v159 = vunpack.c.l.b16 %v51
  %v160 = vunpack.c.l.b16 %v52
  %v161 = vunpack.c.l.b16 %v53
  %v162 = vunpack.c.l.b16 %v54
  %v163 = vunpack.c.l.b16 %v55
  %v164 = vunpack.c.l.b16 %v56
  %v165 = vpack.c.b16 %v134, %v133
  %v166 = vpack.c.b16 %v136, %v135
  %v167 = vpack.c.b16 %v138, %v137
  %v168 = vpack.c.b16 %v140, %v139
  %v169 = vpack.c.b16 %v142, %v141
  %v170 = vpack.c.b16 %v144, %v143
  %v171 = vpack.c.b16 %v146, %v145
  %v172 = vpack.c.b16 %v148, %v147
  %v173 = vpack.c.b16 %v150, %v149
  %v174 = vpack.c.b16 %v152, %v151
  %v175 = vpack.c.b16 %v154, %v153
  %v176 = vpack.c.b16 %v156, %v155
  %v177 = vpack.c.b16 %v158, %v157
  %v178 = vpack.c.b16 %v160, %v159
  %v179 = vpack.c.b16 %v162, %v161
  %v180 = vpack.c.b16 %v164, %v163
  %197 = vmatprep.subr.bf16.mxu0 0
  %198 = vmatpush1.bf16.msra.mxu0 %v165
  %199 = vmatprep.subr.bf16.mxu0 0
  %200 = vmatpush1.bf16.msra.mxu0 %v166
  %201 = vmatprep.subr.bf16.mxu0 0
  %202 = vmatpush1.bf16.msra.mxu0 %v167
  %203 = vmatprep.subr.bf16.mxu0 0
  %204 = vmatpush1.bf16.msra.mxu0 %v168
  %205 = vmatprep.subr.bf16.mxu0 0
  %206 = vmatpush1.bf16.msra.mxu0 %v169
  %207 = vmatprep.subr.bf16.mxu0 0
  %208 = vmatpush1.bf16.msra.mxu0 %v170
  %209 = vmatprep.subr.bf16.mxu0 0
  %210 = vmatpush1.bf16.msra.mxu0 %v171
  %211 = vmatprep.subr.bf16.mxu0 0
  %212 = vmatpush1.bf16.msra.mxu0 %v172
  %213 = vmatprep.subr.bf16.mxu0 0
  %214 = vmatpush1.bf16.msra.mxu0 %v173
  %215 = vmatprep.subr.bf16.mxu0 0
  %216 = vmatpush1.bf16.msra.mxu0 %v174
  %217 = vmatprep.subr.bf16.mxu0 0
  %218 = vmatpush1.bf16.msra.mxu0 %v175
  %219 = vmatprep.subr.bf16.mxu0 0
  %220 = vmatpush1.bf16.msra.mxu0 %v176
  %221 = vmatprep.subr.bf16.mxu0 0
  %222 = vmatpush1.bf16.msra.mxu0 %v177
  %223 = vmatprep.subr.bf16.mxu0 0
  %224 = vmatpush1.bf16.msra.mxu0 %v178
  %225 = vmatprep.subr.bf16.mxu0 0
  %226 = vmatpush1.bf16.msra.mxu0 %v179
  %227 = vmatprep.subr.bf16.mxu0 0
  %228 = vmatpush1.bf16.msra.mxu0 %v180
  %229 = vmatprep.mubr.bf16.mxu0 %v94
  %230 = vmatmul.mubr.bf16.gmra.mrb[0].mxu0 %v93
  %v231 = vpop.f32.mrb[0].mxu0
  %v232 = vadd.f32 %v64, %v231
  %v233 = vpop.f32.mrb[0].mxu0
  %v234 = vpop.f32.mrb[0].mxu0
  %v235 = vadd.f32 %v69, %v234
  %v236 = vpop.f32.mrb[0].mxu0
  %237 = vmatprep.mubr.bf16.mxu0 %v96
  %238 = vmatmul.mubr.bf16.gmra.mrb[0].mxu0 %v95
  %v239 = vpop.f32.mrb[0].mxu0
  %v240 = vadd.f32 %v74, %v239
  %v241 = vpop.f32.mrb[0].mxu0
  %v242 = vpop.f32.mrb[0].mxu0
  %v243 = vadd.f32 %v79, %v242
  %v244 = vpop.f32.mrb[0].mxu0
  %245 = vdwg.mxu0
  %246 = vadd.xlane.f32.xlu0 %v232
  %v247 = vpop.xlane.xlu0 %246
  %248 = vadd.xlane.f32.xlu0 %v235
  %v249 = vpop.xlane.xlu0 %248
  %250 = vadd.xlane.f32.xlu0 %v240
  %v251 = vpop.xlane.xlu0 %250
  %252 = vadd.xlane.f32.xlu0 %v243
  %v253 = vpop.xlane.xlu0 %252
  %v254 = vmul.f32 %v232, %v232
  %v255 = vmul.f32 %v235, %v235
  %v256 = vmul.f32 %v240, %v240
  %v257 = vmul.f32 %v243, %v243
  %258 = vadd.xlane.f32.xlu0 %v254
  %v259 = vpop.xlane.xlu0 %258
  %260 = vadd.xlane.f32.xlu0 %v255
  %v261 = vpop.xlane.xlu0 %260
  %262 = vadd.xlane.f32.xlu0 %v256
  %v263 = vpop.xlane.xlu0 %262
  %264 = vadd.xlane.f32.xlu0 %v257
  %v265 = vpop.xlane.xlu0 %264
  %v266 = vmul.f32 %v57, 120.0
  %v267 = vmul.f32 %v58, 120.0
  %v268 = vmul.f32 %v59, 120.0
  %v269 = vmul.f32 %v60, 120.0
  %v270 = vsub.f32 %v247, %v266
  %v271 = vsub.f32 %v249, %v267
  %v272 = vsub.f32 %v251, %v268
  %v273 = vsub.f32 %v253, %v269
  %v274 = vmul.f32 %v57, %v57
  %v275 = vmul.f32 %v58, %v58
  %v276 = vmul.f32 %v59, %v59
  %v277 = vmul.f32 %v60, %v60
  %v278 = vmul.f32 %v274, 120.0
  %v279 = vmul.f32 %v275, 120.0
  %v280 = vmul.f32 %v276, 120.0
  %v281 = vmul.f32 %v277, 120.0
  %v282 = vsub.f32 %v259, %v278
  %v283 = vsub.f32 %v261, %v279
  %v284 = vsub.f32 %v263, %v280
  %v285 = vsub.f32 %v265, %v281
  %v286 = vmul.f32 %v270, 0.125
  %v287 = vmul.f32 %v271, 0.125
  %v288 = vmul.f32 %v272, 0.125
  %v289 = vmul.f32 %v273, 0.125
  %v290 = vmul.f32 %v282, 0.125
  %v291 = vmul.f32 %v283, 0.125
  %v292 = vmul.f32 %v284, 0.125
  %v293 = vmul.f32 %v285, 0.125
  %v294 = vmul.f32 %v286, %v286
  %v295 = vmul.f32 %v287, %v287
  %v296 = vmul.f32 %v288, %v288
  %v297 = vmul.f32 %v289, %v289
  %v298 = vsub.f32 %v290, %v294
  %v299 = vsub.f32 %v291, %v295
  %v300 = vsub.f32 %v292, %v296
  %v301 = vsub.f32 %v293, %v297
  %v302 = vmax.f32 %v298, 0.0
  %v303 = vmax.f32 %v299, 0.0
  %v304 = vmax.f32 %v300, 0.0
  %v305 = vmax.f32 %v301, 0.0
  %v306 = vld [vmem:[%s3] sm:$0xff]
  %v307 = vld [vmem:[%s3 + $0x8] sm:$0xff]
  %v308 = vld [vmem:[%s3 + $0x10] sm:$0xff]
  %v309 = vld [vmem:[%s3 + $0x18] sm:$0xff]
  %v310 = vadd.f32 %v302, 1e-05
  %v311 = vadd.f32 %v303, 1e-05
  %v312 = vadd.f32 %v304, 1e-05
  %v313 = vadd.f32 %v305, 1e-05
  %v314 = vrsqrt.pop %v310
  %v315 = vrsqrt.pop %v311
  %v316 = vrsqrt.pop %v312
  %v317 = vrsqrt.pop %v313
  %v318 = vmul.f32 %v306, %v314
  %v319 = vmul.f32 %v307, %v315
  %v320 = vmul.f32 %v308, %v316
  %v321 = vmul.f32 %v309, %v317
  %323 = vset.pattern.permute.xlu0 0
  %324 = vperm.xlu0 %323, %v286
  %v325 = vpop.permute.xlu0 %324
  %328 = vset.pattern.permute.xlu0 0
  %329 = vperm.xlu0 %328, %v287
  %v330 = vpop.permute.xlu0 %329
  %333 = vset.pattern.permute.xlu0 0
  %334 = vperm.xlu0 %333, %v288
  %v335 = vpop.permute.xlu0 %334
  %338 = vset.pattern.permute.xlu0 0
  %339 = vperm.xlu0 %338, %v289
  %v340 = vpop.permute.xlu0 %339
  %v342 = vsub.f32 %v232, %v325
  %v343 = vsub.f32 %v235, %v330
  %v344 = vsub.f32 %v240, %v335
  %v345 = vsub.f32 %v243, %v340
  %347 = vset.pattern.permute.xlu0 0
  %348 = vperm.xlu0 %347, %v318
  %v349 = vpop.permute.xlu0 %348
  %352 = vset.pattern.permute.xlu0 0
  %353 = vperm.xlu0 %352, %v319
  %v354 = vpop.permute.xlu0 %353
  %357 = vset.pattern.permute.xlu0 0
  %358 = vperm.xlu0 %357, %v320
  %v359 = vpop.permute.xlu0 %358
  %362 = vset.pattern.permute.xlu0 0
  %363 = vperm.xlu0 %362, %v321
  %v364 = vpop.permute.xlu0 %363
  %v366 = vmul.f32 %v342, %v349
  %v367 = vmul.f32 %v343, %v354
  %v368 = vmul.f32 %v344, %v359
  %v369 = vmul.f32 %v345, %v364
  %v370 = vld [vmem:[%s4] sm:$0xff]
  %v371 = vld [vmem:[%s4 + $0x8] sm:$0xff]
  %v372 = vld [vmem:[%s4 + $0x10] sm:$0xff]
  %v373 = vld [vmem:[%s4 + $0x18] sm:$0xff]
  %375 = vset.pattern.permute.xlu0 0
  %376 = vperm.xlu0 %375, %v370
  %v377 = vpop.permute.xlu0 %376
  %380 = vset.pattern.permute.xlu0 0
  %381 = vperm.xlu0 %380, %v371
  %v382 = vpop.permute.xlu0 %381
  %385 = vset.pattern.permute.xlu0 0
  %386 = vperm.xlu0 %385, %v372
  %v387 = vpop.permute.xlu0 %386
  %390 = vset.pattern.permute.xlu0 0
  %391 = vperm.xlu0 %390, %v373
  %v392 = vpop.permute.xlu0 %391
  %v394 = vadd.f32 %v366, %v377
  %v395 = vadd.f32 %v367, %v382
  %v396 = vadd.f32 %v368, %v387
  %v397 = vadd.f32 %v369, %v392
  %v398 = vpack.c.bf16 %v395, %v394
  %v399 = vpack.c.bf16 %v397, %v396
  %v402 = vunpack.c.l.b16 %v398
  %v403 = vunpack.c.h.b16 %v398
  %v404 = vunpack.c.l.b16 %v399
  %v405 = vunpack.c.h.b16 %v399
  %v406 = vpack.c.b16 %v402, %v402
  %v407 = vpack.c.b16 %v403, %v403
  %v408 = vpack.c.b16 %v404, %v404
  %v409 = vpack.c.b16 %v405, %v405
  %414 = vst [vmem:[%s5] sm:$0xf] %v406
  %415 = vst [vmem:[%s5 + $0x4] sm:$0xf] %v407
  %416 = vst [vmem:[%s5 + $0x8] sm:$0xf] %v408
  %417 = vst [vmem:[%s5 + $0xc] sm:$0xf] %v409
  // Predicated region
  $region22: #{unet_forward.19} parent=0 // pred_check
    _
  $region23: #{unet_forward.19} parent=0 // pred_check_branch
    %419 = sbr.rel (0) target = $region25
  $region24: #{unet_forward.19} parent=0 // pred_region
    _
  $region25: #{unet_forward.19} parent=0 // pred_fallthru
    _
  // Predicated region
  $region26: #{unet_forward.19} parent=0 // pred_check
    _
  $region27: #{unet_forward.19} parent=0 // pred_check_branch
    %421 = sbr.rel (0) target = $region29
  $region28: #{unet_forward.19} parent=0 // pred_region
    _
  $region29: #{unet_forward.19} parent=0 // pred_fallthru
    _

// kernel: unet_forward.21
$region0: #{unet_forward.21}
  #allocation0 [shape = 'u32[]', space=smem, size = 0x4, offset = 0x4, fixed_abs, tag = 'smem constant byte address 0x4 - core index']
  #allocation1 [shape = 'u32[144,128]{1,0:T(1,128)}', space=vmem, size = 0x12000, scoped, tag = 'internal scratch']
  %s0 = inlined_call_operand.vmem [shape: bf16[64,1], index: 0, kind: input, shape index: {}]
  %s1 = inlined_call_operand.vmem [shape: bf16[1,4], index: 1, kind: input, shape index: {}]
  %s2 = inlined_call_operand.vmem [shape: bf16[64,4], index: 2, kind: output, shape index: {}]
  %s3 = sld [smem:[#allocation0]]
  $region18: #{unet_forward.21} parent=0
    _
  %s5 = ssub.s32 1, %s3
  %s6 = scalar_select 0, %s5, %s3
  // Predicated region
  $region2: #{unet_forward.21} parent=0 // pred_check
    _
  $region3: #{unet_forward.21} parent=0 // pred_check_branch
    %8 = sbr.rel (0) target = $region5
  $region4: #{unet_forward.21} parent=0 // pred_region
    _
  $region5: #{unet_forward.21} parent=0 // pred_fallthru
    _
  // Predicated region
  $region6: #{unet_forward.21} parent=0 // pred_check
    _
  $region7: #{unet_forward.21} parent=0 // pred_check_branch
    %10 = sbr.rel (0) target = $region9
  $region8: #{unet_forward.21} parent=0 // pred_region
    _
  $region9: #{unet_forward.21} parent=0 // pred_fallthru
    _
  %v12 = vld [vmem:[%s0] sm:$0xf]
  %v13 = vld [vmem:[%s0 + $0x4] sm:$0xf]
  %v14 = vld [vmem:[%s0 + $0x8] sm:$0xf]
  %v15 = vld [vmem:[%s0 + $0xc] sm:$0xf]
  %v16 = vld [vmem:[%s0 + $0x10] sm:$0xf]
  %v17 = vld [vmem:[%s0 + $0x14] sm:$0xf]
  %v18 = vld [vmem:[%s0 + $0x18] sm:$0xf]
  %v19 = vld [vmem:[%s0 + $0x1c] sm:$0xf]
  %v20 = vmax.bf16 %v12, 0
  %v21 = vmax.bf16 %v13, 0
  %v22 = vmax.bf16 %v14, 0
  %v23 = vmax.bf16 %v15, 0
  %v24 = vmax.bf16 %v16, 0
  %v25 = vmax.bf16 %v17, 0
  %v26 = vmax.bf16 %v18, 0
  %v27 = vmax.bf16 %v19, 0
  %29 = vset.pattern.permute.xlu0 0
  %30 = vperm.xlu0 %29, %v20
  %v31 = vpop.permute.xlu0 %30
  %v34 = vunpack.c.l.s4 839922192
  %v35 = vunpack.c.0.s8 %v34
  %v36 = vlaneseq
  %v37 = vshrl.u32 %v36, 7
  %v38 = vsub.s32 %v35, %v37
  %v39 = vrot.slane %v31, %v38
  %41 = vset.pattern.permute.xlu0 0
  %42 = vperm.xlu0 %41, %v21
  %v43 = vpop.permute.xlu0 %42
  %v46 = vunpack.c.l.s4 839922192
  %v47 = vunpack.c.0.s8 %v46
  %v48 = vlaneseq
  %v49 = vshrl.u32 %v48, 7
  %v50 = vsub.s32 %v47, %v49
  %v51 = vrot.slane %v43, %v50
  %53 = vset.pattern.permute.xlu0 0
  %54 = vperm.xlu0 %53, %v22
  %v55 = vpop.permute.xlu0 %54
  %v58 = vunpack.c.l.s4 839922192
  %v59 = vunpack.c.0.s8 %v58
  %v60 = vlaneseq
  %v61 = vshrl.u32 %v60, 7
  %v62 = vsub.s32 %v59, %v61
  %v63 = vrot.slane %v55, %v62
  %65 = vset.pattern.permute.xlu0 0
  %66 = vperm.xlu0 %65, %v23
  %v67 = vpop.permute.xlu0 %66
  %v70 = vunpack.c.l.s4 839922192
  %v71 = vunpack.c.0.s8 %v70
  %v72 = vlaneseq
  %v73 = vshrl.u32 %v72, 7
  %v74 = vsub.s32 %v71, %v73
  %v75 = vrot.slane %v67, %v74
  %77 = vset.pattern.permute.xlu0 0
  %78 = vperm.xlu0 %77, %v24
  %v79 = vpop.permute.xlu0 %78
  %v82 = vunpack.c.l.s4 839922192
  %v83 = vunpack.c.0.s8 %v82
  %v84 = vlaneseq
  %v85 = vshrl.u32 %v84, 7
  %v86 = vsub.s32 %v83, %v85
  %v87 = vrot.slane %v79, %v86
  %89 = vset.pattern.permute.xlu0 0
  %90 = vperm.xlu0 %89, %v25
  %v91 = vpop.permute.xlu0 %90
  %v94 = vunpack.c.l.s4 839922192
  %v95 = vunpack.c.0.s8 %v94
  %v96 = vlaneseq
  %v97 = vshrl.u32 %v96, 7
  %v98 = vsub.s32 %v95, %v97
  %v99 = vrot.slane %v91, %v98
  %101 = vset.pattern.permute.xlu0 0
  %102 = vperm.xlu0 %101, %v26
  %v103 = vpop.permute.xlu0 %102
  %v106 = vunpack.c.l.s4 839922192
  %v107 = vunpack.c.0.s8 %v106
  %v108 = vlaneseq
  %v109 = vshrl.u32 %v108, 7
  %v110 = vsub.s32 %v107, %v109
  %v111 = vrot.slane %v103, %v110
  %113 = vset.pattern.permute.xlu0 0
  %114 = vperm.xlu0 %113, %v27
  %v115 = vpop.permute.xlu0 %114
  %v118 = vunpack.c.l.s4 839922192
  %v119 = vunpack.c.0.s8 %v118
  %v120 = vlaneseq
  %v121 = vshrl.u32 %v120, 7
  %v122 = vsub.s32 %v119, %v121
  %v123 = vrot.slane %v115, %v122
  %v124 = vld [vmem:[%s1] sm:$0x1]
  %v126 = vpack.i.b16 %v124, %v124
  %v128 = vlaneseq
  %v129 = vshrl.u32 %v128, 7
  %v130 = vsub.s32 0, %v129
  %v131 = vrot.slane %v126, %v130
  %v133 = vunpack.c.l.b16 %v131
  %v134 = vpack.c.b16 %v133, %v133
  %v136 = vmul.bf16 %v39, %v134
  %v137 = vmul.bf16 %v51, %v134
  %v138 = vmul.bf16 %v63, %v134
  %v139 = vmul.bf16 %v75, %v134
  %v140 = vmul.bf16 %v87, %v134
  %v141 = vmul.bf16 %v99, %v134
  %v142 = vmul.bf16 %v111, %v134
  %v143 = vmul.bf16 %v123, %v134
  %vm144 = vcmask 27648
  %145 = vst.msk [vmem:[%s2] sm:$0xf] %vm144, %v136
  %146 = vst.msk [vmem:[%s2 + $0x4] sm:$0xf] %vm144, %v137
  %147 = vst.msk [vmem:[%s2 + $0x8] sm:$0xf] %vm144, %v138
  %148 = vst.msk [vmem:[%s2 + $0xc] sm:$0xf] %vm144, %v139
  %149 = vst.msk [vmem:[%s2 + $0x10] sm:$0xf] %vm144, %v140
  %150 = vst.msk [vmem:[%s2 + $0x14] sm:$0xf] %vm144, %v141
  %151 = vst.msk [vmem:[%s2 + $0x18] sm:$0xf] %vm144, %v142
  %152 = vst.msk [vmem:[%s2 + $0x1c] sm:$0xf] %vm144, %v143
  // Predicated region
  $region10: #{unet_forward.21} parent=0 // pred_check
    _
  $region11: #{unet_forward.21} parent=0 // pred_check_branch
    %154 = sbr.rel (0) target = $region13
  $region12: #{unet_forward.21} parent=0 // pred_region
    _
  $region13: #{unet_forward.21} parent=0 // pred_fallthru
    _
  // Predicated region
  $region14: #{unet_forward.21} parent=0 // pred_check
    _
  $region15: #{unet_forward.21} parent=0 // pred_check_branch
    %156 = sbr.rel (0) target = $region17
  $region16: #{unet_forward.21} parent=0 // pred_region
    _
  $region17: #{unet_forward.21} parent=0 // pred_fallthru
    _

// kernel: unet_forward.20
$region0: #{unet_forward.20}
  #allocation0 [shape = 'u32[]', space=smem, size = 0x4, offset = 0x4, fixed_abs, tag = 'smem constant byte address 0x4 - core index']
  #allocation1 [shape = 'u32[144,128]{1,0:T(1,128)}', space=vmem, size = 0x12000, scoped, tag = 'internal scratch']
  %s0 = inlined_call_operand.vmem [shape: bf16[128,128], index: 0, kind: input, shape index: {}]
  %s1 = inlined_call_operand.vmem [shape: bf16[32,128], index: 1, kind: input, shape index: {}]
  %s2 = inlined_call_operand.vmem [shape: f32[32,1], index: 2, kind: input, shape index: {}]
  %s3 = inlined_call_operand.vmem [shape: f32[32,1], index: 3, kind: input, shape index: {}]
  %s4 = inlined_call_operand.vmem [shape: f32[32,1], index: 4, kind: input, shape index: {}]
  %s5 = inlined_call_operand.vmem [shape: bf16[32,128], index: 5, kind: output, shape index: {}]
  %s6 = sld [smem:[#allocation0]]
  $region30: #{unet_forward.20} parent=0
    _
  %s8 = ssub.s32 1, %s6
  %s9 = scalar_select 0, %s8, %s6
  // Predicated region
  $region2: #{unet_forward.20} parent=0 // pred_check
    _
  $region3: #{unet_forward.20} parent=0 // pred_check_branch
    %11 = sbr.rel (0) target = $region5
  $region4: #{unet_forward.20} parent=0 // pred_region
    _
  $region5: #{unet_forward.20} parent=0 // pred_fallthru
    _
  // Predicated region
  $region6: #{unet_forward.20} parent=0 // pred_check
    _
  $region7: #{unet_forward.20} parent=0 // pred_check_branch
    %13 = sbr.rel (0) target = $region9
  $region8: #{unet_forward.20} parent=0 // pred_region
    _
  $region9: #{unet_forward.20} parent=0 // pred_fallthru
    _
  // Predicated region
  $region10: #{unet_forward.20} parent=0 // pred_check
    _
  $region11: #{unet_forward.20} parent=0 // pred_check_branch
    %15 = sbr.rel (0) target = $region13
  $region12: #{unet_forward.20} parent=0 // pred_region
    _
  $region13: #{unet_forward.20} parent=0 // pred_fallthru
    _
  // Predicated region
  $region14: #{unet_forward.20} parent=0 // pred_check
    _
  $region15: #{unet_forward.20} parent=0 // pred_check_branch
    %17 = sbr.rel (0) target = $region17
  $region16: #{unet_forward.20} parent=0 // pred_region
    _
  $region17: #{unet_forward.20} parent=0 // pred_fallthru
    _
  // Predicated region
  $region18: #{unet_forward.20} parent=0 // pred_check
    _
  $region19: #{unet_forward.20} parent=0 // pred_check_branch
    %19 = sbr.rel (0) target = $region21
  $region20: #{unet_forward.20} parent=0 // pred_region
    _
  $region21: #{unet_forward.20} parent=0 // pred_fallthru
    _
  %v21 = vld [vmem:[%s1] sm:$0xf]
  %v22 = vld [vmem:[%s1 + $0x4] sm:$0xf]
  %v23 = vld [vmem:[%s1 + $0x8] sm:$0xf]
  %v24 = vld [vmem:[%s1 + $0xc] sm:$0xf]
  %v25 = vld [vmem:[%s0] sm:$0xf]
  %v26 = vld [vmem:[%s0 + $0x4] sm:$0xf]
  %v27 = vld [vmem:[%s0 + $0x8] sm:$0xf]
  %v28 = vld [vmem:[%s0 + $0xc] sm:$0xf]
  %v29 = vld [vmem:[%s0 + $0x10] sm:$0xf]
  %v30 = vld [vmem:[%s0 + $0x14] sm:$0xf]
  %v31 = vld [vmem:[%s0 + $0x18] sm:$0xf]
  %v32 = vld [vmem:[%s0 + $0x1c] sm:$0xf]
  %v33 = vld [vmem:[%s0 + $0x20] sm:$0xf]
  %v34 = vld [vmem:[%s0 + $0x24] sm:$0xf]
  %v35 = vld [vmem:[%s0 + $0x28] sm:$0xf]
  %v36 = vld [vmem:[%s0 + $0x2c] sm:$0xf]
  %v37 = vld [vmem:[%s0 + $0x30] sm:$0xf]
  %v38 = vld [vmem:[%s0 + $0x34] sm:$0xf]
  %v39 = vld [vmem:[%s0 + $0x38] sm:$0xf]
  %v40 = vld [vmem:[%s0 + $0x3c] sm:$0xf]
  %v41 = vld [vmem:[%s2] sm:$0xff]
  %v42 = vld [vmem:[%s2 + $0x8] sm:$0xff]
  %v43 = vld [vmem:[%s2 + $0x10] sm:$0xff]
  %v44 = vld [vmem:[%s2 + $0x18] sm:$0xff]
  %46 = vset.pattern.permute.xlu0 0
  %47 = vperm.xlu0 %46, %v41
  %v48 = vpop.permute.xlu0 %47
  %51 = vset.pattern.permute.xlu0 0
  %52 = vperm.xlu0 %51, %v42
  %v53 = vpop.permute.xlu0 %52
  %56 = vset.pattern.permute.xlu0 0
  %57 = vperm.xlu0 %56, %v43
  %v58 = vpop.permute.xlu0 %57
  %61 = vset.pattern.permute.xlu0 0
  %62 = vperm.xlu0 %61, %v44
  %v63 = vpop.permute.xlu0 %62
  %v69 = vunpack.c.l.b16 %v21
  %v70 = vunpack.c.l.b16 %v22
  %v71 = vunpack.c.l.b16 %v23
  %v72 = vunpack.c.l.b16 %v24
  %v73 = vpack.c.b16 %v70, %v69
  %v74 = vpack.c.b16 %v72, %v71
  %v93 = vunpack.c.l.b16 %v25
  %v94 = vunpack.c.l.b16 %v26
  %v95 = vunpack.c.l.b16 %v27
  %v96 = vunpack.c.l.b16 %v28
  %v97 = vunpack.c.l.b16 %v29
  %v98 = vunpack.c.l.b16 %v30
  %v99 = vunpack.c.l.b16 %v31
  %v100 = vunpack.c.l.b16 %v32
  %v101 = vunpack.c.l.b16 %v33
  %v102 = vunpack.c.l.b16 %v34
  %v103 = vunpack.c.l.b16 %v35
  %v104 = vunpack.c.l.b16 %v36
  %v105 = vunpack.c.l.b16 %v37
  %v106 = vunpack.c.l.b16 %v38
  %v107 = vunpack.c.l.b16 %v39
  %v108 = vunpack.c.l.b16 %v40
  %v109 = vpack.c.b16 %v94, %v93
  %v110 = vpack.c.b16 %v96, %v95
  %v111 = vpack.c.b16 %v98, %v97
  %v112 = vpack.c.b16 %v100, %v99
  %v113 = vpack.c.b16 %v102, %v101
  %v114 = vpack.c.b16 %v104, %v103
  %v115 = vpack.c.b16 %v106, %v105
  %v116 = vpack.c.b16 %v108, %v107
  %125 = vmatprep.subr.bf16.mxu0 0
  %126 = vmatpush1.bf16.msra.mxu0 %v109
  %127 = vmatprep.subr.bf16.mxu0 0
  %128 = vmatpush1.bf16.msra.mxu0 %v110
  %129 = vmatprep.subr.bf16.mxu0 0
  %130 = vmatpush1.bf16.msra.mxu0 %v111
  %131 = vmatprep.subr.bf16.mxu0 0
  %132 = vmatpush1.bf16.msra.mxu0 %v112
  %133 = vmatprep.subr.bf16.mxu0 0
  %134 = vmatpush1.bf16.msra.mxu0 %v113
  %135 = vmatprep.subr.bf16.mxu0 0
  %136 = vmatpush1.bf16.msra.mxu0 %v114
  %137 = vmatprep.subr.bf16.mxu0 0
  %138 = vmatpush1.bf16.msra.mxu0 %v115
  %139 = vmatprep.subr.bf16.mxu0 0
  %140 = vmatpush1.bf16.msra.mxu0 %v116
  %141 = vmatprep.subr.bf16.mxu0 0
  %142 = vmatpush1.bf16.msra.mxu0 0
  %143 = vmatprep.subr.bf16.mxu0 0
  %144 = vmatpush1.bf16.msra.mxu0 0
  %145 = vmatprep.subr.bf16.mxu0 0
  %146 = vmatpush1.bf16.msra.mxu0 0
  %147 = vmatprep.subr.bf16.mxu0 0
  %148 = vmatpush1.bf16.msra.mxu0 0
  %149 = vmatprep.subr.bf16.mxu0 0
  %150 = vmatpush1.bf16.msra.mxu0 0
  %151 = vmatprep.subr.bf16.mxu0 0
  %152 = vmatpush1.bf16.msra.mxu0 0
  %153 = vmatprep.subr.bf16.mxu0 0
  %154 = vmatpush1.bf16.msra.mxu0 0
  %155 = vmatprep.subr.bf16.mxu0 0
  %156 = vmatpush1.bf16.msra.mxu0 0
  %157 = vmatprep.mubr.bf16.mxu0 0
  %158 = vmatmul.mubr.bf16.gmra.mrb[0].mxu0 %v73
  %v159 = vpop.f32.mrb[0].mxu0
  %v160 = vadd.f32 %v48, %v159
  %v161 = vpop.f32.mrb[0].mxu0
  %v162 = vpop.f32.mrb[0].mxu0
  %v163 = vadd.f32 %v53, %v162
  %v164 = vpop.f32.mrb[0].mxu0
  %165 = vmatprep.mubr.bf16.mxu0 0
  %166 = vmatmul.mubr.bf16.gmra.mrb[0].mxu0 %v74
  %v167 = vpop.f32.mrb[0].mxu0
  %v168 = vadd.f32 %v58, %v167
  %v169 = vpop.f32.mrb[0].mxu0
  %v170 = vpop.f32.mrb[0].mxu0
  %v171 = vadd.f32 %v63, %v170
  %v172 = vpop.f32.mrb[0].mxu0
  %173 = vdwg.mxu0
  %174 = vadd.xlane.f32.xlu0 %v160
  %v175 = vpop.xlane.xlu0 %174
  %176 = vadd.xlane.f32.xlu0 %v163
  %v177 = vpop.xlane.xlu0 %176
  %178 = vadd.xlane.f32.xlu0 %v168
  %v179 = vpop.xlane.xlu0 %178
  %180 = vadd.xlane.f32.xlu0 %v171
  %v181 = vpop.xlane.xlu0 %180
  %v182 = vmul.f32 %v160, %v160
  %v183 = vmul.f32 %v163, %v163
  %v184 = vmul.f32 %v168, %v168
  %v185 = vmul.f32 %v171, %v171
  %186 = vadd.xlane.f32.xlu0 %v182
  %v187 = vpop.xlane.xlu0 %186
  %188 = vadd.xlane.f32.xlu0 %v183
  %v189 = vpop.xlane.xlu0 %188
  %190 = vadd.xlane.f32.xlu0 %v184
  %v191 = vpop.xlane.xlu0 %190
  %192 = vadd.xlane.f32.xlu0 %v185
  %v193 = vpop.xlane.xlu0 %192
  %v194 = vmul.f32 %v41, 126.0
  %v195 = vmul.f32 %v42, 126.0
  %v196 = vmul.f32 %v43, 126.0
  %v197 = vmul.f32 %v44, 126.0
  %v198 = vsub.f32 %v175, %v194
  %v199 = vsub.f32 %v177, %v195
  %v200 = vsub.f32 %v179, %v196
  %v201 = vsub.f32 %v181, %v197
  %v202 = vmul.f32 %v41, %v41
  %v203 = vmul.f32 %v42, %v42
  %v204 = vmul.f32 %v43, %v43
  %v205 = vmul.f32 %v44, %v44
  %v206 = vmul.f32 %v202, 126.0
  %v207 = vmul.f32 %v203, 126.0
  %v208 = vmul.f32 %v204, 126.0
  %v209 = vmul.f32 %v205, 126.0
  %v210 = vsub.f32 %v187, %v206
  %v211 = vsub.f32 %v189, %v207
  %v212 = vsub.f32 %v191, %v208
  %v213 = vsub.f32 %v193, %v209
  %v214 = vmul.f32 %v198, 0.5
  %v215 = vmul.f32 %v199, 0.5
  %v216 = vmul.f32 %v200, 0.5
  %v217 = vmul.f32 %v201, 0.5
  %v218 = vmul.f32 %v210, 0.5
  %v219 = vmul.f32 %v211, 0.5
  %v220 = vmul.f32 %v212, 0.5
  %v221 = vmul.f32 %v213, 0.5
  %v222 = vmul.f32 %v214, %v214
  %v223 = vmul.f32 %v215, %v215
  %v224 = vmul.f32 %v216, %v216
  %v225 = vmul.f32 %v217, %v217
  %v226 = vsub.f32 %v218, %v222
  %v227 = vsub.f32 %v219, %v223
  %v228 = vsub.f32 %v220, %v224
  %v229 = vsub.f32 %v221, %v225
  %v230 = vmax.f32 %v226, 0.0
  %v231 = vmax.f32 %v227, 0.0
  %v232 = vmax.f32 %v228, 0.0
  %v233 = vmax.f32 %v229, 0.0
  %v234 = vld [vmem:[%s3] sm:$0xff]
  %v235 = vld [vmem:[%s3 + $0x8] sm:$0xff]
  %v236 = vld [vmem:[%s3 + $0x10] sm:$0xff]
  %v237 = vld [vmem:[%s3 + $0x18] sm:$0xff]
  %v238 = vadd.f32 %v230, 1e-05
  %v239 = vadd.f32 %v231, 1e-05
  %v240 = vadd.f32 %v232, 1e-05
  %v241 = vadd.f32 %v233, 1e-05
  %v242 = vrsqrt.pop %v238
  %v243 = vrsqrt.pop %v239
  %v244 = vrsqrt.pop %v240
  %v245 = vrsqrt.pop %v241
  %v246 = vmul.f32 %v234, %v242
  %v247 = vmul.f32 %v235, %v243
  %v248 = vmul.f32 %v236, %v244
  %v249 = vmul.f32 %v237, %v245
  %251 = vset.pattern.permute.xlu0 0
  %252 = vperm.xlu0 %251, %v214
  %v253 = vpop.permute.xlu0 %252
  %256 = vset.pattern.permute.xlu0 0
  %257 = vperm.xlu0 %256, %v215
  %v258 = vpop.permute.xlu0 %257
  %261 = vset.pattern.permute.xlu0 0
  %262 = vperm.xlu0 %261, %v216
  %v263 = vpop.permute.xlu0 %262
  %266 = vset.pattern.permute.xlu0 0
  %267 = vperm.xlu0 %266, %v217
  %v268 = vpop.permute.xlu0 %267
  %v270 = vsub.f32 %v160, %v253
  %v271 = vsub.f32 %v163, %v258
  %v272 = vsub.f32 %v168, %v263
  %v273 = vsub.f32 %v171, %v268
  %275 = vset.pattern.permute.xlu0 0
  %276 = vperm.xlu0 %275, %v246
  %v277 = vpop.permute.xlu0 %276
  %280 = vset.pattern.permute.xlu0 0
  %281 = vperm.xlu0 %280, %v247
  %v282 = vpop.permute.xlu0 %281
  %285 = vset.pattern.permute.xlu0 0
  %286 = vperm.xlu0 %285, %v248
  %v287 = vpop.permute.xlu0 %286
  %290 = vset.pattern.permute.xlu0 0
  %291 = vperm.xlu0 %290, %v249
  %v292 = vpop.permute.xlu0 %291
  %v294 = vmul.f32 %v270, %v277
  %v295 = vmul.f32 %v271, %v282
  %v296 = vmul.f32 %v272, %v287
  %v297 = vmul.f32 %v273, %v292
  %v298 = vld [vmem:[%s4] sm:$0xff]
  %v299 = vld [vmem:[%s4 + $0x8] sm:$0xff]
  %v300 = vld [vmem:[%s4 + $0x10] sm:$0xff]
  %v301 = vld [vmem:[%s4 + $0x18] sm:$0xff]
  %303 = vset.pattern.permute.xlu0 0
  %304 = vperm.xlu0 %303, %v298
  %v305 = vpop.permute.xlu0 %304
  %308 = vset.pattern.permute.xlu0 0
  %309 = vperm.xlu0 %308, %v299
  %v310 = vpop.permute.xlu0 %309
  %313 = vset.pattern.permute.xlu0 0
  %314 = vperm.xlu0 %313, %v300
  %v315 = vpop.permute.xlu0 %314
  %318 = vset.pattern.permute.xlu0 0
  %319 = vperm.xlu0 %318, %v301
  %v320 = vpop.permute.xlu0 %319
  %v322 = vadd.f32 %v294, %v305
  %v323 = vadd.f32 %v295, %v310
  %v324 = vadd.f32 %v296, %v315
  %v325 = vadd.f32 %v297, %v320
  %v326 = vpack.c.bf16 %v323, %v322
  %v327 = vpack.c.bf16 %v325, %v324
  %v330 = vunpack.c.l.b16 %v326
  %v331 = vunpack.c.h.b16 %v326
  %v332 = vunpack.c.l.b16 %v327
  %v333 = vunpack.c.h.b16 %v327
  %v334 = vpack.c.b16 %v330, %v330
  %v335 = vpack.c.b16 %v331, %v331
  %v336 = vpack.c.b16 %v332, %v332
  %v337 = vpack.c.b16 %v333, %v333
  %342 = vst [vmem:[%s5] sm:$0xf] %v334
  %343 = vst [vmem:[%s5 + $0x4] sm:$0xf] %v335
  %344 = vst [vmem:[%s5 + $0x8] sm:$0xf] %v336
  %345 = vst [vmem:[%s5 + $0xc] sm:$0xf] %v337
  // Predicated region
  $region22: #{unet_forward.20} parent=0 // pred_check
    _
  $region23: #{unet_forward.20} parent=0 // pred_check_branch
    %347 = sbr.rel (0) target = $region25
  $region24: #{unet_forward.20} parent=0 // pred_region
    _
  $region25: #{unet_forward.20} parent=0 // pred_fallthru
    _
  // Predicated region
  $region26: #{unet_forward.20} parent=0 // pred_check
    _
  $region27: #{unet_forward.20} parent=0 // pred_check_branch
    %349 = sbr.rel (0) target = $region29
  $region28: #{unet_forward.20} parent=0 // pred_region
    _
  $region29: #{unet_forward.20} parent=0 // pred_fallthru
    _

// kernel: unet_forward.22
$region0: #{unet_forward.22}
  #allocation0 [shape = 'u32[]', space=smem, size = 0x4, offset = 0x4, fixed_abs, tag = 'smem constant byte address 0x4 - core index']
  #allocation1 [shape = 'u32[144,128]{1,0:T(1,128)}', space=vmem, size = 0x12000, scoped, tag = 'internal scratch']
  %s0 = inlined_call_operand.vmem [shape: bf16[32,128], index: 0, kind: input, shape index: {}]
  %s1 = inlined_call_operand.vmem [shape: bf16[32,32], index: 1, kind: input, shape index: {}]
  %s2 = inlined_call_operand.vmem [shape: f32[32,1], index: 2, kind: input, shape index: {}]
  %s3 = inlined_call_operand.vmem [shape: f32[32,1], index: 3, kind: input, shape index: {}]
  %s4 = inlined_call_operand.vmem [shape: f32[32,1], index: 4, kind: input, shape index: {}]
  %s5 = inlined_call_operand.vmem [shape: bf16[32,128], index: 5, kind: output, shape index: {}]
  %s6 = sld [smem:[#allocation0]]
  $region30: #{unet_forward.22} parent=0
    _
  %s8 = ssub.s32 1, %s6
  %s9 = scalar_select 0, %s8, %s6
  // Predicated region
  $region2: #{unet_forward.22} parent=0 // pred_check
    _
  $region3: #{unet_forward.22} parent=0 // pred_check_branch
    %11 = sbr.rel (0) target = $region5
  $region4: #{unet_forward.22} parent=0 // pred_region
    _
  $region5: #{unet_forward.22} parent=0 // pred_fallthru
    _
  // Predicated region
  $region6: #{unet_forward.22} parent=0 // pred_check
    _
  $region7: #{unet_forward.22} parent=0 // pred_check_branch
    %13 = sbr.rel (0) target = $region9
  $region8: #{unet_forward.22} parent=0 // pred_region
    _
  $region9: #{unet_forward.22} parent=0 // pred_fallthru
    _
  // Predicated region
  $region10: #{unet_forward.22} parent=0 // pred_check
    _
  $region11: #{unet_forward.22} parent=0 // pred_check_branch
    %15 = sbr.rel (0) target = $region13
  $region12: #{unet_forward.22} parent=0 // pred_region
    _
  $region13: #{unet_forward.22} parent=0 // pred_fallthru
    _
  // Predicated region
  $region14: #{unet_forward.22} parent=0 // pred_check
    _
  $region15: #{unet_forward.22} parent=0 // pred_check_branch
    %17 = sbr.rel (0) target = $region17
  $region16: #{unet_forward.22} parent=0 // pred_region
    _
  $region17: #{unet_forward.22} parent=0 // pred_fallthru
    _
  // Predicated region
  $region18: #{unet_forward.22} parent=0 // pred_check
    _
  $region19: #{unet_forward.22} parent=0 // pred_check_branch
    %19 = sbr.rel (0) target = $region21
  $region20: #{unet_forward.22} parent=0 // pred_region
    _
  $region21: #{unet_forward.22} parent=0 // pred_fallthru
    _
  %v21 = vld [vmem:[%s1] sm:$0xf]
  %v22 = vld [vmem:[%s1 + $0x4] sm:$0xf]
  %v23 = vld [vmem:[%s1 + $0x8] sm:$0xf]
  %v24 = vld [vmem:[%s1 + $0xc] sm:$0xf]
  %v25 = vld [vmem:[%s0] sm:$0xf]
  %v26 = vld [vmem:[%s0 + $0x4] sm:$0xf]
  %v27 = vld [vmem:[%s0 + $0x8] sm:$0xf]
  %v28 = vld [vmem:[%s0 + $0xc] sm:$0xf]
  %v29 = vld [vmem:[%s2] sm:$0xff]
  %v30 = vld [vmem:[%s2 + $0x8] sm:$0xff]
  %v31 = vld [vmem:[%s2 + $0x10] sm:$0xff]
  %v32 = vld [vmem:[%s2 + $0x18] sm:$0xff]
  %34 = vset.pattern.permute.xlu0 0
  %35 = vperm.xlu0 %34, %v29
  %v36 = vpop.permute.xlu0 %35
  %39 = vset.pattern.permute.xlu0 0
  %40 = vperm.xlu0 %39, %v30
  %v41 = vpop.permute.xlu0 %40
  %44 = vset.pattern.permute.xlu0 0
  %45 = vperm.xlu0 %44, %v31
  %v46 = vpop.permute.xlu0 %45
  %49 = vset.pattern.permute.xlu0 0
  %50 = vperm.xlu0 %49, %v32
  %v51 = vpop.permute.xlu0 %50
  %v57 = vunpack.c.l.b16 %v21
  %v58 = vunpack.c.l.b16 %v22
  %v59 = vunpack.c.l.b16 %v23
  %v60 = vunpack.c.l.b16 %v24
  %v61 = vpack.c.b16 %v58, %v57
  %v62 = vpack.c.b16 %v60, %v59
  %v67 = vunpack.c.l.b16 %v25
  %v68 = vunpack.c.l.b16 %v26
  %v69 = vunpack.c.l.b16 %v27
  %v70 = vunpack.c.l.b16 %v28
  %v71 = vpack.c.b16 %v68, %v67
  %v72 = vpack.c.b16 %v70, %v69
  %vm75 = vcmask 261120
  %v77 = vsel %vm75, %v61, 0
  %v80 = vsel %vm75, %v62, 0
  %82 = vmatprep.subr.bf16.mxu0 0
  %83 = vmatpush1.bf16.msra.mxu0 %v71
  %84 = vmatprep.subr.bf16.mxu0 0
  %85 = vmatpush1.bf16.msra.mxu0 %v72
  %86 = vmatprep.subr.bf16.mxu0 0
  %87 = vmatpush1.bf16.msra.mxu0 0
  %88 = vmatprep.subr.bf16.mxu0 0
  %89 = vmatpush1.bf16.msra.mxu0 0
  %90 = vmatprep.subr.bf16.mxu0 0
  %91 = vmatpush1.bf16.msra.mxu0 0
  %92 = vmatprep.subr.bf16.mxu0 0
  %93 = vmatpush1.bf16.msra.mxu0 0
  %94 = vmatprep.subr.bf16.mxu0 0
  %95 = vmatpush1.bf16.msra.mxu0 0
  %96 = vmatprep.subr.bf16.mxu0 0
  %97 = vmatpush1.bf16.msra.mxu0 0
  %98 = vmatprep.subr.bf16.mxu0 0
  %99 = vmatpush1.bf16.msra.mxu0 0
  %100 = vmatprep.subr.bf16.mxu0 0
  %101 = vmatpush1.bf16.msra.mxu0 0
  %102 = vmatprep.subr.bf16.mxu0 0
  %103 = vmatpush1.bf16.msra.mxu0 0
  %104 = vmatprep.subr.bf16.mxu0 0
  %105 = vmatpush1.bf16.msra.mxu0 0
  %106 = vmatprep.subr.bf16.mxu0 0
  %107 = vmatpush1.bf16.msra.mxu0 0
  %108 = vmatprep.subr.bf16.mxu0 0
  %109 = vmatpush1.bf16.msra.mxu0 0
  %110 = vmatprep.subr.bf16.mxu0 0
  %111 = vmatpush1.bf16.msra.mxu0 0
  %112 = vmatprep.subr.bf16.mxu0 0
  %113 = vmatpush1.bf16.msra.mxu0 0
  %114 = vmatprep.mubr.bf16.mxu0 0
  %115 = vmatmul.mubr.bf16.gmra.mrb[0].mxu0 %v77
  %v116 = vpop.f32.mrb[0].mxu0
  %v117 = vadd.f32 %v36, %v116
  %v118 = vpop.f32.mrb[0].mxu0
  %v119 = vpop.f32.mrb[0].mxu0
  %v120 = vadd.f32 %v41, %v119
  %v121 = vpop.f32.mrb[0].mxu0
  %122 = vmatprep.mubr.bf16.mxu0 0
  %123 = vmatmul.mubr.bf16.gmra.mrb[0].mxu0 %v80
  %v124 = vpop.f32.mrb[0].mxu0
  %v125 = vadd.f32 %v46, %v124
  %v126 = vpop.f32.mrb[0].mxu0
  %v127 = vpop.f32.mrb[0].mxu0
  %v128 = vadd.f32 %v51, %v127
  %v129 = vpop.f32.mrb[0].mxu0
  %130 = vdwg.mxu0
  %131 = vadd.xlane.f32.xlu0 %v117
  %v132 = vpop.xlane.xlu0 %131
  %133 = vadd.xlane.f32.xlu0 %v120
  %v134 = vpop.xlane.xlu0 %133
  %135 = vadd.xlane.f32.xlu0 %v125
  %v136 = vpop.xlane.xlu0 %135
  %137 = vadd.xlane.f32.xlu0 %v128
  %v138 = vpop.xlane.xlu0 %137
  %v139 = vmul.f32 %v117, %v117
  %v140 = vmul.f32 %v120, %v120
  %v141 = vmul.f32 %v125, %v125
  %v142 = vmul.f32 %v128, %v128
  %143 = vadd.xlane.f32.xlu0 %v139
  %v144 = vpop.xlane.xlu0 %143
  %145 = vadd.xlane.f32.xlu0 %v140
  %v146 = vpop.xlane.xlu0 %145
  %147 = vadd.xlane.f32.xlu0 %v141
  %v148 = vpop.xlane.xlu0 %147
  %149 = vadd.xlane.f32.xlu0 %v142
  %v150 = vpop.xlane.xlu0 %149
  %v151 = vmul.f32 %v29, 120.0
  %v152 = vmul.f32 %v30, 120.0
  %v153 = vmul.f32 %v31, 120.0
  %v154 = vmul.f32 %v32, 120.0
  %v155 = vsub.f32 %v132, %v151
  %v156 = vsub.f32 %v134, %v152
  %v157 = vsub.f32 %v136, %v153
  %v158 = vsub.f32 %v138, %v154
  %v159 = vmul.f32 %v29, %v29
  %v160 = vmul.f32 %v30, %v30
  %v161 = vmul.f32 %v31, %v31
  %v162 = vmul.f32 %v32, %v32
  %v163 = vmul.f32 %v159, 120.0
  %v164 = vmul.f32 %v160, 120.0
  %v165 = vmul.f32 %v161, 120.0
  %v166 = vmul.f32 %v162, 120.0
  %v167 = vsub.f32 %v144, %v163
  %v168 = vsub.f32 %v146, %v164
  %v169 = vsub.f32 %v148, %v165
  %v170 = vsub.f32 %v150, %v166
  %v171 = vmul.f32 %v155, 0.125
  %v172 = vmul.f32 %v156, 0.125
  %v173 = vmul.f32 %v157, 0.125
  %v174 = vmul.f32 %v158, 0.125
  %v175 = vmul.f32 %v167, 0.125
  %v176 = vmul.f32 %v168, 0.125
  %v177 = vmul.f32 %v169, 0.125
  %v178 = vmul.f32 %v170, 0.125
  %v179 = vmul.f32 %v171, %v171
  %v180 = vmul.f32 %v172, %v172
  %v181 = vmul.f32 %v173, %v173
  %v182 = vmul.f32 %v174, %v174
  %v183 = vsub.f32 %v175, %v179
  %v184 = vsub.f32 %v176, %v180
  %v185 = vsub.f32 %v177, %v181
  %v186 = vsub.f32 %v178, %v182
  %v187 = vmax.f32 %v183, 0.0
  %v188 = vmax.f32 %v184, 0.0
  %v189 = vmax.f32 %v185, 0.0
  %v190 = vmax.f32 %v186, 0.0
  %v191 = vld [vmem:[%s3] sm:$0xff]
  %v192 = vld [vmem:[%s3 + $0x8] sm:$0xff]
  %v193 = vld [vmem:[%s3 + $0x10] sm:$0xff]
  %v194 = vld [vmem:[%s3 + $0x18] sm:$0xff]
  %v195 = vadd.f32 %v187, 1e-05
  %v196 = vadd.f32 %v188, 1e-05
  %v197 = vadd.f32 %v189, 1e-05
  %v198 = vadd.f32 %v190, 1e-05
  %v199 = vrsqrt.pop %v195
  %v200 = vrsqrt.pop %v196
  %v201 = vrsqrt.pop %v197
  %v202 = vrsqrt.pop %v198
  %v203 = vmul.f32 %v191, %v199
  %v204 = vmul.f32 %v192, %v200
  %v205 = vmul.f32 %v193, %v201
  %v206 = vmul.f32 %v194, %v202
  %208 = vset.pattern.permute.xlu0 0
  %209 = vperm.xlu0 %208, %v171
  %v210 = vpop.permute.xlu0 %209
  %213 = vset.pattern.permute.xlu0 0
  %214 = vperm.xlu0 %213, %v172
  %v215 = vpop.permute.xlu0 %214
  %218 = vset.pattern.permute.xlu0 0
  %219 = vperm.xlu0 %218, %v173
  %v220 = vpop.permute.xlu0 %219
  %223 = vset.pattern.permute.xlu0 0
  %224 = vperm.xlu0 %223, %v174
  %v225 = vpop.permute.xlu0 %224
  %v227 = vsub.f32 %v117, %v210
  %v228 = vsub.f32 %v120, %v215
  %v229 = vsub.f32 %v125, %v220
  %v230 = vsub.f32 %v128, %v225
  %232 = vset.pattern.permute.xlu0 0
  %233 = vperm.xlu0 %232, %v203
  %v234 = vpop.permute.xlu0 %233
  %237 = vset.pattern.permute.xlu0 0
  %238 = vperm.xlu0 %237, %v204
  %v239 = vpop.permute.xlu0 %238
  %242 = vset.pattern.permute.xlu0 0
  %243 = vperm.xlu0 %242, %v205
  %v244 = vpop.permute.xlu0 %243
  %247 = vset.pattern.permute.xlu0 0
  %248 = vperm.xlu0 %247, %v206
  %v249 = vpop.permute.xlu0 %248
  %v251 = vmul.f32 %v227, %v234
  %v252 = vmul.f32 %v228, %v239
  %v253 = vmul.f32 %v229, %v244
  %v254 = vmul.f32 %v230, %v249
  %v255 = vld [vmem:[%s4] sm:$0xff]
  %v256 = vld [vmem:[%s4 + $0x8] sm:$0xff]
  %v257 = vld [vmem:[%s4 + $0x10] sm:$0xff]
  %v258 = vld [vmem:[%s4 + $0x18] sm:$0xff]
  %260 = vset.pattern.permute.xlu0 0
  %261 = vperm.xlu0 %260, %v255
  %v262 = vpop.permute.xlu0 %261
  %265 = vset.pattern.permute.xlu0 0
  %266 = vperm.xlu0 %265, %v256
  %v267 = vpop.permute.xlu0 %266
  %270 = vset.pattern.permute.xlu0 0
  %271 = vperm.xlu0 %270, %v257
  %v272 = vpop.permute.xlu0 %271
  %275 = vset.pattern.permute.xlu0 0
  %276 = vperm.xlu0 %275, %v258
  %v277 = vpop.permute.xlu0 %276
  %v279 = vadd.f32 %v251, %v262
  %v280 = vadd.f32 %v252, %v267
  %v281 = vadd.f32 %v253, %v272
  %v282 = vadd.f32 %v254, %v277
  %v283 = vpack.c.bf16 %v280, %v279
  %v284 = vpack.c.bf16 %v282, %v281
  %v287 = vunpack.c.l.b16 %v283
  %v288 = vunpack.c.h.b16 %v283
  %v289 = vunpack.c.l.b16 %v284
  %v290 = vunpack.c.h.b16 %v284
  %v291 = vpack.c.b16 %v287, %v287
  %v292 = vpack.c.b16 %v288, %v288
  %v293 = vpack.c.b16 %v289, %v289
  %v294 = vpack.c.b16 %v290, %v290
  %299 = vst [vmem:[%s5] sm:$0xf] %v291
  %300 = vst [vmem:[%s5 + $0x4] sm:$0xf] %v292
  %301 = vst [vmem:[%s5 + $0x8] sm:$0xf] %v293
  %302 = vst [vmem:[%s5 + $0xc] sm:$0xf] %v294
  // Predicated region
  $region22: #{unet_forward.22} parent=0 // pred_check
    _
  $region23: #{unet_forward.22} parent=0 // pred_check_branch
    %304 = sbr.rel (0) target = $region25
  $region24: #{unet_forward.22} parent=0 // pred_region
    _
  $region25: #{unet_forward.22} parent=0 // pred_fallthru
    _
  // Predicated region
  $region26: #{unet_forward.22} parent=0 // pred_check
    _
  $region27: #{unet_forward.22} parent=0 // pred_check_branch
    %306 = sbr.rel (0) target = $region29
  $region28: #{unet_forward.22} parent=0 // pred_region
    _
  $region29: #{unet_forward.22} parent=0 // pred_fallthru
    _

// kernel: unet_forward.23
$region0: #{unet_forward.23}
  #allocation0 [shape = 'u32[]', space=smem, size = 0x4, offset = 0x4, fixed_abs, tag = 'smem constant byte address 0x4 - core index']
  #allocation1 [shape = 'u32[144,128]{1,0:T(1,128)}', space=vmem, size = 0x12000, scoped, tag = 'internal scratch']
  %s0 = inlined_call_operand.vmem [shape: bf16[128,4], index: 0, kind: input, shape index: {}]
  %s1 = inlined_call_operand.vmem [shape: bf16[4,16], index: 1, kind: input, shape index: {}]
  %s2 = inlined_call_operand.vmem [shape: bf16[128,16], index: 2, kind: output, shape index: {}]
  %s3 = sld [smem:[#allocation0]]
  $region18: #{unet_forward.23} parent=0
    _
  %s5 = ssub.s32 1, %s3
  %s6 = scalar_select 0, %s5, %s3
  // Predicated region
  $region2: #{unet_forward.23} parent=0 // pred_check
    _
  $region3: #{unet_forward.23} parent=0 // pred_check_branch
    %8 = sbr.rel (0) target = $region5
  $region4: #{unet_forward.23} parent=0 // pred_region
    _
  $region5: #{unet_forward.23} parent=0 // pred_fallthru
    _
  // Predicated region
  $region6: #{unet_forward.23} parent=0 // pred_check
    _
  $region7: #{unet_forward.23} parent=0 // pred_check_branch
    %10 = sbr.rel (0) target = $region9
  $region8: #{unet_forward.23} parent=0 // pred_region
    _
  $region9: #{unet_forward.23} parent=0 // pred_fallthru
    _
  %v12 = vld [vmem:[%s0] sm:$0xf]
  %v13 = vld [vmem:[%s0 + $0x4] sm:$0xf]
  %v14 = vld [vmem:[%s0 + $0x8] sm:$0xf]
  %v15 = vld [vmem:[%s0 + $0xc] sm:$0xf]
  %v16 = vld [vmem:[%s0 + $0x10] sm:$0xf]
  %v17 = vld [vmem:[%s0 + $0x14] sm:$0xf]
  %v18 = vld [vmem:[%s0 + $0x18] sm:$0xf]
  %v19 = vld [vmem:[%s0 + $0x1c] sm:$0xf]
  %v20 = vld [vmem:[%s0 + $0x20] sm:$0xf]
  %v21 = vld [vmem:[%s0 + $0x24] sm:$0xf]
  %v22 = vld [vmem:[%s0 + $0x28] sm:$0xf]
  %v23 = vld [vmem:[%s0 + $0x2c] sm:$0xf]
  %v24 = vld [vmem:[%s0 + $0x30] sm:$0xf]
  %v25 = vld [vmem:[%s0 + $0x34] sm:$0xf]
  %v26 = vld [vmem:[%s0 + $0x38] sm:$0xf]
  %v27 = vld [vmem:[%s0 + $0x3c] sm:$0xf]
  %v28 = vmax.bf16 %v12, 0
  %v29 = vmax.bf16 %v13, 0
  %v30 = vmax.bf16 %v14, 0
  %v31 = vmax.bf16 %v15, 0
  %v32 = vmax.bf16 %v16, 0
  %v33 = vmax.bf16 %v17, 0
  %v34 = vmax.bf16 %v18, 0
  %v35 = vmax.bf16 %v19, 0
  %v36 = vmax.bf16 %v20, 0
  %v37 = vmax.bf16 %v21, 0
  %v38 = vmax.bf16 %v22, 0
  %v39 = vmax.bf16 %v23, 0
  %v40 = vmax.bf16 %v24, 0
  %v41 = vmax.bf16 %v25, 0
  %v42 = vmax.bf16 %v26, 0
  %v43 = vmax.bf16 %v27, 0
  %v44 = vld [vmem:[%s1] sm:$0x3]
  %v61 = vunpack.c.l.b16 %v28
  %v62 = vunpack.c.l.b16 %v29
  %v63 = vunpack.c.l.b16 %v30
  %v64 = vunpack.c.l.b16 %v31
  %v65 = vunpack.c.l.b16 %v32
  %v66 = vunpack.c.l.b16 %v33
  %v67 = vunpack.c.l.b16 %v34
  %v68 = vunpack.c.l.b16 %v35
  %v69 = vunpack.c.l.b16 %v36
  %v70 = vunpack.c.l.b16 %v37
  %v71 = vunpack.c.l.b16 %v38
  %v72 = vunpack.c.l.b16 %v39
  %v73 = vunpack.c.l.b16 %v40
  %v74 = vunpack.c.l.b16 %v41
  %v75 = vunpack.c.l.b16 %v42
  %v76 = vunpack.c.l.b16 %v43
  %v77 = vpack.c.b16 %v62, %v61
  %v78 = vpack.c.b16 %v64, %v63
  %v79 = vpack.c.b16 %v66, %v65
  %v80 = vpack.c.b16 %v68, %v67
  %v81 = vpack.c.b16 %v70, %v69
  %v82 = vpack.c.b16 %v72, %v71
  %v83 = vpack.c.b16 %v74, %v73
  %v84 = vpack.c.b16 %v76, %v75
  %vm85 = vcmask 31744
  %v87 = vsel %vm85, %v77, 0
  %v90 = vsel %vm85, %v78, 0
  %v93 = vsel %vm85, %v79, 0
  %v96 = vsel %vm85, %v80, 0
  %v99 = vsel %vm85, %v81, 0
  %v102 = vsel %vm85, %v82, 0
  %v105 = vsel %vm85, %v83, 0
  %v108 = vsel %vm85, %v84, 0
  %vm110 = vcmask 1041408
  %v112 = vsel %vm110, %v44, 0
  %114 = vmatprep.subr.bf16.mxu0 0
  %115 = vmatpush1.bf16.msra.mxu0 %v112
  %116 = vmatprep.subr.bf16.mxu0 0
  %117 = vmatpush1.bf16.msra.mxu0 0
  %118 = vmatprep.subr.bf16.mxu0 0
  %119 = vmatpush1.bf16.msra.mxu0 0
  %120 = vmatprep.subr.bf16.mxu0 0
  %121 = vmatpush1.bf16.msra.mxu0 0
  %122 = vmatprep.subr.bf16.mxu0 0
  %123 = vmatpush1.bf16.msra.mxu0 0
  %124 = vmatprep.subr.bf16.mxu0 0
  %125 = vmatpush1.bf16.msra.mxu0 0
  %126 = vmatprep.subr.bf16.mxu0 0
  %127 = vmatpush1.bf16.msra.mxu0 0
  %128 = vmatprep.subr.bf16.mxu0 0
  %129 = vmatpush1.bf16.msra.mxu0 0
  %130 = vmatprep.subr.bf16.mxu0 0
  %131 = vmatpush1.bf16.msra.mxu0 0
  %132 = vmatprep.subr.bf16.mxu0 0
  %133 = vmatpush1.bf16.msra.mxu0 0
  %134 = vmatprep.subr.bf16.mxu0 0
  %135 = vmatpush1.bf16.msra.mxu0 0
  %136 = vmatprep.subr.bf16.mxu0 0
  %137 = vmatpush1.bf16.msra.mxu0 0
  %138 = vmatprep.subr.bf16.mxu0 0
  %139 = vmatpush1.bf16.msra.mxu0 0
  %140 = vmatprep.subr.bf16.mxu0 0
  %141 = vmatpush1.bf16.msra.mxu0 0
  %142 = vmatprep.subr.bf16.mxu0 0
  %143 = vmatpush1.bf16.msra.mxu0 0
  %144 = vmatprep.subr.bf16.mxu0 0
  %145 = vmatpush1.bf16.msra.mxu0 0
  %146 = vmatprep.mubr.bf16.mxu0 0
  %147 = vmatmul.mubr.bf16.gmra.mrb[0].mxu0 %v87
  %v148 = vpop.f32.mrb[0].mxu0
  %v149 = vadd.f32 0.0, %v148
  %v150 = vpop.f32.mrb[0].mxu0
  %v151 = vpop.f32.mrb[0].mxu0
  %v152 = vadd.f32 0.0, %v151
  %v153 = vpop.f32.mrb[0].mxu0
  %154 = vmatprep.mubr.bf16.mxu0 0
  %155 = vmatmul.mubr.bf16.gmra.mrb[0].mxu0 %v90
  %v156 = vpop.f32.mrb[0].mxu0
  %v157 = vadd.f32 0.0, %v156
  %v158 = vpop.f32.mrb[0].mxu0
  %v159 = vpop.f32.mrb[0].mxu0
  %v160 = vadd.f32 0.0, %v159
  %v161 = vpop.f32.mrb[0].mxu0
  %162 = vmatprep.mubr.bf16.mxu0 0
  %163 = vmatmul.mubr.bf16.gmra.mrb[0].mxu0 %v93
  %v164 = vpop.f32.mrb[0].mxu0
  %v165 = vadd.f32 0.0, %v164
  %v166 = vpop.f32.mrb[0].mxu0
  %v167 = vpop.f32.mrb[0].mxu0
  %v168 = vadd.f32 0.0, %v167
  %v169 = vpop.f32.mrb[0].mxu0
  %170 = vmatprep.mubr.bf16.mxu0 0
  %171 = vmatmul.mubr.bf16.gmra.mrb[0].mxu0 %v96
  %v172 = vpop.f32.mrb[0].mxu0
  %v173 = vadd.f32 0.0, %v172
  %v174 = vpop.f32.mrb[0].mxu0
  %v175 = vpop.f32.mrb[0].mxu0
  %v176 = vadd.f32 0.0, %v175
  %v177 = vpop.f32.mrb[0].mxu0
  %178 = vmatprep.mubr.bf16.mxu0 0
  %179 = vmatmul.mubr.bf16.gmra.mrb[0].mxu0 %v99
  %v180 = vpop.f32.mrb[0].mxu0
  %v181 = vadd.f32 0.0, %v180
  %v182 = vpop.f32.mrb[0].mxu0
  %v183 = vpop.f32.mrb[0].mxu0
  %v184 = vadd.f32 0.0, %v183
  %v185 = vpop.f32.mrb[0].mxu0
  %186 = vmatprep.mubr.bf16.mxu0 0
  %187 = vmatmul.mubr.bf16.gmra.mrb[0].mxu0 %v102
  %v188 = vpop.f32.mrb[0].mxu0
  %v189 = vadd.f32 0.0, %v188
  %v190 = vpop.f32.mrb[0].mxu0
  %v191 = vpop.f32.mrb[0].mxu0
  %v192 = vadd.f32 0.0, %v191
  %v193 = vpop.f32.mrb[0].mxu0
  %194 = vmatprep.mubr.bf16.mxu0 0
  %195 = vmatmul.mubr.bf16.gmra.mrb[0].mxu0 %v105
  %v196 = vpop.f32.mrb[0].mxu0
  %v197 = vadd.f32 0.0, %v196
  %v198 = vpop.f32.mrb[0].mxu0
  %v199 = vpop.f32.mrb[0].mxu0
  %v200 = vadd.f32 0.0, %v199
  %v201 = vpop.f32.mrb[0].mxu0
  %202 = vmatprep.mubr.bf16.mxu0 0
  %203 = vmatmul.mubr.bf16.gmra.mrb[0].mxu0 %v108
  %v204 = vpop.f32.mrb[0].mxu0
  %v205 = vadd.f32 0.0, %v204
  %v206 = vpop.f32.mrb[0].mxu0
  %v207 = vpop.f32.mrb[0].mxu0
  %v208 = vadd.f32 0.0, %v207
  %v209 = vpop.f32.mrb[0].mxu0
  %210 = vdwg.mxu0
  %v211 = vpack.c.bf16 %v152, %v149
  %v212 = vpack.c.bf16 %v160, %v157
  %v213 = vpack.c.bf16 %v168, %v165
  %v214 = vpack.c.bf16 %v176, %v173
  %v215 = vpack.c.bf16 %v184, %v181
  %v216 = vpack.c.bf16 %v192, %v189
  %v217 = vpack.c.bf16 %v200, %v197
  %v218 = vpack.c.bf16 %v208, %v205
  %v227 = vunpack.c.l.b16 %v211
  %v228 = vunpack.c.h.b16 %v211
  %v229 = vunpack.c.l.b16 %v212
  %v230 = vunpack.c.h.b16 %v212
  %v231 = vunpack.c.l.b16 %v213
  %v232 = vunpack.c.h.b16 %v213
  %v233 = vunpack.c.l.b16 %v214
  %v234 = vunpack.c.h.b16 %v214
  %v235 = vunpack.c.l.b16 %v215
  %v236 = vunpack.c.h.b16 %v215
  %v237 = vunpack.c.l.b16 %v216
  %v238 = vunpack.c.h.b16 %v216
  %v239 = vunpack.c.l.b16 %v217
  %v240 = vunpack.c.h.b16 %v217
  %v241 = vunpack.c.l.b16 %v218
  %v242 = vunpack.c.h.b16 %v218
  %v243 = vpack.c.b16 %v227, %v227
  %v244 = vpack.c.b16 %v228, %v228
  %v245 = vpack.c.b16 %v229, %v229
  %v246 = vpack.c.b16 %v230, %v230
  %v247 = vpack.c.b16 %v231, %v231
  %v248 = vpack.c.b16 %v232, %v232
  %v249 = vpack.c.b16 %v233, %v233
  %v250 = vpack.c.b16 %v234, %v234
  %v251 = vpack.c.b16 %v235, %v235
  %v252 = vpack.c.b16 %v236, %v236
  %v253 = vpack.c.b16 %v237, %v237
  %v254 = vpack.c.b16 %v238, %v238
  %v255 = vpack.c.b16 %v239, %v239
  %v256 = vpack.c.b16 %v240, %v240
  %v257 = vpack.c.b16 %v241, %v241
  %v258 = vpack.c.b16 %v242, %v242
  %vm275 = vcmask 125952
  %276 = vst.msk [vmem:[%s2] sm:$0xf] %vm275, %v243
  %277 = vst.msk [vmem:[%s2 + $0x4] sm:$0xf] %vm275, %v244
  %278 = vst.msk [vmem:[%s2 + $0x8] sm:$0xf] %vm275, %v245
  %279 = vst.msk [vmem:[%s2 + $0xc] sm:$0xf] %vm275, %v246
  %280 = vst.msk [vmem:[%s2 + $0x10] sm:$0xf] %vm275, %v247
  %281 = vst.msk [vmem:[%s2 + $0x14] sm:$0xf] %vm275, %v248
  %282 = vst.msk [vmem:[%s2 + $0x18] sm:$0xf] %vm275, %v249
  %283 = vst.msk [vmem:[%s2 + $0x1c] sm:$0xf] %vm275, %v250
  %284 = vst.msk [vmem:[%s2 + $0x20] sm:$0xf] %vm275, %v251
  %285 = vst.msk [vmem:[%s2 + $0x24] sm:$0xf] %vm275, %v252
  %286 = vst.msk [vmem:[%s2 + $0x28] sm:$0xf] %vm275, %v253
  %287 = vst.msk [vmem:[%s2 + $0x2c] sm:$0xf] %vm275, %v254
  %288 = vst.msk [vmem:[%s2 + $0x30] sm:$0xf] %vm275, %v255
  %289 = vst.msk [vmem:[%s2 + $0x34] sm:$0xf] %vm275, %v256
  %290 = vst.msk [vmem:[%s2 + $0x38] sm:$0xf] %vm275, %v257
  %291 = vst.msk [vmem:[%s2 + $0x3c] sm:$0xf] %vm275, %v258
  // Predicated region
  $region10: #{unet_forward.23} parent=0 // pred_check
    _
  $region11: #{unet_forward.23} parent=0 // pred_check_branch
    %293 = sbr.rel (0) target = $region13
  $region12: #{unet_forward.23} parent=0 // pred_region
    _
  $region13: #{unet_forward.23} parent=0 // pred_fallthru
    _
  // Predicated region
  $region14: #{unet_forward.23} parent=0 // pred_check
    _
  $region15: #{unet_forward.23} parent=0 // pred_check_branch
    %295 = sbr.rel (0) target = $region17
  $region16: #{unet_forward.23} parent=0 // pred_region
    _
  $region17: #{unet_forward.23} parent=0 // pred_fallthru
    _

// kernel: unet_forward.24
$region0: #{unet_forward.24}
  #allocation0 [shape = 'u32[]', space=smem, size = 0x4, offset = 0x4, fixed_abs, tag = 'smem constant byte address 0x4 - core index']
  #allocation1 [shape = 'u32[144,128]{1,0:T(1,128)}', space=vmem, size = 0x12000, scoped, tag = 'internal scratch']
  %s0 = inlined_call_operand.vmem [shape: bf16[576,128], index: 0, kind: input, shape index: {}]
  %s1 = inlined_call_operand.vmem [shape: bf16[16,576], index: 1, kind: input, shape index: {}]
  %s2 = inlined_call_operand.vmem [shape: f32[16,1], index: 2, kind: input, shape index: {}]
  %s3 = inlined_call_operand.vmem [shape: f32[16,1], index: 3, kind: input, shape index: {}]
  %s4 = inlined_call_operand.vmem [shape: f32[16,1], index: 4, kind: input, shape index: {}]
  %s5 = inlined_call_operand.vmem [shape: bf16[16,128], index: 5, kind: output, shape index: {}]
  %s6 = sld [smem:[#allocation0]]
  $region30: #{unet_forward.24} parent=0
    _
  %s8 = ssub.s32 1, %s6
  %s9 = scalar_select 0, %s8, %s6
  // Predicated region
  $region2: #{unet_forward.24} parent=0 // pred_check
    _
  $region3: #{unet_forward.24} parent=0 // pred_check_branch
    %11 = sbr.rel (0) target = $region5
  $region4: #{unet_forward.24} parent=0 // pred_region
    _
  $region5: #{unet_forward.24} parent=0 // pred_fallthru
    _
  // Predicated region
  $region6: #{unet_forward.24} parent=0 // pred_check
    _
  $region7: #{unet_forward.24} parent=0 // pred_check_branch
    %13 = sbr.rel (0) target = $region9
  $region8: #{unet_forward.24} parent=0 // pred_region
    _
  $region9: #{unet_forward.24} parent=0 // pred_fallthru
    _
  // Predicated region
  $region10: #{unet_forward.24} parent=0 // pred_check
    _
  $region11: #{unet_forward.24} parent=0 // pred_check_branch
    %15 = sbr.rel (0) target = $region13
  $region12: #{unet_forward.24} parent=0 // pred_region
    _
  $region13: #{unet_forward.24} parent=0 // pred_fallthru
    _
  // Predicated region
  $region14: #{unet_forward.24} parent=0 // pred_check
    _
  $region15: #{unet_forward.24} parent=0 // pred_check_branch
    %17 = sbr.rel (0) target = $region17
  $region16: #{unet_forward.24} parent=0 // pred_region
    _
  $region17: #{unet_forward.24} parent=0 // pred_fallthru
    _
  // Predicated region
  $region18: #{unet_forward.24} parent=0 // pred_check
    _
  $region19: #{unet_forward.24} parent=0 // pred_check_branch
    %19 = sbr.rel (0) target = $region21
  $region20: #{unet_forward.24} parent=0 // pred_region
    _
  $region21: #{unet_forward.24} parent=0 // pred_fallthru
    _
  %v21 = vld [vmem:[%s1] sm:$0xff]
  %v22 = vld [vmem:[%s1 + $0x8] sm:$0xff]
  %v23 = vld [vmem:[%s1 + $0x10] sm:$0xf]
  %v24 = vld [vmem:[%s1 + $0x14] sm:$0xff]
  %v25 = vld [vmem:[%s1 + $0x1c] sm:$0xff]
  %v26 = vld [vmem:[%s1 + $0x24] sm:$0xf]
  %v27 = vld [vmem:[%s0] sm:$0xf]
  %v28 = vld [vmem:[%s0 + $0x4] sm:$0xf]
  %v29 = vld [vmem:[%s0 + $0x8] sm:$0xf]
  %v30 = vld [vmem:[%s0 + $0xc] sm:$0xf]
  %v31 = vld [vmem:[%s0 + $0x10] sm:$0xf]
  %v32 = vld [vmem:[%s0 + $0x14] sm:$0xf]
  %v33 = vld [vmem:[%s0 + $0x18] sm:$0xf]
  %v34 = vld [vmem:[%s0 + $0x1c] sm:$0xf]
  %v35 = vld [vmem:[%s0 + $0x20] sm:$0xf]
  %v36 = vld [vmem:[%s0 + $0x24] sm:$0xf]
  %v37 = vld [vmem:[%s0 + $0x28] sm:$0xf]
  %v38 = vld [vmem:[%s0 + $0x2c] sm:$0xf]
  %v39 = vld [vmem:[%s0 + $0x30] sm:$0xf]
  %v40 = vld [vmem:[%s0 + $0x34] sm:$0xf]
  %v41 = vld [vmem:[%s0 + $0x38] sm:$0xf]
  %v42 = vld [vmem:[%s0 + $0x3c] sm:$0xf]
  %v43 = vld [vmem:[%s0 + $0x40] sm:$0xf]
  %v44 = vld [vmem:[%s0 + $0x44] sm:$0xf]
  %v45 = vld [vmem:[%s0 + $0x48] sm:$0xf]
  %v46 = vld [vmem:[%s0 + $0x4c] sm:$0xf]
  %v47 = vld [vmem:[%s0 + $0x50] sm:$0xf]
  %v48 = vld [vmem:[%s0 + $0x54] sm:$0xf]
  %v49 = vld [vmem:[%s0 + $0x58] sm:$0xf]
  %v50 = vld [vmem:[%s0 + $0x5c] sm:$0xf]
  %v51 = vld [vmem:[%s0 + $0x60] sm:$0xf]
  %v52 = vld [vmem:[%s0 + $0x64] sm:$0xf]
  %v53 = vld [vmem:[%s0 + $0x68] sm:$0xf]
  %v54 = vld [vmem:[%s0 + $0x6c] sm:$0xf]
  %v55 = vld [vmem:[%s0 + $0x70] sm:$0xf]
  %v56 = vld [vmem:[%s0 + $0x74] sm:$0xf]
  %v57 = vld [vmem:[%s0 + $0x78] sm:$0xf]
  %v58 = vld [vmem:[%s0 + $0x7c] sm:$0xf]
  %v59 = vld [vmem:[%s0 + $0x80] sm:$0xf]
  %v60 = vld [vmem:[%s0 + $0x84] sm:$0xf]
  %v61 = vld [vmem:[%s0 + $0x88] sm:$0xf]
  %v62 = vld [vmem:[%s0 + $0x8c] sm:$0xf]
  %v63 = vld [vmem:[%s0 + $0x90] sm:$0xf]
  %v64 = vld [vmem:[%s0 + $0x94] sm:$0xf]
  %v65 = vld [vmem:[%s0 + $0x98] sm:$0xf]
  %v66 = vld [vmem:[%s0 + $0x9c] sm:$0xf]
  %v67 = vld [vmem:[%s0 + $0xa0] sm:$0xf]
  %v68 = vld [vmem:[%s0 + $0xa4] sm:$0xf]
  %v69 = vld [vmem:[%s0 + $0xa8] sm:$0xf]
  %v70 = vld [vmem:[%s0 + $0xac] sm:$0xf]
  %v71 = vld [vmem:[%s0 + $0xb0] sm:$0xf]
  %v72 = vld [vmem:[%s0 + $0xb4] sm:$0xf]
  %v73 = vld [vmem:[%s0 + $0xb8] sm:$0xf]
  %v74 = vld [vmem:[%s0 + $0xbc] sm:$0xf]
  %v75 = vld [vmem:[%s0 + $0xc0] sm:$0xf]
  %v76 = vld [vmem:[%s0 + $0xc4] sm:$0xf]
  %v77 = vld [vmem:[%s0 + $0xc8] sm:$0xf]
  %v78 = vld [vmem:[%s0 + $0xcc] sm:$0xf]
  %v79 = vld [vmem:[%s0 + $0xd0] sm:$0xf]
  %v80 = vld [vmem:[%s0 + $0xd4] sm:$0xf]
  %v81 = vld [vmem:[%s0 + $0xd8] sm:$0xf]
  %v82 = vld [vmem:[%s0 + $0xdc] sm:$0xf]
  %v83 = vld [vmem:[%s0 + $0xe0] sm:$0xf]
  %v84 = vld [vmem:[%s0 + $0xe4] sm:$0xf]
  %v85 = vld [vmem:[%s0 + $0xe8] sm:$0xf]
  %v86 = vld [vmem:[%s0 + $0xec] sm:$0xf]
  %v87 = vld [vmem:[%s0 + $0xf0] sm:$0xf]
  %v88 = vld [vmem:[%s0 + $0xf4] sm:$0xf]
  %v89 = vld [vmem:[%s0 + $0xf8] sm:$0xf]
  %v90 = vld [vmem:[%s0 + $0xfc] sm:$0xf]
  %v91 = vld [vmem:[%s0 + $0x100] sm:$0xf]
  %v92 = vld [vmem:[%s0 + $0x104] sm:$0xf]
  %v93 = vld [vmem:[%s0 + $0x108] sm:$0xf]
  %v94 = vld [vmem:[%s0 + $0x10c] sm:$0xf]
  %v95 = vld [vmem:[%s0 + $0x110] sm:$0xf]
  %v96 = vld [vmem:[%s0 + $0x114] sm:$0xf]
  %v97 = vld [vmem:[%s0 + $0x118] sm:$0xf]
  %v98 = vld [vmem:[%s0 + $0x11c] sm:$0xf]
  %v99 = vld [vmem:[%s2] sm:$0xff]
  %v100 = vld [vmem:[%s2 + $0x8] sm:$0xff]
  %102 = vset.pattern.permute.xlu0 0
  %103 = vperm.xlu0 %102, %v99
  %v104 = vpop.permute.xlu0 %103
  %107 = vset.pattern.permute.xlu0 0
  %108 = vperm.xlu0 %107, %v100
  %v109 = vpop.permute.xlu0 %108
  %v117 = vunpack.c.l.b16 %v21
  %v118 = vunpack.c.h.b16 %v21
  %v119 = vunpack.c.l.b16 %v22
  %v120 = vunpack.c.h.b16 %v22
  %v121 = vunpack.c.l.b16 %v23
  %v122 = vunpack.c.l.b16 %v24
  %v123 = vunpack.c.h.b16 %v24
  %v124 = vunpack.c.l.b16 %v25
  %v125 = vunpack.c.h.b16 %v25
  %v126 = vunpack.c.l.b16 %v26
  %v127 = vpack.c.b16 %v122, %v117
  %v128 = vpack.c.b16 %v123, %v118
  %v129 = vpack.c.b16 %v124, %v119
  %v130 = vpack.c.b16 %v125, %v120
  %v131 = vpack.c.b16 %v126, %v121
  %v208 = vunpack.c.l.b16 %v27
  %v209 = vunpack.c.l.b16 %v28
  %v210 = vunpack.c.l.b16 %v29
  %v211 = vunpack.c.l.b16 %v30
  %v212 = vunpack.c.l.b16 %v31
  %v213 = vunpack.c.l.b16 %v32
  %v214 = vunpack.c.l.b16 %v33
  %v215 = vunpack.c.l.b16 %v34
  %v216 = vunpack.c.l.b16 %v35
  %v217 = vunpack.c.l.b16 %v36
  %v218 = vunpack.c.l.b16 %v37
  %v219 = vunpack.c.l.b16 %v38
  %v220 = vunpack.c.l.b16 %v39
  %v221 = vunpack.c.l.b16 %v40
  %v222 = vunpack.c.l.b16 %v41
  %v223 = vunpack.c.l.b16 %v42
  %v224 = vunpack.c.l.b16 %v43
  %v225 = vunpack.c.l.b16 %v44
  %v226 = vunpack.c.l.b16 %v45
  %v227 = vunpack.c.l.b16 %v46
  %v228 = vunpack.c.l.b16 %v47
  %v229 = vunpack.c.l.b16 %v48
  %v230 = vunpack.c.l.b16 %v49
  %v231 = vunpack.c.l.b16 %v50
  %v232 = vunpack.c.l.b16 %v51
  %v233 = vunpack.c.l.b16 %v52
  %v234 = vunpack.c.l.b16 %v53
  %v235 = vunpack.c.l.b16 %v54
  %v236 = vunpack.c.l.b16 %v55
  %v237 = vunpack.c.l.b16 %v56
  %v238 = vunpack.c.l.b16 %v57
  %v239 = vunpack.c.l.b16 %v58
  %v240 = vunpack.c.l.b16 %v59
  %v241 = vunpack.c.l.b16 %v60
  %v242 = vunpack.c.l.b16 %v61
  %v243 = vunpack.c.l.b16 %v62
  %v244 = vunpack.c.l.b16 %v63
  %v245 = vunpack.c.l.b16 %v64
  %v246 = vunpack.c.l.b16 %v65
  %v247 = vunpack.c.l.b16 %v66
  %v248 = vunpack.c.l.b16 %v67
  %v249 = vunpack.c.l.b16 %v68
  %v250 = vunpack.c.l.b16 %v69
  %v251 = vunpack.c.l.b16 %v70
  %v252 = vunpack.c.l.b16 %v71
  %v253 = vunpack.c.l.b16 %v72
  %v254 = vunpack.c.l.b16 %v73
  %v255 = vunpack.c.l.b16 %v74
  %v256 = vunpack.c.l.b16 %v75
  %v257 = vunpack.c.l.b16 %v76
  %v258 = vunpack.c.l.b16 %v77
  %v259 = vunpack.c.l.b16 %v78
  %v260 = vunpack.c.l.b16 %v79
  %v261 = vunpack.c.l.b16 %v80
  %v262 = vunpack.c.l.b16 %v81
  %v263 = vunpack.c.l.b16 %v82
  %v264 = vunpack.c.l.b16 %v83
  %v265 = vunpack.c.l.b16 %v84
  %v266 = vunpack.c.l.b16 %v85
  %v267 = vunpack.c.l.b16 %v86
  %v268 = vunpack.c.l.b16 %v87
  %v269 = vunpack.c.l.b16 %v88
  %v270 = vunpack.c.l.b16 %v89
  %v271 = vunpack.c.l.b16 %v90
  %v272 = vunpack.c.l.b16 %v91
  %v273 = vunpack.c.l.b16 %v92
  %v274 = vunpack.c.l.b16 %v93
  %v275 = vunpack.c.l.b16 %v94
  %v276 = vunpack.c.l.b16 %v95
  %v277 = vunpack.c.l.b16 %v96
  %v278 = vunpack.c.l.b16 %v97
  %v279 = vunpack.c.l.b16 %v98
  %v280 = vpack.c.b16 %v209, %v208
  %v281 = vpack.c.b16 %v211, %v210
  %v282 = vpack.c.b16 %v213, %v212
  %v283 = vpack.c.b16 %v215, %v214
  %v284 = vpack.c.b16 %v217, %v216
  %v285 = vpack.c.b16 %v219, %v218
  %v286 = vpack.c.b16 %v221, %v220
  %v287 = vpack.c.b16 %v223, %v222
  %v288 = vpack.c.b16 %v225, %v224
  %v289 = vpack.c.b16 %v227, %v226
  %v290 = vpack.c.b16 %v229, %v228
  %v291 = vpack.c.b16 %v231, %v230
  %v292 = vpack.c.b16 %v233, %v232
  %v293 = vpack.c.b16 %v235, %v234
  %v294 = vpack.c.b16 %v237, %v236
  %v295 = vpack.c.b16 %v239, %v238
  %v296 = vpack.c.b16 %v241, %v240
  %v297 = vpack.c.b16 %v243, %v242
  %v298 = vpack.c.b16 %v245, %v244
  %v299 = vpack.c.b16 %v247, %v246
  %v300 = vpack.c.b16 %v249, %v248
  %v301 = vpack.c.b16 %v251, %v250
  %v302 = vpack.c.b16 %v253, %v252
  %v303 = vpack.c.b16 %v255, %v254
  %v304 = vpack.c.b16 %v257, %v256
  %v305 = vpack.c.b16 %v259, %v258
  %v306 = vpack.c.b16 %v261, %v260
  %v307 = vpack.c.b16 %v263, %v262
  %v308 = vpack.c.b16 %v265, %v264
  %v309 = vpack.c.b16 %v267, %v266
  %v310 = vpack.c.b16 %v269, %v268
  %v311 = vpack.c.b16 %v271, %v270
  %v312 = vpack.c.b16 %v273, %v272
  %v313 = vpack.c.b16 %v275, %v274
  %v314 = vpack.c.b16 %v277, %v276
  %v315 = vpack.c.b16 %v279, %v278
  %vm352 = vcmask 523264
  %v354 = vsel %vm352, %v131, 0
  %356 = vmatprep.subr.bf16.mxu0 0
  %357 = vmatpush1.bf16.msra.mxu0 %v280
  %358 = vmatprep.subr.bf16.mxu0 0
  %359 = vmatpush1.bf16.msra.mxu0 %v281
  %360 = vmatprep.subr.bf16.mxu0 0
  %361 = vmatpush1.bf16.msra.mxu0 %v282
  %362 = vmatprep.subr.bf16.mxu0 0
  %363 = vmatpush1.bf16.msra.mxu0 %v283
  %364 = vmatprep.subr.bf16.mxu0 0
  %365 = vmatpush1.bf16.msra.mxu0 %v284
  %366 = vmatprep.subr.bf16.mxu0 0
  %367 = vmatpush1.bf16.msra.mxu0 %v285
  %368 = vmatprep.subr.bf16.mxu0 0
  %369 = vmatpush1.bf16.msra.mxu0 %v286
  %370 = vmatprep.subr.bf16.mxu0 0
  %371 = vmatpush1.bf16.msra.mxu0 %v287
  %372 = vmatprep.subr.bf16.mxu0 0
  %373 = vmatpush1.bf16.msra.mxu0 %v288
  %374 = vmatprep.subr.bf16.mxu0 0
  %375 = vmatpush1.bf16.msra.mxu0 %v289
  %376 = vmatprep.subr.bf16.mxu0 0
  %377 = vmatpush1.bf16.msra.mxu0 %v290
  %378 = vmatprep.subr.bf16.mxu0 0
  %379 = vmatpush1.bf16.msra.mxu0 %v291
  %380 = vmatprep.subr.bf16.mxu0 0
  %381 = vmatpush1.bf16.msra.mxu0 %v292
  %382 = vmatprep.subr.bf16.mxu0 0
  %383 = vmatpush1.bf16.msra.mxu0 %v293
  %384 = vmatprep.subr.bf16.mxu0 0
  %385 = vmatpush1.bf16.msra.mxu0 %v294
  %386 = vmatprep.subr.bf16.mxu0 0
  %387 = vmatpush1.bf16.msra.mxu0 %v295
  %388 = vmatprep.mubr.bf16.mxu0 %v128
  %389 = vmatmul.mubr.bf16.gmra.mrb[0].mxu0 %v127
  %v390 = vpop.f32.mrb[0].mxu0
  %v391 = vadd.f32 %v104, %v390
  %v392 = vpop.f32.mrb[0].mxu0
  %v393 = vpop.f32.mrb[0].mxu0
  %v394 = vadd.f32 %v109, %v393
  %v395 = vpop.f32.mrb[0].mxu0
  %396 = vdwg.mxu0
  %397 = vmatprep.subr.bf16.mxu0 0
  %398 = vmatpush1.bf16.msra.mxu0 %v296
  %399 = vmatprep.subr.bf16.mxu0 0
  %400 = vmatpush1.bf16.msra.mxu0 %v297
  %401 = vmatprep.subr.bf16.mxu0 0
  %402 = vmatpush1.bf16.msra.mxu0 %v298
  %403 = vmatprep.subr.bf16.mxu0 0
  %404 = vmatpush1.bf16.msra.mxu0 %v299
  %405 = vmatprep.subr.bf16.mxu0 0
  %406 = vmatpush1.bf16.msra.mxu0 %v300
  %407 = vmatprep.subr.bf16.mxu0 0
  %408 = vmatpush1.bf16.msra.mxu0 %v301
  %409 = vmatprep.subr.bf16.mxu0 0
  %410 = vmatpush1.bf16.msra.mxu0 %v302
  %411 = vmatprep.subr.bf16.mxu0 0
  %412 = vmatpush1.bf16.msra.mxu0 %v303
  %413 = vmatprep.subr.bf16.mxu0 0
  %414 = vmatpush1.bf16.msra.mxu0 %v304
  %415 = vmatprep.subr.bf16.mxu0 0
  %416 = vmatpush1.bf16.msra.mxu0 %v305
  %417 = vmatprep.subr.bf16.mxu0 0
  %418 = vmatpush1.bf16.msra.mxu0 %v306
  %419 = vmatprep.subr.bf16.mxu0 0
  %420 = vmatpush1.bf16.msra.mxu0 %v307
  %421 = vmatprep.subr.bf16.mxu0 0
  %422 = vmatpush1.bf16.msra.mxu0 %v308
  %423 = vmatprep.subr.bf16.mxu0 0
  %424 = vmatpush1.bf16.msra.mxu0 %v309
  %425 = vmatprep.subr.bf16.mxu0 0
  %426 = vmatpush1.bf16.msra.mxu0 %v310
  %427 = vmatprep.subr.bf16.mxu0 0
  %428 = vmatpush1.bf16.msra.mxu0 %v311
  %429 = vmatprep.mubr.bf16.mxu0 %v130
  %430 = vmatmul.mubr.bf16.gmra.mrb[0].mxu0 %v129
  %v431 = vpop.f32.mrb[0].mxu0
  %v432 = vadd.f32 %v391, %v431
  %v433 = vpop.f32.mrb[0].mxu0
  %v434 = vpop.f32.mrb[0].mxu0
  %v435 = vadd.f32 %v394, %v434
  %v436 = vpop.f32.mrb[0].mxu0
  %437 = vdwg.mxu0
  %438 = vmatprep.subr.bf16.mxu0 0
  %439 = vmatpush1.bf16.msra.mxu0 %v312
  %440 = vmatprep.subr.bf16.mxu0 0
  %441 = vmatpush1.bf16.msra.mxu0 %v313
  %442 = vmatprep.subr.bf16.mxu0 0
  %443 = vmatpush1.bf16.msra.mxu0 %v314
  %444 = vmatprep.subr.bf16.mxu0 0
  %445 = vmatpush1.bf16.msra.mxu0 %v315
  %446 = vmatprep.subr.bf16.mxu0 0
  %447 = vmatpush1.bf16.msra.mxu0 0
  %448 = vmatprep.subr.bf16.mxu0 0
  %449 = vmatpush1.bf16.msra.mxu0 0
  %450 = vmatprep.subr.bf16.mxu0 0
  %451 = vmatpush1.bf16.msra.mxu0 0
  %452 = vmatprep.subr.bf16.mxu0 0
  %453 = vmatpush1.bf16.msra.mxu0 0
  %454 = vmatprep.subr.bf16.mxu0 0
  %455 = vmatpush1.bf16.msra.mxu0 0
  %456 = vmatprep.subr.bf16.mxu0 0
  %457 = vmatpush1.bf16.msra.mxu0 0
  %458 = vmatprep.subr.bf16.mxu0 0
  %459 = vmatpush1.bf16.msra.mxu0 0
  %460 = vmatprep.subr.bf16.mxu0 0
  %461 = vmatpush1.bf16.msra.mxu0 0
  %462 = vmatprep.subr.bf16.mxu0 0
  %463 = vmatpush1.bf16.msra.mxu0 0
  %464 = vmatprep.subr.bf16.mxu0 0
  %465 = vmatpush1.bf16.msra.mxu0 0
  %466 = vmatprep.subr.bf16.mxu0 0
  %467 = vmatpush1.bf16.msra.mxu0 0
  %468 = vmatprep.subr.bf16.mxu0 0
  %469 = vmatpush1.bf16.msra.mxu0 0
  %470 = vmatprep.mubr.bf16.mxu0 0
  %471 = vmatmul.mubr.bf16.gmra.mrb[0].mxu0 %v354
  %v472 = vpop.f32.mrb[0].mxu0
  %v473 = vadd.f32 %v432, %v472
  %v474 = vpop.f32.mrb[0].mxu0
  %v475 = vpop.f32.mrb[0].mxu0
  %v476 = vadd.f32 %v435, %v475
  %v477 = vpop.f32.mrb[0].mxu0
  %478 = vdwg.mxu0
  %479 = vadd.xlane.f32.xlu0 %v473
  %v480 = vpop.xlane.xlu0 %479
  %481 = vadd.xlane.f32.xlu0 %v476
  %v482 = vpop.xlane.xlu0 %481
  %v483 = vmul.f32 %v473, %v473
  %v484 = vmul.f32 %v476, %v476
  %485 = vadd.xlane.f32.xlu0 %v483
  %v486 = vpop.xlane.xlu0 %485
  %487 = vadd.xlane.f32.xlu0 %v484
  %v488 = vpop.xlane.xlu0 %487
  %v489 = vmul.f32 %v99, 96.0
  %v490 = vmul.f32 %v100, 96.0
  %v491 = vsub.f32 %v480, %v489
  %v492 = vsub.f32 %v482, %v490
  %v493 = vmul.f32 %v99, %v99
  %v494 = vmul.f32 %v100, %v100
  %v495 = vmul.f32 %v493, 96.0
  %v496 = vmul.f32 %v494, 96.0
  %v497 = vsub.f32 %v486, %v495
  %v498 = vsub.f32 %v488, %v496
  %v499 = vmul.f32 %v491, 0.03125
  %v500 = vmul.f32 %v492, 0.03125
  %v501 = vmul.f32 %v497, 0.03125
  %v502 = vmul.f32 %v498, 0.03125
  %v503 = vmul.f32 %v499, %v499
  %v504 = vmul.f32 %v500, %v500
  %v505 = vsub.f32 %v501, %v503
  %v506 = vsub.f32 %v502, %v504
  %v507 = vmax.f32 %v505, 0.0
  %v508 = vmax.f32 %v506, 0.0
  %v509 = vld [vmem:[%s3] sm:$0xff]
  %v510 = vld [vmem:[%s3 + $0x8] sm:$0xff]
  %v511 = vadd.f32 %v507, 1e-05
  %v512 = vadd.f32 %v508, 1e-05
  %v513 = vrsqrt.pop %v511
  %v514 = vrsqrt.pop %v512
  %v515 = vmul.f32 %v509, %v513
  %v516 = vmul.f32 %v510, %v514
  %518 = vset.pattern.permute.xlu0 0
  %519 = vperm.xlu0 %518, %v499
  %v520 = vpop.permute.xlu0 %519
  %523 = vset.pattern.permute.xlu0 0
  %524 = vperm.xlu0 %523, %v500
  %v525 = vpop.permute.xlu0 %524
  %v527 = vsub.f32 %v473, %v520
  %v528 = vsub.f32 %v476, %v525
  %530 = vset.pattern.permute.xlu0 0
  %531 = vperm.xlu0 %530, %v515
  %v532 = vpop.permute.xlu0 %531
  %535 = vset.pattern.permute.xlu0 0
  %536 = vperm.xlu0 %535, %v516
  %v537 = vpop.permute.xlu0 %536
  %v539 = vmul.f32 %v527, %v532
  %v540 = vmul.f32 %v528, %v537
  %v541 = vld [vmem:[%s4] sm:$0xff]
  %v542 = vld [vmem:[%s4 + $0x8] sm:$0xff]
  %544 = vset.pattern.permute.xlu0 0
  %545 = vperm.xlu0 %544, %v541
  %v546 = vpop.permute.xlu0 %545
  %549 = vset.pattern.permute.xlu0 0
  %550 = vperm.xlu0 %549, %v542
  %v551 = vpop.permute.xlu0 %550
  %v553 = vadd.f32 %v539, %v546
  %v554 = vadd.f32 %v540, %v551
  %v555 = vpack.c.bf16 %v554, %v553
  %v557 = vunpack.c.l.b16 %v555
  %v558 = vunpack.c.h.b16 %v555
  %v559 = vpack.c.b16 %v557, %v557
  %v560 = vpack.c.b16 %v558, %v558
  %563 = vst [vmem:[%s5] sm:$0xf] %v559
  %564 = vst [vmem:[%s5 + $0x4] sm:$0xf] %v560
  // Predicated region
  $region22: #{unet_forward.24} parent=0 // pred_check
    _
  $region23: #{unet_forward.24} parent=0 // pred_check_branch
    %566 = sbr.rel (0) target = $region25
  $region24: #{unet_forward.24} parent=0 // pred_region
    _
  $region25: #{unet_forward.24} parent=0 // pred_fallthru
    _
  // Predicated region
  $region26: #{unet_forward.24} parent=0 // pred_check
    _
  $region27: #{unet_forward.24} parent=0 // pred_check_branch
    %568 = sbr.rel (0) target = $region29
  $region28: #{unet_forward.24} parent=0 // pred_region
    _
  $region29: #{unet_forward.24} parent=0 // pred_fallthru
    _

// kernel: unet_forward.25
$region0: #{unet_forward.25}
  #allocation0 [shape = 'u32[]', space=smem, size = 0x4, offset = 0x4, fixed_abs, tag = 'smem constant byte address 0x4 - core index']
  #allocation1 [shape = 'u32[144,128]{1,0:T(1,128)}', space=vmem, size = 0x12000, scoped, tag = 'internal scratch']
  %s0 = inlined_call_operand.vmem [shape: bf16[64,16], index: 0, kind: input, shape index: {}]
  %s1 = inlined_call_operand.vmem [shape: bf16[16,64], index: 1, kind: input, shape index: {}]
  %s2 = inlined_call_operand.vmem [shape: bf16[64,64], index: 2, kind: output, shape index: {}]
  %s3 = sld [smem:[#allocation0]]
  $region18: #{unet_forward.25} parent=0
    _
  %s5 = ssub.s32 1, %s3
  %s6 = scalar_select 0, %s5, %s3
  // Predicated region
  $region2: #{unet_forward.25} parent=0 // pred_check
    _
  $region3: #{unet_forward.25} parent=0 // pred_check_branch
    %8 = sbr.rel (0) target = $region5
  $region4: #{unet_forward.25} parent=0 // pred_region
    _
  $region5: #{unet_forward.25} parent=0 // pred_fallthru
    _
  // Predicated region
  $region6: #{unet_forward.25} parent=0 // pred_check
    _
  $region7: #{unet_forward.25} parent=0 // pred_check_branch
    %10 = sbr.rel (0) target = $region9
  $region8: #{unet_forward.25} parent=0 // pred_region
    _
  $region9: #{unet_forward.25} parent=0 // pred_fallthru
    _
  %v12 = vld [vmem:[%s0] sm:$0xf]
  %v13 = vld [vmem:[%s0 + $0x4] sm:$0xf]
  %v14 = vld [vmem:[%s0 + $0x8] sm:$0xf]
  %v15 = vld [vmem:[%s0 + $0xc] sm:$0xf]
  %v16 = vld [vmem:[%s0 + $0x10] sm:$0xf]
  %v17 = vld [vmem:[%s0 + $0x14] sm:$0xf]
  %v18 = vld [vmem:[%s0 + $0x18] sm:$0xf]
  %v19 = vld [vmem:[%s0 + $0x1c] sm:$0xf]
  %v20 = vmax.bf16 %v12, 0
  %v21 = vmax.bf16 %v13, 0
  %v22 = vmax.bf16 %v14, 0
  %v23 = vmax.bf16 %v15, 0
  %v24 = vmax.bf16 %v16, 0
  %v25 = vmax.bf16 %v17, 0
  %v26 = vmax.bf16 %v18, 0
  %v27 = vmax.bf16 %v19, 0
  %v28 = vld [vmem:[%s1] sm:$0xf]
  %v29 = vld [vmem:[%s1 + $0x4] sm:$0xf]
  %v38 = vunpack.c.l.b16 %v20
  %v39 = vunpack.c.l.b16 %v21
  %v40 = vunpack.c.l.b16 %v22
  %v41 = vunpack.c.l.b16 %v23
  %v42 = vunpack.c.l.b16 %v24
  %v43 = vunpack.c.l.b16 %v25
  %v44 = vunpack.c.l.b16 %v26
  %v45 = vunpack.c.l.b16 %v27
  %v46 = vpack.c.b16 %v39, %v38
  %v47 = vpack.c.b16 %v41, %v40
  %v48 = vpack.c.b16 %v43, %v42
  %v49 = vpack.c.b16 %v45, %v44
  %v52 = vunpack.c.l.b16 %v28
  %v53 = vunpack.c.l.b16 %v29
  %v54 = vpack.c.b16 %v53, %v52
  %vm56 = vcmask 130048
  %v58 = vsel %vm56, %v46, 0
  %v61 = vsel %vm56, %v47, 0
  %v64 = vsel %vm56, %v48, 0
  %v67 = vsel %vm56, %v49, 0
  %69 = vmatprep.subr.bf16.mxu0 0
  %70 = vmatpush1.bf16.msra.mxu0 %v54
  %71 = vmatprep.subr.bf16.mxu0 0
  %72 = vmatpush1.bf16.msra.mxu0 0
  %73 = vmatprep.subr.bf16.mxu0 0
  %74 = vmatpush1.bf16.msra.mxu0 0
  %75 = vmatprep.subr.bf16.mxu0 0
  %76 = vmatpush1.bf16.msra.mxu0 0
  %77 = vmatprep.subr.bf16.mxu0 0
  %78 = vmatpush1.bf16.msra.mxu0 0
  %79 = vmatprep.subr.bf16.mxu0 0
  %80 = vmatpush1.bf16.msra.mxu0 0
  %81 = vmatprep.subr.bf16.mxu0 0
  %82 = vmatpush1.bf16.msra.mxu0 0
  %83 = vmatprep.subr.bf16.mxu0 0
  %84 = vmatpush1.bf16.msra.mxu0 0
  %85 = vmatprep.subr.bf16.mxu0 0
  %86 = vmatpush1.bf16.msra.mxu0 0
  %87 = vmatprep.subr.bf16.mxu0 0
  %88 = vmatpush1.bf16.msra.mxu0 0
  %89 = vmatprep.subr.bf16.mxu0 0
  %90 = vmatpush1.bf16.msra.mxu0 0
  %91 = vmatprep.subr.bf16.mxu0 0
  %92 = vmatpush1.bf16.msra.mxu0 0
  %93 = vmatprep.subr.bf16.mxu0 0
  %94 = vmatpush1.bf16.msra.mxu0 0
  %95 = vmatprep.subr.bf16.mxu0 0
  %96 = vmatpush1.bf16.msra.mxu0 0
  %97 = vmatprep.subr.bf16.mxu0 0
  %98 = vmatpush1.bf16.msra.mxu0 0
  %99 = vmatprep.subr.bf16.mxu0 0
  %100 = vmatpush1.bf16.msra.mxu0 0
  %101 = vmatprep.mubr.bf16.mxu0 0
  %102 = vmatmul.mubr.bf16.gmra.mrb[0].mxu0 %v58
  %v103 = vpop.f32.mrb[0].mxu0
  %v104 = vadd.f32 0.0, %v103
  %v105 = vpop.f32.mrb[0].mxu0
  %v106 = vpop.f32.mrb[0].mxu0
  %v107 = vadd.f32 0.0, %v106
  %v108 = vpop.f32.mrb[0].mxu0
  %109 = vmatprep.mubr.bf16.mxu0 0
  %110 = vmatmul.mubr.bf16.gmra.mrb[0].mxu0 %v61
  %v111 = vpop.f32.mrb[0].mxu0
  %v112 = vadd.f32 0.0, %v111
  %v113 = vpop.f32.mrb[0].mxu0
  %v114 = vpop.f32.mrb[0].mxu0
  %v115 = vadd.f32 0.0, %v114
  %v116 = vpop.f32.mrb[0].mxu0
  %117 = vmatprep.mubr.bf16.mxu0 0
  %118 = vmatmul.mubr.bf16.gmra.mrb[0].mxu0 %v64
  %v119 = vpop.f32.mrb[0].mxu0
  %v120 = vadd.f32 0.0, %v119
  %v121 = vpop.f32.mrb[0].mxu0
  %v122 = vpop.f32.mrb[0].mxu0
  %v123 = vadd.f32 0.0, %v122
  %v124 = vpop.f32.mrb[0].mxu0
  %125 = vmatprep.mubr.bf16.mxu0 0
  %126 = vmatmul.mubr.bf16.gmra.mrb[0].mxu0 %v67
  %v127 = vpop.f32.mrb[0].mxu0
  %v128 = vadd.f32 0.0, %v127
  %v129 = vpop.f32.mrb[0].mxu0
  %v130 = vpop.f32.mrb[0].mxu0
  %v131 = vadd.f32 0.0, %v130
  %v132 = vpop.f32.mrb[0].mxu0
  %133 = vdwg.mxu0
  %v134 = vpack.c.bf16 %v107, %v104
  %v135 = vpack.c.bf16 %v115, %v112
  %v136 = vpack.c.bf16 %v123, %v120
  %v137 = vpack.c.bf16 %v131, %v128
  %v142 = vunpack.c.l.b16 %v134
  %v143 = vunpack.c.h.b16 %v134
  %v144 = vunpack.c.l.b16 %v135
  %v145 = vunpack.c.h.b16 %v135
  %v146 = vunpack.c.l.b16 %v136
  %v147 = vunpack.c.h.b16 %v136
  %v148 = vunpack.c.l.b16 %v137
  %v149 = vunpack.c.h.b16 %v137
  %v150 = vpack.c.b16 %v142, %v142
  %v151 = vpack.c.b16 %v143, %v143
  %v152 = vpack.c.b16 %v144, %v144
  %v153 = vpack.c.b16 %v145, %v145
  %v154 = vpack.c.b16 %v146, %v146
  %v155 = vpack.c.b16 %v147, %v147
  %v156 = vpack.c.b16 %v148, %v148
  %v157 = vpack.c.b16 %v149, %v149
  %vm166 = vcmask 519168
  %167 = vst.msk [vmem:[%s2] sm:$0xf] %vm166, %v150
  %168 = vst.msk [vmem:[%s2 + $0x4] sm:$0xf] %vm166, %v151
  %169 = vst.msk [vmem:[%s2 + $0x8] sm:$0xf] %vm166, %v152
  %170 = vst.msk [vmem:[%s2 + $0xc] sm:$0xf] %vm166, %v153
  %171 = vst.msk [vmem:[%s2 + $0x10] sm:$0xf] %vm166, %v154
  %172 = vst.msk [vmem:[%s2 + $0x14] sm:$0xf] %vm166, %v155
  %173 = vst.msk [vmem:[%s2 + $0x18] sm:$0xf] %vm166, %v156
  %174 = vst.msk [vmem:[%s2 + $0x1c] sm:$0xf] %vm166, %v157
  // Predicated region
  $region10: #{unet_forward.25} parent=0 // pred_check
    _
  $region11: #{unet_forward.25} parent=0 // pred_check_branch
    %176 = sbr.rel (0) target = $region13
  $region12: #{unet_forward.25} parent=0 // pred_region
    _
  $region13: #{unet_forward.25} parent=0 // pred_fallthru
    _
  // Predicated region
  $region14: #{unet_forward.25} parent=0 // pred_check
    _
  $region15: #{unet_forward.25} parent=0 // pred_check_branch
    %178 = sbr.rel (0) target = $region17
  $region16: #{unet_forward.25} parent=0 // pred_region
    _
  $region17: #{unet_forward.25} parent=0 // pred_fallthru
    _

// kernel: unet_forward.26
$region0: #{unet_forward.26}
  #allocation0 [shape = 'u32[]', space=smem, size = 0x4, offset = 0x4, fixed_abs, tag = 'smem constant byte address 0x4 - core index']
  #allocation1 [shape = 'u32[144,128]{1,0:T(1,128)}', space=vmem, size = 0x12000, scoped, tag = 'internal scratch']
  %s0 = inlined_call_operand.vmem [shape: bf16[288,128], index: 0, kind: input, shape index: {}]
  %s1 = inlined_call_operand.vmem [shape: bf16[8,288], index: 1, kind: input, shape index: {}]
  %s2 = inlined_call_operand.vmem [shape: f32[8,1], index: 2, kind: input, shape index: {}]
  %s3 = inlined_call_operand.vmem [shape: f32[8,1], index: 3, kind: input, shape index: {}]
  %s4 = inlined_call_operand.vmem [shape: f32[8,1], index: 4, kind: input, shape index: {}]
  %s5 = inlined_call_operand.vmem [shape: bf16[8,128], index: 5, kind: output, shape index: {}]
  %s6 = sld [smem:[#allocation0]]
  $region30: #{unet_forward.26} parent=0
    _
  %s8 = ssub.s32 1, %s6
  %s9 = scalar_select 0, %s8, %s6
  // Predicated region
  $region2: #{unet_forward.26} parent=0 // pred_check
    _
  $region3: #{unet_forward.26} parent=0 // pred_check_branch
    %11 = sbr.rel (0) target = $region5
  $region4: #{unet_forward.26} parent=0 // pred_region
    _
  $region5: #{unet_forward.26} parent=0 // pred_fallthru
    _
  // Predicated region
  $region6: #{unet_forward.26} parent=0 // pred_check
    _
  $region7: #{unet_forward.26} parent=0 // pred_check_branch
    %13 = sbr.rel (0) target = $region9
  $region8: #{unet_forward.26} parent=0 // pred_region
    _
  $region9: #{unet_forward.26} parent=0 // pred_fallthru
    _
  // Predicated region
  $region10: #{unet_forward.26} parent=0 // pred_check
    _
  $region11: #{unet_forward.26} parent=0 // pred_check_branch
    %15 = sbr.rel (0) target = $region13
  $region12: #{unet_forward.26} parent=0 // pred_region
    _
  $region13: #{unet_forward.26} parent=0 // pred_fallthru
    _
  // Predicated region
  $region14: #{unet_forward.26} parent=0 // pred_check
    _
  $region15: #{unet_forward.26} parent=0 // pred_check_branch
    %17 = sbr.rel (0) target = $region17
  $region16: #{unet_forward.26} parent=0 // pred_region
    _
  $region17: #{unet_forward.26} parent=0 // pred_fallthru
    _
  // Predicated region
  $region18: #{unet_forward.26} parent=0 // pred_check
    _
  $region19: #{unet_forward.26} parent=0 // pred_check_branch
    %19 = sbr.rel (0) target = $region21
  $region20: #{unet_forward.26} parent=0 // pred_region
    _
  $region21: #{unet_forward.26} parent=0 // pred_fallthru
    _
  %v21 = vld [vmem:[%s1] sm:$0xff]
  %v22 = vld [vmem:[%s1 + $0x8] sm:$0xf]
  %v23 = vld [vmem:[%s0] sm:$0xf]
  %v24 = vld [vmem:[%s0 + $0x4] sm:$0xf]
  %v25 = vld [vmem:[%s0 + $0x8] sm:$0xf]
  %v26 = vld [vmem:[%s0 + $0xc] sm:$0xf]
  %v27 = vld [vmem:[%s0 + $0x10] sm:$0xf]
  %v28 = vld [vmem:[%s0 + $0x14] sm:$0xf]
  %v29 = vld [vmem:[%s0 + $0x18] sm:$0xf]
  %v30 = vld [vmem:[%s0 + $0x1c] sm:$0xf]
  %v31 = vld [vmem:[%s0 + $0x20] sm:$0xf]
  %v32 = vld [vmem:[%s0 + $0x24] sm:$0xf]
  %v33 = vld [vmem:[%s0 + $0x28] sm:$0xf]
  %v34 = vld [vmem:[%s0 + $0x2c] sm:$0xf]
  %v35 = vld [vmem:[%s0 + $0x30] sm:$0xf]
  %v36 = vld [vmem:[%s0 + $0x34] sm:$0xf]
  %v37 = vld [vmem:[%s0 + $0x38] sm:$0xf]
  %v38 = vld [vmem:[%s0 + $0x3c] sm:$0xf]
  %v39 = vld [vmem:[%s0 + $0x40] sm:$0xf]
  %v40 = vld [vmem:[%s0 + $0x44] sm:$0xf]
  %v41 = vld [vmem:[%s0 + $0x48] sm:$0xf]
  %v42 = vld [vmem:[%s0 + $0x4c] sm:$0xf]
  %v43 = vld [vmem:[%s0 + $0x50] sm:$0xf]
  %v44 = vld [vmem:[%s0 + $0x54] sm:$0xf]
  %v45 = vld [vmem:[%s0 + $0x58] sm:$0xf]
  %v46 = vld [vmem:[%s0 + $0x5c] sm:$0xf]
  %v47 = vld [vmem:[%s0 + $0x60] sm:$0xf]
  %v48 = vld [vmem:[%s0 + $0x64] sm:$0xf]
  %v49 = vld [vmem:[%s0 + $0x68] sm:$0xf]
  %v50 = vld [vmem:[%s0 + $0x6c] sm:$0xf]
  %v51 = vld [vmem:[%s0 + $0x70] sm:$0xf]
  %v52 = vld [vmem:[%s0 + $0x74] sm:$0xf]
  %v53 = vld [vmem:[%s0 + $0x78] sm:$0xf]
  %v54 = vld [vmem:[%s0 + $0x7c] sm:$0xf]
  %v55 = vld [vmem:[%s0 + $0x80] sm:$0xf]
  %v56 = vld [vmem:[%s0 + $0x84] sm:$0xf]
  %v57 = vld [vmem:[%s0 + $0x88] sm:$0xf]
  %v58 = vld [vmem:[%s0 + $0x8c] sm:$0xf]
  %v59 = vld [vmem:[%s2] sm:$0xff]
  %61 = vset.pattern.permute.xlu0 0
  %62 = vperm.xlu0 %61, %v59
  %v63 = vpop.permute.xlu0 %62
  %v67 = vunpack.c.l.b16 %v21
  %v68 = vunpack.c.h.b16 %v21
  %v69 = vunpack.c.l.b16 %v22
  %v70 = vpack.c.b16 %v67, %v67
  %v71 = vpack.c.b16 %v68, %v68
  %v72 = vpack.c.b16 %v69, %v69
  %v111 = vunpack.c.l.b16 %v23
  %v112 = vunpack.c.l.b16 %v24
  %v113 = vunpack.c.l.b16 %v25
  %v114 = vunpack.c.l.b16 %v26
  %v115 = vunpack.c.l.b16 %v27
  %v116 = vunpack.c.l.b16 %v28
  %v117 = vunpack.c.l.b16 %v29
  %v118 = vunpack.c.l.b16 %v30
  %v119 = vunpack.c.l.b16 %v31
  %v120 = vunpack.c.l.b16 %v32
  %v121 = vunpack.c.l.b16 %v33
  %v122 = vunpack.c.l.b16 %v34
  %v123 = vunpack.c.l.b16 %v35
  %v124 = vunpack.c.l.b16 %v36
  %v125 = vunpack.c.l.b16 %v37
  %v126 = vunpack.c.l.b16 %v38
  %v127 = vunpack.c.l.b16 %v39
  %v128 = vunpack.c.l.b16 %v40
  %v129 = vunpack.c.l.b16 %v41
  %v130 = vunpack.c.l.b16 %v42
  %v131 = vunpack.c.l.b16 %v43
  %v132 = vunpack.c.l.b16 %v44
  %v133 = vunpack.c.l.b16 %v45
  %v134 = vunpack.c.l.b16 %v46
  %v135 = vunpack.c.l.b16 %v47
  %v136 = vunpack.c.l.b16 %v48
  %v137 = vunpack.c.l.b16 %v49
  %v138 = vunpack.c.l.b16 %v50
  %v139 = vunpack.c.l.b16 %v51
  %v140 = vunpack.c.l.b16 %v52
  %v141 = vunpack.c.l.b16 %v53
  %v142 = vunpack.c.l.b16 %v54
  %v143 = vunpack.c.l.b16 %v55
  %v144 = vunpack.c.l.b16 %v56
  %v145 = vunpack.c.l.b16 %v57
  %v146 = vunpack.c.l.b16 %v58
  %v147 = vpack.c.b16 %v112, %v111
  %v148 = vpack.c.b16 %v114, %v113
  %v149 = vpack.c.b16 %v116, %v115
  %v150 = vpack.c.b16 %v118, %v117
  %v151 = vpack.c.b16 %v120, %v119
  %v152 = vpack.c.b16 %v122, %v121
  %v153 = vpack.c.b16 %v124, %v123
  %v154 = vpack.c.b16 %v126, %v125
  %v155 = vpack.c.b16 %v128, %v127
  %v156 = vpack.c.b16 %v130, %v129
  %v157 = vpack.c.b16 %v132, %v131
  %v158 = vpack.c.b16 %v134, %v133
  %v159 = vpack.c.b16 %v136, %v135
  %v160 = vpack.c.b16 %v138, %v137
  %v161 = vpack.c.b16 %v140, %v139
  %v162 = vpack.c.b16 %v142, %v141
  %v163 = vpack.c.b16 %v144, %v143
  %v164 = vpack.c.b16 %v146, %v145
  %vm183 = vcmask 261120
  %v185 = vsel %vm183, %v72, 0
  %187 = vmatprep.subr.bf16.mxu0 0
  %188 = vmatpush1.bf16.msra.mxu0 %v147
  %189 = vmatprep.subr.bf16.mxu0 0
  %190 = vmatpush1.bf16.msra.mxu0 %v148
  %191 = vmatprep.subr.bf16.mxu0 0
  %192 = vmatpush1.bf16.msra.mxu0 %v149
  %193 = vmatprep.subr.bf16.mxu0 0
  %194 = vmatpush1.bf16.msra.mxu0 %v150
  %195 = vmatprep.subr.bf16.mxu0 0
  %196 = vmatpush1.bf16.msra.mxu0 %v151
  %197 = vmatprep.subr.bf16.mxu0 0
  %198 = vmatpush1.bf16.msra.mxu0 %v152
  %199 = vmatprep.subr.bf16.mxu0 0
  %200 = vmatpush1.bf16.msra.mxu0 %v153
  %201 = vmatprep.subr.bf16.mxu0 0
  %202 = vmatpush1.bf16.msra.mxu0 %v154
  %203 = vmatprep.subr.bf16.mxu0 0
  %204 = vmatpush1.bf16.msra.mxu0 %v155
  %205 = vmatprep.subr.bf16.mxu0 0
  %206 = vmatpush1.bf16.msra.mxu0 %v156
  %207 = vmatprep.subr.bf16.mxu0 0
  %208 = vmatpush1.bf16.msra.mxu0 %v157
  %209 = vmatprep.subr.bf16.mxu0 0
  %210 = vmatpush1.bf16.msra.mxu0 %v158
  %211 = vmatprep.subr.bf16.mxu0 0
  %212 = vmatpush1.bf16.msra.mxu0 %v159
  %213 = vmatprep.subr.bf16.mxu0 0
  %214 = vmatpush1.bf16.msra.mxu0 %v160
  %215 = vmatprep.subr.bf16.mxu0 0
  %216 = vmatpush1.bf16.msra.mxu0 %v161
  %217 = vmatprep.subr.bf16.mxu0 0
  %218 = vmatpush1.bf16.msra.mxu0 %v162
  %219 = vmatprep.mubr.bf16.mxu0 %v71
  %220 = vmatmul.mubr.bf16.gmra.mrb[0].mxu0 %v70
  %v221 = vpop.f32.mrb[0].mxu0
  %v222 = vadd.f32 %v63, %v221
  %v223 = vpop.f32.mrb[0].mxu0
  %v224 = vpop.f32.mrb[0].mxu0
  %v225 = vpop.f32.mrb[0].mxu0
  %226 = vdwg.mxu0
  %227 = vmatprep.subr.bf16.mxu0 0
  %228 = vmatpush1.bf16.msra.mxu0 %v163
  %229 = vmatprep.subr.bf16.mxu0 0
  %230 = vmatpush1.bf16.msra.mxu0 %v164
  %231 = vmatprep.subr.bf16.mxu0 0
  %232 = vmatpush1.bf16.msra.mxu0 0
  %233 = vmatprep.subr.bf16.mxu0 0
  %234 = vmatpush1.bf16.msra.mxu0 0
  %235 = vmatprep.subr.bf16.mxu0 0
  %236 = vmatpush1.bf16.msra.mxu0 0
  %237 = vmatprep.subr.bf16.mxu0 0
  %238 = vmatpush1.bf16.msra.mxu0 0
  %239 = vmatprep.subr.bf16.mxu0 0
  %240 = vmatpush1.bf16.msra.mxu0 0
  %241 = vmatprep.subr.bf16.mxu0 0
  %242 = vmatpush1.bf16.msra.mxu0 0
  %243 = vmatprep.subr.bf16.mxu0 0
  %244 = vmatpush1.bf16.msra.mxu0 0
  %245 = vmatprep.subr.bf16.mxu0 0
  %246 = vmatpush1.bf16.msra.mxu0 0
  %247 = vmatprep.subr.bf16.mxu0 0
  %248 = vmatpush1.bf16.msra.mxu0 0
  %249 = vmatprep.subr.bf16.mxu0 0
  %250 = vmatpush1.bf16.msra.mxu0 0
  %251 = vmatprep.subr.bf16.mxu0 0
  %252 = vmatpush1.bf16.msra.mxu0 0
  %253 = vmatprep.subr.bf16.mxu0 0
  %254 = vmatpush1.bf16.msra.mxu0 0
  %255 = vmatprep.subr.bf16.mxu0 0
  %256 = vmatpush1.bf16.msra.mxu0 0
  %257 = vmatprep.subr.bf16.mxu0 0
  %258 = vmatpush1.bf16.msra.mxu0 0
  %259 = vmatprep.mubr.bf16.mxu0 0
  %260 = vmatmul.mubr.bf16.gmra.mrb[0].mxu0 %v185
  %v261 = vpop.f32.mrb[0].mxu0
  %v262 = vadd.f32 %v222, %v261
  %v263 = vpop.f32.mrb[0].mxu0
  %v264 = vpop.f32.mrb[0].mxu0
  %v265 = vpop.f32.mrb[0].mxu0
  %266 = vdwg.mxu0
  %267 = vadd.xlane.f32.xlu0 %v262
  %v268 = vpop.xlane.xlu0 %267
  %v269 = vmul.f32 %v262, %v262
  %270 = vadd.xlane.f32.xlu0 %v269
  %v271 = vpop.xlane.xlu0 %270
  %v272 = vmul.f32 %v268, 0.0078125
  %v273 = vmul.f32 %v271, 0.0078125
  %v274 = vmul.f32 %v272, %v272
  %v275 = vsub.f32 %v273, %v274
  %v276 = vmax.f32 %v275, 0.0
  %v277 = vld [vmem:[%s3] sm:$0xff]
  %v278 = vadd.f32 %v276, 1e-05
  %v279 = vrsqrt.pop %v278
  %v280 = vmul.f32 %v277, %v279
  %v281 = vsub.f32 %v262, %v272
  %283 = vset.pattern.permute.xlu0 0
  %284 = vperm.xlu0 %283, %v280
  %v285 = vpop.permute.xlu0 %284
  %v287 = vmul.f32 %v281, %v285
  %v288 = vld [vmem:[%s4] sm:$0xff]
  %290 = vset.pattern.permute.xlu0 0
  %291 = vperm.xlu0 %290, %v288
  %v292 = vpop.permute.xlu0 %291
  %v294 = vadd.f32 %v287, %v292
  %v295 = vpack.c.bf16 %v294, %v294
  %296 = vst [vmem:[%s5] sm:$0xf] %v295
  // Predicated region
  $region22: #{unet_forward.26} parent=0 // pred_check
    _
  $region23: #{unet_forward.26} parent=0 // pred_check_branch
    %298 = sbr.rel (0) target = $region25
  $region24: #{unet_forward.26} parent=0 // pred_region
    _
  $region25: #{unet_forward.26} parent=0 // pred_fallthru
    _
  // Predicated region
  $region26: #{unet_forward.26} parent=0 // pred_check
    _
  $region27: #{unet_forward.26} parent=0 // pred_check_branch
    %300 = sbr.rel (0) target = $region29
  $region28: #{unet_forward.26} parent=0 // pred_region
    _
  $region29: #{unet_forward.26} parent=0 // pred_fallthru
    _

// kernel: unet_forward.27
$region0: #{unet_forward.27}
  #allocation0 [shape = 'u32[]', space=smem, size = 0x4, offset = 0x4, fixed_abs, tag = 'smem constant byte address 0x4 - core index']
  #allocation1 [shape = 'u32[144,128]{1,0:T(1,128)}', space=vmem, size = 0x12000, scoped, tag = 'internal scratch']
  %s0 = inlined_call_operand.vmem [shape: bf16[32,64], index: 0, kind: input, shape index: {}]
  %s1 = inlined_call_operand.vmem [shape: bf16[64,256], index: 1, kind: input, shape index: {}]
  %s2 = inlined_call_operand.vmem [shape: bf16[32,256], index: 2, kind: output, shape index: {}]
  %s3 = sld [smem:[#allocation0]]
  $region18: #{unet_forward.27} parent=0
    _
  %s5 = ssub.s32 1, %s3
  %s6 = scalar_select 0, %s5, %s3
  // Predicated region
  $region2: #{unet_forward.27} parent=0 // pred_check
    _
  $region3: #{unet_forward.27} parent=0 // pred_check_branch
    %8 = sbr.rel (0) target = $region5
  $region4: #{unet_forward.27} parent=0 // pred_region
    _
  $region5: #{unet_forward.27} parent=0 // pred_fallthru
    _
  // Predicated region
  $region6: #{unet_forward.27} parent=0 // pred_check
    _
  $region7: #{unet_forward.27} parent=0 // pred_check_branch
    %10 = sbr.rel (0) target = $region9
  $region8: #{unet_forward.27} parent=0 // pred_region
    _
  $region9: #{unet_forward.27} parent=0 // pred_fallthru
    _
  %v12 = vld [vmem:[%s0] sm:$0xf]
  %v13 = vld [vmem:[%s0 + $0x4] sm:$0xf]
  %v14 = vld [vmem:[%s0 + $0x8] sm:$0xf]
  %v15 = vld [vmem:[%s0 + $0xc] sm:$0xf]
  %v16 = vmax.bf16 %v12, 0
  %v17 = vmax.bf16 %v13, 0
  %v18 = vmax.bf16 %v14, 0
  %v19 = vmax.bf16 %v15, 0
  %v20 = vld [vmem:[%s1] sm:$0xff]
  %v21 = vld [vmem:[%s1 + $0x8] sm:$0xff]
  %v22 = vld [vmem:[%s1 + $0x10] sm:$0xff]
  %v23 = vld [vmem:[%s1 + $0x18] sm:$0xff]
  %v24 = vld [vmem:[%s1 + $0x20] sm:$0xff]
  %v25 = vld [vmem:[%s1 + $0x28] sm:$0xff]
  %v26 = vld [vmem:[%s1 + $0x30] sm:$0xff]
  %v27 = vld [vmem:[%s1 + $0x38] sm:$0xff]
  %v32 = vunpack.c.l.b16 %v16
  %v33 = vunpack.c.l.b16 %v17
  %v34 = vunpack.c.l.b16 %v18
  %v35 = vunpack.c.l.b16 %v19
  %v36 = vpack.c.b16 %v33, %v32
  %v37 = vpack.c.b16 %v35, %v34
  %v46 = vunpack.c.l.b16 %v20
  %v47 = vunpack.c.h.b16 %v20
  %v48 = vunpack.c.l.b16 %v21
  %v49 = vunpack.c.h.b16 %v21
  %v50 = vunpack.c.l.b16 %v22
  %v51 = vunpack.c.h.b16 %v22
  %v52 = vunpack.c.l.b16 %v23
  %v53 = vunpack.c.h.b16 %v23
  %v54 = vunpack.c.l.b16 %v24
  %v55 = vunpack.c.h.b16 %v24
  %v56 = vunpack.c.l.b16 %v25
  %v57 = vunpack.c.h.b16 %v25
  %v58 = vunpack.c.l.b16 %v26
  %v59 = vunpack.c.h.b16 %v26
  %v60 = vunpack.c.l.b16 %v27
  %v61 = vunpack.c.h.b16 %v27
  %v62 = vpack.c.b16 %v48, %v46
  %v63 = vpack.c.b16 %v49, %v47
  %v64 = vpack.c.b16 %v52, %v50
  %v65 = vpack.c.b16 %v53, %v51
  %v66 = vpack.c.b16 %v56, %v54
  %v67 = vpack.c.b16 %v57, %v55
  %v68 = vpack.c.b16 %v60, %v58
  %v69 = vpack.c.b16 %v61, %v59
  %vm78 = vcmask 523264
  %v80 = vsel %vm78, %v36, 0
  %v83 = vsel %vm78, %v37, 0
  %85 = vmatprep.subr.bf16.mxu0 %v63
  %86 = vmatpush1.bf16.msra.mxu0 %v62
  %87 = vmatprep.subr.bf16.mxu0 %v65
  %88 = vmatpush1.bf16.msra.mxu0 %v64
  %89 = vmatprep.subr.bf16.mxu0 %v67
  %90 = vmatpush1.bf16.msra.mxu0 %v66
  %91 = vmatprep.subr.bf16.mxu0 %v69
  %92 = vmatpush1.bf16.msra.mxu0 %v68
  %93 = vmatprep.subr.bf16.mxu0 0
  %94 = vmatpush1.bf16.msra.mxu0 0
  %95 = vmatprep.subr.bf16.mxu0 0
  %96 = vmatpush1.bf16.msra.mxu0 0
  %97 = vmatprep.subr.bf16.mxu0 0
  %98 = vmatpush1.bf16.msra.mxu0 0
  %99 = vmatprep.subr.bf16.mxu0 0
  %100 = vmatpush1.bf16.msra.mxu0 0
  %101 = vmatprep.subr.bf16.mxu0 0
  %102 = vmatpush1.bf16.msra.mxu0 0
  %103 = vmatprep.subr.bf16.mxu0 0
  %104 = vmatpush1.bf16.msra.mxu0 0
  %105 = vmatprep.subr.bf16.mxu0 0
  %106 = vmatpush1.bf16.msra.mxu0 0
  %107 = vmatprep.subr.bf16.mxu0 0
  %108 = vmatpush1.bf16.msra.mxu0 0
  %109 = vmatprep.subr.bf16.mxu0 0
  %110 = vmatpush1.bf16.msra.mxu0 0
  %111 = vmatprep.subr.bf16.mxu0 0
  %112 = vmatpush1.bf16.msra.mxu0 0
  %113 = vmatprep.subr.bf16.mxu0 0
  %114 = vmatpush1.bf16.msra.mxu0 0
  %115 = vmatprep.subr.bf16.mxu0 0
  %116 = vmatpush1.bf16.msra.mxu0 0
  %117 = vmatprep.mubr.bf16.mxu0 0
  %118 = vmatmul.mubr.bf16.gmra.mrb[0].mxu0 %v80
  %v119 = vpop.f32.mrb[0].mxu0
  %v120 = vadd.f32 0.0, %v119
  %v121 = vpop.f32.mrb[0].mxu0
  %v122 = vadd.f32 0.0, %v121
  %v123 = vpop.f32.mrb[0].mxu0
  %v124 = vadd.f32 0.0, %v123
  %v125 = vpop.f32.mrb[0].mxu0
  %v126 = vadd.f32 0.0, %v125
  %127 = vmatprep.mubr.bf16.mxu0 0
  %128 = vmatmul.mubr.bf16.gmra.mrb[0].mxu0 %v83
  %v129 = vpop.f32.mrb[0].mxu0
  %v130 = vadd.f32 0.0, %v129
  %v131 = vpop.f32.mrb[0].mxu0
  %v132 = vadd.f32 0.0, %v131
  %v133 = vpop.f32.mrb[0].mxu0
  %v134 = vadd.f32 0.0, %v133
  %v135 = vpop.f32.mrb[0].mxu0
  %v136 = vadd.f32 0.0, %v135
  %137 = vdwg.mxu0
  %v138 = vpack.c.bf16 %v124, %v120
  %v139 = vpack.c.bf16 %v126, %v122
  %v140 = vpack.c.bf16 %v134, %v130
  %v141 = vpack.c.bf16 %v136, %v132
  %v146 = vunpack.c.l.b16 %v138
  %v147 = vunpack.c.l.b16 %v139
  %v148 = vunpack.c.h.b16 %v138
  %v149 = vunpack.c.h.b16 %v139
  %v150 = vunpack.c.l.b16 %v140
  %v151 = vunpack.c.l.b16 %v141
  %v152 = vunpack.c.h.b16 %v140
  %v153 = vunpack.c.h.b16 %v141
  %v154 = vpack.c.b16 %v147, %v146
  %v155 = vpack.c.b16 %v149, %v148
  %v156 = vpack.c.b16 %v151, %v150
  %v157 = vpack.c.b16 %v153, %v152
  %162 = vst [vmem:[%s2] sm:$0xff] %v154
  %163 = vst [vmem:[%s2 + $0x8] sm:$0xff] %v155
  %164 = vst [vmem:[%s2 + $0x10] sm:$0xff] %v156
  %165 = vst [vmem:[%s2 + $0x18] sm:$0xff] %v157
  // Predicated region
  $region10: #{unet_forward.27} parent=0 // pred_check
    _
  $region11: #{unet_forward.27} parent=0 // pred_check_branch
    %167 = sbr.rel (0) target = $region13
  $region12: #{unet_forward.27} parent=0 // pred_region
    _
  $region13: #{unet_forward.27} parent=0 // pred_fallthru
    _
  // Predicated region
  $region14: #{unet_forward.27} parent=0 // pred_check
    _
  $region15: #{unet_forward.27} parent=0 // pred_check_branch
    %169 = sbr.rel (0) target = $region17
  $region16: #{unet_forward.27} parent=0 // pred_region
    _
  $region17: #{unet_forward.27} parent=0 // pred_fallthru
    _

// kernel: unet_forward.28
$region0: #{unet_forward.28}
  #allocation0 [shape = 'u32[]', space=smem, size = 0x4, offset = 0x4, fixed_abs, tag = 'smem constant byte address 0x4 - core index']
  #allocation1 [shape = 'u32[144,128]{1,0:T(1,128)}', space=vmem, size = 0x12000, scoped, tag = 'internal scratch']
  %s0 = inlined_call_operand.vmem [shape: bf16[144,512], index: 0, kind: input, shape index: {}]
  %s1 = inlined_call_operand.vmem [shape: bf16[8,144], index: 1, kind: input, shape index: {}]
  %s2 = inlined_call_operand.vmem [shape: f32[8,1], index: 2, kind: input, shape index: {}]
  %s3 = inlined_call_operand.vmem [shape: f32[8,1], index: 3, kind: input, shape index: {}]
  %s4 = inlined_call_operand.vmem [shape: f32[8,1], index: 4, kind: input, shape index: {}]
  %s5 = inlined_call_operand.vmem [shape: bf16[8,512], index: 5, kind: output, shape index: {}]
  %s6 = sld [smem:[#allocation0]]
  $region30: #{unet_forward.28} parent=0
    _
  %s8 = ssub.s32 1, %s6
  %s9 = scalar_select 0, %s8, %s6
  // Predicated region
  $region2: #{unet_forward.28} parent=0 // pred_check
    _
  $region3: #{unet_forward.28} parent=0 // pred_check_branch
    %11 = sbr.rel (0) target = $region5
  $region4: #{unet_forward.28} parent=0 // pred_region
    _
  $region5: #{unet_forward.28} parent=0 // pred_fallthru
    _
  // Predicated region
  $region6: #{unet_forward.28} parent=0 // pred_check
    _
  $region7: #{unet_forward.28} parent=0 // pred_check_branch
    %13 = sbr.rel (0) target = $region9
  $region8: #{unet_forward.28} parent=0 // pred_region
    _
  $region9: #{unet_forward.28} parent=0 // pred_fallthru
    _
  // Predicated region
  $region10: #{unet_forward.28} parent=0 // pred_check
    _
  $region11: #{unet_forward.28} parent=0 // pred_check_branch
    %15 = sbr.rel (0) target = $region13
  $region12: #{unet_forward.28} parent=0 // pred_region
    _
  $region13: #{unet_forward.28} parent=0 // pred_fallthru
    _
  // Predicated region
  $region14: #{unet_forward.28} parent=0 // pred_check
    _
  $region15: #{unet_forward.28} parent=0 // pred_check_branch
    %17 = sbr.rel (0) target = $region17
  $region16: #{unet_forward.28} parent=0 // pred_region
    _
  $region17: #{unet_forward.28} parent=0 // pred_fallthru
    _
  // Predicated region
  $region18: #{unet_forward.28} parent=0 // pred_check
    _
  $region19: #{unet_forward.28} parent=0 // pred_check_branch
    %19 = sbr.rel (0) target = $region21
  $region20: #{unet_forward.28} parent=0 // pred_region
    _
  $region21: #{unet_forward.28} parent=0 // pred_fallthru
    _
  %v21 = vld [vmem:[%s1] sm:$0xff]
  %v22 = vld [vmem:[%s0] sm:$0xff]
  %v23 = vld [vmem:[%s0 + $0x8] sm:$0xff]
  %v24 = vld [vmem:[%s0 + $0x10] sm:$0xff]
  %v25 = vld [vmem:[%s0 + $0x18] sm:$0xff]
  %v26 = vld [vmem:[%s0 + $0x20] sm:$0xff]
  %v27 = vld [vmem:[%s0 + $0x28] sm:$0xff]
  %v28 = vld [vmem:[%s0 + $0x30] sm:$0xff]
  %v29 = vld [vmem:[%s0 + $0x38] sm:$0xff]
  %v30 = vld [vmem:[%s0 + $0x40] sm:$0xff]
  %v31 = vld [vmem:[%s0 + $0x48] sm:$0xff]
  %v32 = vld [vmem:[%s0 + $0x50] sm:$0xff]
  %v33 = vld [vmem:[%s0 + $0x58] sm:$0xff]
  %v34 = vld [vmem:[%s0 + $0x60] sm:$0xff]
  %v35 = vld [vmem:[%s0 + $0x68] sm:$0xff]
  %v36 = vld [vmem:[%s0 + $0x70] sm:$0xff]
  %v37 = vld [vmem:[%s0 + $0x78] sm:$0xff]
  %v38 = vld [vmem:[%s0 + $0x80] sm:$0xff]
  %v39 = vld [vmem:[%s0 + $0x88] sm:$0xff]
  %v40 = vld [vmem:[%s0 + $0x90] sm:$0xff]
  %v41 = vld [vmem:[%s0 + $0x98] sm:$0xff]
  %v42 = vld [vmem:[%s0 + $0xa0] sm:$0xff]
  %v43 = vld [vmem:[%s0 + $0xa8] sm:$0xff]
  %v44 = vld [vmem:[%s0 + $0xb0] sm:$0xff]
  %v45 = vld [vmem:[%s0 + $0xb8] sm:$0xff]
  %v46 = vld [vmem:[%s0 + $0xc0] sm:$0xff]
  %v47 = vld [vmem:[%s0 + $0xc8] sm:$0xff]
  %v48 = vld [vmem:[%s0 + $0xd0] sm:$0xff]
  %v49 = vld [vmem:[%s0 + $0xd8] sm:$0xff]
  %v50 = vld [vmem:[%s0 + $0xe0] sm:$0xff]
  %v51 = vld [vmem:[%s0 + $0xe8] sm:$0xff]
  %v52 = vld [vmem:[%s0 + $0xf0] sm:$0xff]
  %v53 = vld [vmem:[%s0 + $0xf8] sm:$0xff]
  %v54 = vld [vmem:[%s0 + $0x100] sm:$0xff]
  %v55 = vld [vmem:[%s0 + $0x108] sm:$0xff]
  %v56 = vld [vmem:[%s0 + $0x110] sm:$0xff]
  %v57 = vld [vmem:[%s0 + $0x118] sm:$0xff]
  %v58 = vld [vmem:[%s2] sm:$0xff]
  %60 = vset.pattern.permute.xlu0 0
  %61 = vperm.xlu0 %60, %v58
  %v62 = vpop.permute.xlu0 %61
  %v65 = vunpack.c.l.b16 %v21
  %v66 = vunpack.c.h.b16 %v21
  %v67 = vpack.c.b16 %v65, %v65
  %v68 = vpack.c.b16 %v66, %v66
  %v106 = vunpack.c.l.b16 %v22
  %v107 = vunpack.c.h.b16 %v22
  %v108 = vunpack.c.l.b16 %v23
  %v109 = vunpack.c.h.b16 %v23
  %v110 = vunpack.c.l.b16 %v24
  %v111 = vunpack.c.h.b16 %v24
  %v112 = vunpack.c.l.b16 %v25
  %v113 = vunpack.c.h.b16 %v25
  %v114 = vunpack.c.l.b16 %v26
  %v115 = vunpack.c.h.b16 %v26
  %v116 = vunpack.c.l.b16 %v27
  %v117 = vunpack.c.h.b16 %v27
  %v118 = vunpack.c.l.b16 %v28
  %v119 = vunpack.c.h.b16 %v28
  %v120 = vunpack.c.l.b16 %v29
  %v121 = vunpack.c.h.b16 %v29
  %v122 = vunpack.c.l.b16 %v30
  %v123 = vunpack.c.h.b16 %v30
  %v124 = vunpack.c.l.b16 %v31
  %v125 = vunpack.c.h.b16 %v31
  %v126 = vunpack.c.l.b16 %v32
  %v127 = vunpack.c.h.b16 %v32
  %v128 = vunpack.c.l.b16 %v33
  %v129 = vunpack.c.h.b16 %v33
  %v130 = vunpack.c.l.b16 %v34
  %v131 = vunpack.c.h.b16 %v34
  %v132 = vunpack.c.l.b16 %v35
  %v133 = vunpack.c.h.b16 %v35
  %v134 = vunpack.c.l.b16 %v36
  %v135 = vunpack.c.h.b16 %v36
  %v136 = vunpack.c.l.b16 %v37
  %v137 = vunpack.c.h.b16 %v37
  %v138 = vunpack.c.l.b16 %v38
  %v139 = vunpack.c.h.b16 %v38
  %v140 = vunpack.c.l.b16 %v39
  %v141 = vunpack.c.h.b16 %v39
  %v142 = vunpack.c.l.b16 %v40
  %v143 = vunpack.c.h.b16 %v40
  %v144 = vunpack.c.l.b16 %v41
  %v145 = vunpack.c.h.b16 %v41
  %v146 = vunpack.c.l.b16 %v42
  %v147 = vunpack.c.h.b16 %v42
  %v148 = vunpack.c.l.b16 %v43
  %v149 = vunpack.c.h.b16 %v43
  %v150 = vunpack.c.l.b16 %v44
  %v151 = vunpack.c.h.b16 %v44
  %v152 = vunpack.c.l.b16 %v45
  %v153 = vunpack.c.h.b16 %v45
  %v154 = vunpack.c.l.b16 %v46
  %v155 = vunpack.c.h.b16 %v46
  %v156 = vunpack.c.l.b16 %v47
  %v157 = vunpack.c.h.b16 %v47
  %v158 = vunpack.c.l.b16 %v48
  %v159 = vunpack.c.h.b16 %v48
  %v160 = vunpack.c.l.b16 %v49
  %v161 = vunpack.c.h.b16 %v49
  %v162 = vunpack.c.l.b16 %v50
  %v163 = vunpack.c.h.b16 %v50
  %v164 = vunpack.c.l.b16 %v51
  %v165 = vunpack.c.h.b16 %v51
  %v166 = vunpack.c.l.b16 %v52
  %v167 = vunpack.c.h.b16 %v52
  %v168 = vunpack.c.l.b16 %v53
  %v169 = vunpack.c.h.b16 %v53
  %v170 = vunpack.c.l.b16 %v54
  %v171 = vunpack.c.h.b16 %v54
  %v172 = vunpack.c.l.b16 %v55
  %v173 = vunpack.c.h.b16 %v55
  %v174 = vunpack.c.l.b16 %v56
  %v175 = vunpack.c.h.b16 %v56
  %v176 = vunpack.c.l.b16 %v57
  %v177 = vunpack.c.h.b16 %v57
  %v178 = vpack.c.b16 %v110, %v106
  %v179 = vpack.c.b16 %v111, %v107
  %v180 = vpack.c.b16 %v112, %v108
  %v181 = vpack.c.b16 %v113, %v109
  %v182 = vpack.c.b16 %v118, %v114
  %v183 = vpack.c.b16 %v119, %v115
  %v184 = vpack.c.b16 %v120, %v116
  %v185 = vpack.c.b16 %v121, %v117
  %v186 = vpack.c.b16 %v126, %v122
  %v187 = vpack.c.b16 %v127, %v123
  %v188 = vpack.c.b16 %v128, %v124
  %v189 = vpack.c.b16 %v129, %v125
  %v190 = vpack.c.b16 %v134, %v130
  %v191 = vpack.c.b16 %v135, %v131
  %v192 = vpack.c.b16 %v136, %v132
  %v193 = vpack.c.b16 %v137, %v133
  %v194 = vpack.c.b16 %v142, %v138
  %v195 = vpack.c.b16 %v143, %v139
  %v196 = vpack.c.b16 %v144, %v140
  %v197 = vpack.c.b16 %v145, %v141
  %v198 = vpack.c.b16 %v150, %v146
  %v199 = vpack.c.b16 %v151, %v147
  %v200 = vpack.c.b16 %v152, %v148
  %v201 = vpack.c.b16 %v153, %v149
  %v202 = vpack.c.b16 %v158, %v154
  %v203 = vpack.c.b16 %v159, %v155
  %v204 = vpack.c.b16 %v160, %v156
  %v205 = vpack.c.b16 %v161, %v157
  %v206 = vpack.c.b16 %v166, %v162
  %v207 = vpack.c.b16 %v167, %v163
  %v208 = vpack.c.b16 %v168, %v164
  %v209 = vpack.c.b16 %v169, %v165
  %v210 = vpack.c.b16 %v174, %v170
  %v211 = vpack.c.b16 %v175, %v171
  %v212 = vpack.c.b16 %v176, %v172
  %v213 = vpack.c.b16 %v177, %v173
  %vm250 = vcmask 130048
  %v252 = vsel %vm250, %v68, 0
  %254 = vmatprep.subr.bf16.mxu0 %v179
  %255 = vmatpush1.bf16.msra.mxu0 %v178
  %256 = vmatprep.subr.bf16.mxu0 %v183
  %257 = vmatpush1.bf16.msra.mxu0 %v182
  %258 = vmatprep.subr.bf16.mxu0 %v187
  %259 = vmatpush1.bf16.msra.mxu0 %v186
  %260 = vmatprep.subr.bf16.mxu0 %v191
  %261 = vmatpush1.bf16.msra.mxu0 %v190
  %262 = vmatprep.subr.bf16.mxu0 %v195
  %263 = vmatpush1.bf16.msra.mxu0 %v194
  %264 = vmatprep.subr.bf16.mxu0 %v199
  %265 = vmatpush1.bf16.msra.mxu0 %v198
  %266 = vmatprep.subr.bf16.mxu0 %v203
  %267 = vmatpush1.bf16.msra.mxu0 %v202
  %268 = vmatprep.subr.bf16.mxu0 %v207
  %269 = vmatpush1.bf16.msra.mxu0 %v206
  %270 = vmatprep.subr.bf16.mxu0 %v211
  %271 = vmatpush1.bf16.msra.mxu0 %v210
  %272 = vmatprep.subr.bf16.mxu0 0
  %273 = vmatpush1.bf16.msra.mxu0 0
  %274 = vmatprep.subr.bf16.mxu0 0
  %275 = vmatpush1.bf16.msra.mxu0 0
  %276 = vmatprep.subr.bf16.mxu0 0
  %277 = vmatpush1.bf16.msra.mxu0 0
  %278 = vmatprep.subr.bf16.mxu0 0
  %279 = vmatpush1.bf16.msra.mxu0 0
  %280 = vmatprep.subr.bf16.mxu0 0
  %281 = vmatpush1.bf16.msra.mxu0 0
  %282 = vmatprep.subr.bf16.mxu0 0
  %283 = vmatpush1.bf16.msra.mxu0 0
  %284 = vmatprep.subr.bf16.mxu0 0
  %285 = vmatpush1.bf16.msra.mxu0 0
  %286 = vmatprep.mubr.bf16.mxu0 %v252
  %287 = vmatmul.mubr.bf16.gmra.mrb[0].mxu0 %v67
  %v288 = vpop.f32.mrb[0].mxu0
  %v289 = vadd.f32 %v62, %v288
  %v290 = vpop.f32.mrb[0].mxu0
  %v291 = vadd.f32 %v62, %v290
  %v292 = vpop.f32.mrb[0].mxu0
  %v293 = vpop.f32.mrb[0].mxu0
  %294 = vdwg.mxu0
  %295 = vmatprep.subr.bf16.mxu0 %v181
  %296 = vmatpush1.bf16.msra.mxu0 %v180
  %297 = vmatprep.subr.bf16.mxu0 %v185
  %298 = vmatpush1.bf16.msra.mxu0 %v184
  %299 = vmatprep.subr.bf16.mxu0 %v189
  %300 = vmatpush1.bf16.msra.mxu0 %v188
  %301 = vmatprep.subr.bf16.mxu0 %v193
  %302 = vmatpush1.bf16.msra.mxu0 %v192
  %303 = vmatprep.subr.bf16.mxu0 %v197
  %304 = vmatpush1.bf16.msra.mxu0 %v196
  %305 = vmatprep.subr.bf16.mxu0 %v201
  %306 = vmatpush1.bf16.msra.mxu0 %v200
  %307 = vmatprep.subr.bf16.mxu0 %v205
  %308 = vmatpush1.bf16.msra.mxu0 %v204
  %309 = vmatprep.subr.bf16.mxu0 %v209
  %310 = vmatpush1.bf16.msra.mxu0 %v208
  %311 = vmatprep.subr.bf16.mxu0 %v213
  %312 = vmatpush1.bf16.msra.mxu0 %v212
  %313 = vmatprep.subr.bf16.mxu0 0
  %314 = vmatpush1.bf16.msra.mxu0 0
  %315 = vmatprep.subr.bf16.mxu0 0
  %316 = vmatpush1.bf16.msra.mxu0 0
  %317 = vmatprep.subr.bf16.mxu0 0
  %318 = vmatpush1.bf16.msra.mxu0 0
  %319 = vmatprep.subr.bf16.mxu0 0
  %320 = vmatpush1.bf16.msra.mxu0 0
  %321 = vmatprep.subr.bf16.mxu0 0
  %322 = vmatpush1.bf16.msra.mxu0 0
  %323 = vmatprep.subr.bf16.mxu0 0
  %324 = vmatpush1.bf16.msra.mxu0 0
  %325 = vmatprep.subr.bf16.mxu0 0
  %326 = vmatpush1.bf16.msra.mxu0 0
  %327 = vmatprep.mubr.bf16.mxu0 %v252
  %328 = vmatmul.mubr.bf16.gmra.mrb[0].mxu0 %v67
  %v329 = vpop.f32.mrb[0].mxu0
  %v330 = vadd.f32 %v62, %v329
  %v331 = vpop.f32.mrb[0].mxu0
  %v332 = vadd.f32 %v62, %v331
  %v333 = vpop.f32.mrb[0].mxu0
  %v334 = vpop.f32.mrb[0].mxu0
  %335 = vdwg.mxu0
  %v336 = vadd.f32 %v289, %v291
  %v337 = vadd.f32 %v336, %v330
  %v338 = vadd.f32 %v337, %v332
  %339 = vadd.xlane.f32.xlu0 %v338
  %v340 = vpop.xlane.xlu0 %339
  %v341 = vmul.f32 %v289, %v289
  %v342 = vmul.f32 %v291, %v291
  %v343 = vmul.f32 %v330, %v330
  %v344 = vmul.f32 %v332, %v332
  %v345 = vadd.f32 %v341, %v342
  %v346 = vadd.f32 %v345, %v343
  %v347 = vadd.f32 %v346, %v344
  %348 = vadd.xlane.f32.xlu0 %v347
  %v349 = vpop.xlane.xlu0 %348
  %v350 = vmul.f32 %v340, 0.001953125
  %v351 = vmul.f32 %v349, 0.001953125
  %v352 = vmul.f32 %v350, %v350
  %v353 = vsub.f32 %v351, %v352
  %v354 = vmax.f32 %v353, 0.0
  %v355 = vld [vmem:[%s3] sm:$0xff]
  %v356 = vadd.f32 %v354, 1e-05
  %v357 = vrsqrt.pop %v356
  %v358 = vmul.f32 %v355, %v357
  %v359 = vsub.f32 %v289, %v350
  %v360 = vsub.f32 %v291, %v350
  %v361 = vsub.f32 %v330, %v350
  %v362 = vsub.f32 %v332, %v350
  %364 = vset.pattern.permute.xlu0 0
  %365 = vperm.xlu0 %364, %v358
  %v366 = vpop.permute.xlu0 %365
  %v368 = vmul.f32 %v359, %v366
  %v369 = vmul.f32 %v360, %v366
  %v370 = vmul.f32 %v361, %v366
  %v371 = vmul.f32 %v362, %v366
  %v372 = vld [vmem:[%s4] sm:$0xff]
  %374 = vset.pattern.permute.xlu0 0
  %375 = vperm.xlu0 %374, %v372
  %v376 = vpop.permute.xlu0 %375
  %v378 = vadd.f32 %v368, %v376
  %v379 = vadd.f32 %v369, %v376
  %v380 = vadd.f32 %v370, %v376
  %v381 = vadd.f32 %v371, %v376
  %v382 = vpack.c.bf16 %v378, %v378
  %v383 = vpack.c.bf16 %v379, %v379
  %v384 = vpack.c.bf16 %v380, %v380
  %v385 = vpack.c.bf16 %v381, %v381
  %v390 = vunpack.c.l.b16 %v382
  %v391 = vunpack.c.l.b16 %v383
  %v392 = vunpack.c.l.b16 %v384
  %v393 = vunpack.c.l.b16 %v385
  %v394 = vpack.c.b16 %v391, %v390
  %v395 = vpack.c.b16 %v393, %v392
  %398 = vst [vmem:[%s5] sm:$0xff] %v394
  %399 = vst [vmem:[%s5 + $0x8] sm:$0xff] %v395
  // Predicated region
  $region22: #{unet_forward.28} parent=0 // pred_check
    _
  $region23: #{unet_forward.28} parent=0 // pred_check_branch
    %401 = sbr.rel (0) target = $region25
  $region24: #{unet_forward.28} parent=0 // pred_region
    _
  $region25: #{unet_forward.28} parent=0 // pred_fallthru
    _
  // Predicated region
  $region26: #{unet_forward.28} parent=0 // pred_check
    _
  $region27: #{unet_forward.28} parent=0 // pred_check_branch
    %403 = sbr.rel (0) target = $region29
  $region28: #{unet_forward.28} parent=0 // pred_region
    _
  $region29: #{unet_forward.28} parent=0 // pred_fallthru
    _

// kernel: unet_forward.29
$region0: #{unet_forward.29}
  #allocation0 [shape = 'u32[]', space=smem, size = 0x4, offset = 0x4, fixed_abs, tag = 'smem constant byte address 0x4 - core index']
  #allocation1 [shape = 'u32[144,128]{1,0:T(1,128)}', space=vmem, size = 0x12000, scoped, tag = 'internal scratch']
  %s0 = inlined_call_operand.vmem [shape: bf16[72,512], index: 0, kind: input, shape index: {}]
  %s1 = inlined_call_operand.vmem [shape: bf16[8,72], index: 1, kind: input, shape index: {}]
  %s2 = inlined_call_operand.vmem [shape: f32[8,1], index: 2, kind: input, shape index: {}]
  %s3 = inlined_call_operand.vmem [shape: bf16[8,512], index: 3, kind: output, shape index: {}]
  %s4 = sld [smem:[#allocation0]]
  $region83: #{unet_forward.29} parent=0
    _
  %s6 = ssub.s32 1, %s4
  %s7 = scalar_select 0, %s6, %s4
  $region1: #{unet_forward.29} parent=0
    #allocation2 [shape = 'u8[73728]{0}', space=vmem, size = 0x12000, scoped, tag = 'input window, operand 0']
    loop: start=0, step=1, limit=4
    $region2: #{unet_forward.29} parent=1 // loop_pre_header
      _
    $region3: #{unet_forward.29} parent=1 // loop_header
      %s9 = sphi 0, %s13
      %p10 = scmp.ge.s32.totalorder %s9, 4
      %s19 = sphi 0, %s21
      %s22 = sphi 0, %s19
      %s23 = sphi 0, %s22
      %s39 = sphi 0, %s23
      %s43 = sphi 0, %s43
      %s45 = sphi 0, %s43
      %s46 = sphi 0, %s45
      %s60 = sphi 0, %s46
      %s64 = sphi 0, %s64
      %s66 = sphi 0, %s64
      %s67 = sphi 0, %s66
      %s81 = sphi 0, %s67
      %s87 = sphi 0, %s89
      %s90 = sphi 0, %s87
      %s91 = sphi 0, %s90
      %s107 = sphi 0, %s91
    $region4: #{unet_forward.29} parent=1 // loop_header_branch
      %12 = sbr.rel (%p10) target = $region8
    $region5: #{unet_forward.29} parent=1 // loop_body
      %s14 = ssub.s32 %s9, 1
      %s15 = ssub.s32 %s9, 2
      %s16 = sadd.s32 %s9, 1
      %s17 = ssub.s32 %s9, %s16
      %p18 = scmp.eq.s32.totalorder %s17, 0
      %s20 = sadd.s32 %s19, 1
      %s21 = scalar_select %p18, %s19, %s20
      %p24 = pneg %p18
      %p25 = scmp.eq.s32.totalorder %s9, 1
      %p26 = por %p24, %p25
      %p27 = scmp.ne.s32.totalorder %s19, %s22
      %p28 = scmp.eq.s32.totalorder %s9, 0
      %p29 = por %p27, %p28
      %p30 = scmp.ne.s32.totalorder %s19, %s22
      %p31 = scmp.eq.s32.totalorder %s14, 1
      %p32 = por %p30, %p31
      %p33 = scmp.ne.s32.totalorder %s22, %s23
      %p34 = scmp.eq.s32.totalorder %s14, 0
      %p35 = por %p33, %p34
      %p36 = scmp.ne.s32.totalorder %s22, %s23
      %p37 = scmp.eq.s32.totalorder %s15, 1
      %p38 = por %p36, %p37
      %p40 = scmp.ne.s32.totalorder %s23, %s39
      %p41 = scmp.eq.s32.totalorder %s15, 0
      %p42 = por %p40, %p41
      %s44 = sadd.s32 %s43, 1
      %p47 = scmp.eq.s32.totalorder %s9, 1
      %p48 = scmp.ne.s32.totalorder %s43, %s45
      %p49 = scmp.eq.s32.totalorder %s9, 0
      %p50 = por %p48, %p49
      %p51 = scmp.ne.s32.totalorder %s43, %s45
      %p52 = scmp.eq.s32.totalorder %s14, 1
      %p53 = por %p51, %p52
      %p54 = scmp.ne.s32.totalorder %s45, %s46
      %p55 = scmp.eq.s32.totalorder %s14, 0
      %p56 = por %p54, %p55
      %p57 = scmp.ne.s32.totalorder %s45, %s46
      %p58 = scmp.eq.s32.totalorder %s15, 1
      %p59 = por %p57, %p58
      %p61 = scmp.ne.s32.totalorder %s46, %s60
      %p62 = scmp.eq.s32.totalorder %s15, 0
      %p63 = por %p61, %p62
      %s65 = sadd.s32 %s64, 1
      %p68 = scmp.eq.s32.totalorder %s9, 1
      %p69 = scmp.ne.s32.totalorder %s64, %s66
      %p70 = scmp.eq.s32.totalorder %s9, 0
      %p71 = por %p69, %p70
      %p72 = scmp.ne.s32.totalorder %s64, %s66
      %p73 = scmp.eq.s32.totalorder %s14, 1
      %p74 = por %p72, %p73
      %p75 = scmp.ne.s32.totalorder %s66, %s67
      %p76 = scmp.eq.s32.totalorder %s14, 0
      %p77 = por %p75, %p76
      %p78 = scmp.ne.s32.totalorder %s66, %s67
      %p79 = scmp.eq.s32.totalorder %s15, 1
      %p80 = por %p78, %p79
      %p82 = scmp.ne.s32.totalorder %s67, %s81
      %p83 = scmp.eq.s32.totalorder %s15, 0
      %p84 = por %p82, %p83
      %s85 = ssub.s32 %s9, %s16
      %p86 = scmp.eq.s32.totalorder %s85, 0
      %s88 = sadd.s32 %s87, 1
      %s89 = scalar_select %p86, %s87, %s88
      %p92 = pneg %p86
      %p93 = scmp.eq.s32.totalorder %s9, 1
      %p94 = por %p92, %p93
      %p95 = scmp.ne.s32.totalorder %s87, %s90
      %p96 = scmp.eq.s32.totalorder %s9, 0
      %p97 = por %p95, %p96
      %p98 = scmp.ne.s32.totalorder %s87, %s90
      %p99 = scmp.eq.s32.totalorder %s14, 1
      %p100 = por %p98, %p99
      %p101 = scmp.ne.s32.totalorder %s90, %s91
      %p102 = scmp.eq.s32.totalorder %s14, 0
      %p103 = por %p101, %p102
      %p104 = scmp.ne.s32.totalorder %s90, %s91
      %p105 = scmp.eq.s32.totalorder %s15, 1
      %p106 = por %p104, %p105
      %p108 = scmp.ne.s32.totalorder %s91, %s107
      %p109 = scmp.eq.s32.totalorder %s15, 0
      %p110 = por %p108, %p109
      %p111 = scmp.le.s32.totalorder 1, %s9
      %p112 = scmp.lt.s32.totalorder %s9, 3
      %p113 = pnand %p111, %p112
      %p114 = pneg %p113
      // Predicated region
      $region9: #{unet_forward.29} parent=5 // pred_check
        _
      $region10: #{unet_forward.29} parent=5 // pred_check_branch
        %116 = sbr.rel (%p113) target = $region12
      $region11: #{unet_forward.29} parent=5 // pred_region
        %s117 = ssub.s32 %s9, 1
        // Predicated region
        $region13: #{unet_forward.29} parent=11 // pred_check
          %p118 = pneg %p56
        $region14: #{unet_forward.29} parent=11 // pred_check_branch
          %120 = sbr.rel (%p118) target = $region16
        $region15: #{unet_forward.29} parent=11 // pred_region
          _
        $region16: #{unet_forward.29} parent=11 // pred_fallthru
          _
        // Predicated region
        $region17: #{unet_forward.29} parent=11 // pred_check
          %p121 = pneg %p77
        $region18: #{unet_forward.29} parent=11 // pred_check_branch
          %123 = sbr.rel (%p121) target = $region20
        $region19: #{unet_forward.29} parent=11 // pred_region
          _
        $region20: #{unet_forward.29} parent=11 // pred_fallthru
          _
      $region12: #{unet_forward.29} parent=5 // pred_fallthru
        _
      %p124 = scmp.lt.s32.totalorder %s9, 2
      // Predicated region
      $region21: #{unet_forward.29} parent=5 // pred_check
        %p125 = pneg %p124
      $region22: #{unet_forward.29} parent=5 // pred_check_branch
        %127 = sbr.rel (%p125) target = $region24
      $region23: #{unet_forward.29} parent=5 // pred_region
        // Predicated region
        $region25: #{unet_forward.29} parent=23 // pred_check
          %p128 = pneg %p29
        $region26: #{unet_forward.29} parent=23 // pred_check_branch
          %130 = sbr.rel (%p128) target = $region28
        $region27: #{unet_forward.29} parent=23 // pred_region
          %s131 = sand.u32 %s19, 1
          %s132 = sand.u32 %s19, 1
          %s133 = smul.addr %s132, 72
          %s134 = scalar_lea.vmem [#allocation2], %s133
          %s135 = smul.u32 2, %s9
          %s136 = smul.addr %s135, 4
          %s137 = scalar_lea.vmem %s0, %s136
          // Predicated region
          $region29: #{unet_forward.29} parent=27 // pred_check
            _
          $region30: #{unet_forward.29} parent=27 // pred_check_branch
            %139 = sbr.rel (0) target = $region32
          $region31: #{unet_forward.29} parent=27 // pred_region
            // Predicated region
            $region33: #{unet_forward.29} parent=31 // pred_check
              _
            $region34: #{unet_forward.29} parent=31 // pred_check_branch
              %141 = sbr.rel (0) target = $region36
            $region35: #{unet_forward.29} parent=31 // pred_region
              // Predicated region
              $region48: #{unet_forward.29} parent=35 // pred_check
                _
              $region49: #{unet_forward.29} parent=35 // pred_check_branch
                %172 = sbr.rel (0) target = $region51
              $region50: #{unet_forward.29} parent=35 // pred_region
                loop: start=0, step=1, limit=1
                $region52: #{unet_forward.29} parent=50 // loop_pre_header
                  _
                $region53: #{unet_forward.29} parent=50 // loop_header
                  %s174 = sphi 0, %s178
                  %p175 = scmp.ge.s32.totalorder %s174, 1
                  %s179 = sphi %s137, %s137
                  %s180 = sphi %s134, %s134
                $region54: #{unet_forward.29} parent=50 // loop_header_branch
                  %177 = sbr.rel (%p175) target = $region58
                $region55: #{unet_forward.29} parent=50 // loop_body
                  %v181 = vld [vmem:[%s179] sm:$0xff]
                  %182 = vst [vmem:[%s180] sm:$0xff] %v181
                  %v183 = vld [vmem:[%s179 + $0x10] sm:$0xff]
                  %184 = vst [vmem:[%s180 + $0x8] sm:$0xff] %v183
                  %v185 = vld [vmem:[%s179 + $0x20] sm:$0xff]
                  %186 = vst [vmem:[%s180 + $0x10] sm:$0xff] %v185
                  %v187 = vld [vmem:[%s179 + $0x30] sm:$0xff]
                  %188 = vst [vmem:[%s180 + $0x18] sm:$0xff] %v187
                  %v189 = vld [vmem:[%s179 + $0x40] sm:$0xff]
                  %190 = vst [vmem:[%s180 + $0x20] sm:$0xff] %v189
                  %v191 = vld [vmem:[%s179 + $0x50] sm:$0xff]
                  %192 = vst [vmem:[%s180 + $0x28] sm:$0xff] %v191
                  %v193 = vld [vmem:[%s179 + $0x60] sm:$0xff]
                  %194 = vst [vmem:[%s180 + $0x30] sm:$0xff] %v193
                  %v195 = vld [vmem:[%s179 + $0x70] sm:$0xff]
                  %196 = vst [vmem:[%s180 + $0x38] sm:$0xff] %v195
                  %v197 = vld [vmem:[%s179 + $0x80] sm:$0xff]
                  %198 = vst [vmem:[%s180 + $0x40] sm:$0xff] %v197
                $region56: #{unet_forward.29} parent=50 // loop_footer
                  %s178 = sadd.s32 1, %s174
                $region57: #{unet_forward.29} parent=50 // loop_footer_branch
                  %173 = sbr.rel target = $region53
                $region58: #{unet_forward.29} parent=50 // loop_exit
                  _
              $region51: #{unet_forward.29} parent=35 // pred_fallthru
                _
              // Predicated region
              $region59: #{unet_forward.29} parent=35 // pred_check
                _
              $region60: #{unet_forward.29} parent=35 // pred_check_branch
                %200 = sbr.rel target = $region62
              $region61: #{unet_forward.29} parent=35 // pred_region
                _
              $region62: #{unet_forward.29} parent=35 // pred_fallthru
                _
            $region36: #{unet_forward.29} parent=31 // pred_fallthru
              _
            // Predicated region
            $region37: #{unet_forward.29} parent=31 // pred_check
              _
            $region38: #{unet_forward.29} parent=31 // pred_check_branch
              %143 = sbr.rel target = $region40
            $region39: #{unet_forward.29} parent=31 // pred_region
              loop: start=0, step=1, limit=1
              $region41: #{unet_forward.29} parent=39 // loop_pre_header
                _
              $region42: #{unet_forward.29} parent=39 // loop_header
                %s146 = sphi 0, %s150
                %p147 = scmp.ge.s32.totalorder %s146, 1
                %s151 = sphi %s137, %s137
                %s152 = sphi %s134, %s134
              $region43: #{unet_forward.29} parent=39 // loop_header_branch
                %149 = sbr.rel (%p147) target = $region47
              $region44: #{unet_forward.29} parent=39 // loop_body
                %v153 = vld [vmem:[%s151] sm:$0xff]
                %154 = vst [vmem:[%s152] sm:$0xff] %v153
                %v155 = vld [vmem:[%s151 + $0x10] sm:$0xff]
                %156 = vst [vmem:[%s152 + $0x8] sm:$0xff] %v155
                %v157 = vld [vmem:[%s151 + $0x20] sm:$0xff]
                %158 = vst [vmem:[%s152 + $0x10] sm:$0xff] %v157
                %v159 = vld [vmem:[%s151 + $0x30] sm:$0xff]
                %160 = vst [vmem:[%s152 + $0x18] sm:$0xff] %v159
                %v161 = vld [vmem:[%s151 + $0x40] sm:$0xff]
                %162 = vst [vmem:[%s152 + $0x20] sm:$0xff] %v161
                %v163 = vld [vmem:[%s151 + $0x50] sm:$0xff]
                %164 = vst [vmem:[%s152 + $0x28] sm:$0xff] %v163
                %v165 = vld [vmem:[%s151 + $0x60] sm:$0xff]
                %166 = vst [vmem:[%s152 + $0x30] sm:$0xff] %v165
                %v167 = vld [vmem:[%s151 + $0x70] sm:$0xff]
                %168 = vst [vmem:[%s152 + $0x38] sm:$0xff] %v167
                %v169 = vld [vmem:[%s151 + $0x80] sm:$0xff]
                %170 = vst [vmem:[%s152 + $0x40] sm:$0xff] %v169
              $region45: #{unet_forward.29} parent=39 // loop_footer
                %s150 = sadd.s32 1, %s146
              $region46: #{unet_forward.29} parent=39 // loop_footer_branch
                %145 = sbr.rel target = $region42
              $region47: #{unet_forward.29} parent=39 // loop_exit
                _
            $region40: #{unet_forward.29} parent=31 // pred_fallthru
              _
          $region32: #{unet_forward.29} parent=27 // pred_fallthru
            _
          %201 = vnop
        $region28: #{unet_forward.29} parent=23 // pred_fallthru
          _
      $region24: #{unet_forward.29} parent=5 // pred_fallthru
        _
      %p202 = scmp.le.s32.totalorder 1, %s9
      %p203 = scmp.lt.s32.totalorder %s9, 3
      %p204 = pnand %p202, %p203
      %p205 = pneg %p204
      // Predicated region
      $region63: #{unet_forward.29} parent=5 // pred_check
        _
      $region64: #{unet_forward.29} parent=5 // pred_check_branch
        %207 = sbr.rel (%p204) target = $region66
      $region65: #{unet_forward.29} parent=5 // pred_region
        %s208 = ssub.s32 %s9, 1
        %s209 = sand.u32 %s22, 1
        %s210 = sand.u32 %s22, 1
        %s211 = smul.addr %s210, 72
        %s212 = scalar_lea.vmem [#allocation2], %s211
        // Predicated region
        $region67: #{unet_forward.29} parent=65 // pred_check
          %p213 = pneg %p35
        $region68: #{unet_forward.29} parent=65 // pred_check_branch
          %215 = sbr.rel (%p213) target = $region70
        $region69: #{unet_forward.29} parent=65 // pred_region
          _
        $region70: #{unet_forward.29} parent=65 // pred_fallthru
          _
        %s216 = sand.u32 %s22, 1
        %s217 = sand.u32 %s22, 1
        %s218 = smul.addr %s217, 72
        %s219 = scalar_lea.vmem [#allocation2], %s218
        %p220 = pneg %p35
        %p221 = pneg %p32
        %p222 = pneg %p56
        %p223 = pneg %p53
        %p224 = pneg %p77
        %p225 = pneg %p74
        %p226 = pneg %p103
        %p227 = pneg %p100
        %s228 = smul.u32 2, %s14
        %p229 = scmp.lt.s32.totalorder %s228, 3
        %s230 = scalar_select %p229, %s228, 3
        %s231 = smul.addr %s230, 4
        %s232 = scalar_lea.vmem %s3, %s231
        %s233 = smul.u32 2, %s14
        %s234 = smul.u32 2, %s14
        %p235 = scmp.lt.s32.totalorder %s234, 3
        %s236 = scalar_select %p235, %s234, 3
        %s237 = smul.addr %s236, 4
        %s238 = scalar_lea.vmem %s3, %s237
        %s239 = smul.u32 2, %s14
        %v241 = vld [vmem:[%s1] sm:$0xf]
        %v242 = vld [vmem:[%s212] sm:$0xff]
        %v243 = vld [vmem:[%s212 + $0x8] sm:$0xff]
        %v244 = vld [vmem:[%s212 + $0x10] sm:$0xff]
        %v245 = vld [vmem:[%s212 + $0x18] sm:$0xff]
        %v246 = vld [vmem:[%s212 + $0x20] sm:$0xff]
        %v247 = vld [vmem:[%s212 + $0x28] sm:$0xff]
        %v248 = vld [vmem:[%s212 + $0x30] sm:$0xff]
        %v249 = vld [vmem:[%s212 + $0x38] sm:$0xff]
        %v250 = vld [vmem:[%s212 + $0x40] sm:$0xff]
        %v251 = vld [vmem:[%s2] sm:$0xff]
        %253 = vset.pattern.permute.xlu0 0
        %254 = vperm.xlu0 %253, %v251
        %v255 = vpop.permute.xlu0 %254
        %v266 = vunpack.c.l.b16 %v242
        %v267 = vunpack.c.h.b16 %v242
        %v268 = vunpack.c.l.b16 %v243
        %v269 = vunpack.c.h.b16 %v243
        %v270 = vunpack.c.l.b16 %v244
        %v271 = vunpack.c.h.b16 %v244
        %v272 = vunpack.c.l.b16 %v245
        %v273 = vunpack.c.h.b16 %v245
        %v274 = vunpack.c.l.b16 %v246
        %v275 = vunpack.c.h.b16 %v246
        %v276 = vunpack.c.l.b16 %v247
        %v277 = vunpack.c.h.b16 %v247
        %v278 = vunpack.c.l.b16 %v248
        %v279 = vunpack.c.h.b16 %v248
        %v280 = vunpack.c.l.b16 %v249
        %v281 = vunpack.c.h.b16 %v249
        %v282 = vunpack.c.l.b16 %v250
        %v283 = vunpack.c.h.b16 %v250
        %v284 = vpack.c.b16 %v268, %v266
        %v285 = vpack.c.b16 %v269, %v267
        %v286 = vpack.c.b16 %v272, %v270
        %v287 = vpack.c.b16 %v273, %v271
        %v288 = vpack.c.b16 %v276, %v274
        %v289 = vpack.c.b16 %v277, %v275
        %v290 = vpack.c.b16 %v280, %v278
        %v291 = vpack.c.b16 %v281, %v279
        %v292 = vpack.c.b16 %v282, %v282
        %v293 = vpack.c.b16 %v283, %v283
        %vm302 = vcmask 588800
        %v304 = vsel %vm302, %v241, 0
        %vm306 = vcmask 1043456
        %v308 = vsel %vm306, %v292, 0
        %v311 = vsel %vm306, %v293, 0
        %313 = vmatprep.subr.bf16.mxu0 %v285
        %314 = vmatpush1.bf16.msra.mxu0 %v284
        %315 = vmatprep.subr.bf16.mxu0 %v287
        %316 = vmatpush1.bf16.msra.mxu0 %v286
        %317 = vmatprep.subr.bf16.mxu0 %v289
        %318 = vmatpush1.bf16.msra.mxu0 %v288
        %319 = vmatprep.subr.bf16.mxu0 %v291
        %320 = vmatpush1.bf16.msra.mxu0 %v290
        %321 = vmatprep.subr.bf16.mxu0 %v311
        %322 = vmatpush1.bf16.msra.mxu0 %v308
        %323 = vmatprep.subr.bf16.mxu0 0
        %324 = vmatpush1.bf16.msra.mxu0 0
        %325 = vmatprep.subr.bf16.mxu0 0
        %326 = vmatpush1.bf16.msra.mxu0 0
        %327 = vmatprep.subr.bf16.mxu0 0
        %328 = vmatpush1.bf16.msra.mxu0 0
        %329 = vmatprep.subr.bf16.mxu0 0
        %330 = vmatpush1.bf16.msra.mxu0 0
        %331 = vmatprep.subr.bf16.mxu0 0
        %332 = vmatpush1.bf16.msra.mxu0 0
        %333 = vmatprep.subr.bf16.mxu0 0
        %334 = vmatpush1.bf16.msra.mxu0 0
        %335 = vmatprep.subr.bf16.mxu0 0
        %336 = vmatpush1.bf16.msra.mxu0 0
        %337 = vmatprep.subr.bf16.mxu0 0
        %338 = vmatpush1.bf16.msra.mxu0 0
        %339 = vmatprep.subr.bf16.mxu0 0
        %340 = vmatpush1.bf16.msra.mxu0 0
        %341 = vmatprep.subr.bf16.mxu0 0
        %342 = vmatpush1.bf16.msra.mxu0 0
        %343 = vmatprep.subr.bf16.mxu0 0
        %344 = vmatpush1.bf16.msra.mxu0 0
        %345 = vmatprep.mubr.bf16.mxu0 0
        %346 = vmatmul.mubr.bf16.gmra.mrb[0].mxu0 %v304
        %v347 = vpop.f32.mrb[0].mxu0
        %v348 = vadd.f32 %v255, %v347
        %v349 = vpop.f32.mrb[0].mxu0
        %v350 = vadd.f32 %v255, %v349
        %v351 = vpop.f32.mrb[0].mxu0
        %v352 = vpop.f32.mrb[0].mxu0
        %353 = vdwg.mxu0
        %v354 = vpack.c.bf16 %v348, %v348
        %v355 = vpack.c.bf16 %v350, %v350
        %v358 = vunpack.c.l.b16 %v354
        %v359 = vunpack.c.l.b16 %v355
        %v360 = vpack.c.b16 %v359, %v358
        %362 = vst [vmem:[%s238] sm:$0xff] %v360
        %s363 = smul.u32 2, %s14
        %p364 = scmp.lt.s32.totalorder %s363, 3
        %s365 = scalar_select %p364, %s363, 3
        %s366 = smul.addr %s365, 4
        %s367 = scalar_lea.vmem %s3, %s366
        // Predicated region
        $region71: #{unet_forward.29} parent=65 // pred_check
          %p368 = pneg %p100
        $region72: #{unet_forward.29} parent=65 // pred_check_branch
          %370 = sbr.rel (%p368) target = $region74
        $region73: #{unet_forward.29} parent=65 // pred_region
          %s371 = smul.u32 2, %s14
        $region74: #{unet_forward.29} parent=65 // pred_fallthru
          _
      $region66: #{unet_forward.29} parent=5 // pred_fallthru
        _
      %p372 = scmp.le.s32.totalorder 2, %s9
      // Predicated region
      $region75: #{unet_forward.29} parent=5 // pred_check
        %p373 = pneg %p372
      $region76: #{unet_forward.29} parent=5 // pred_check_branch
        %375 = sbr.rel (%p373) target = $region78
      $region77: #{unet_forward.29} parent=5 // pred_region
        %s376 = ssub.s32 %s9, 2
        // Predicated region
        $region79: #{unet_forward.29} parent=77 // pred_check
          %p377 = pneg %p106
        $region80: #{unet_forward.29} parent=77 // pred_check_branch
          %379 = sbr.rel (%p377) target = $region82
        $region81: #{unet_forward.29} parent=77 // pred_region
          %s380 = smul.u32 2, %s15
          %p381 = scmp.lt.s32.totalorder %s380, 3
          %s382 = scalar_select %p381, %s380, 3
          %s383 = smul.addr %s382, 4
          %s384 = scalar_lea.vmem %s3, %s383
        $region82: #{unet_forward.29} parent=77 // pred_fallthru
          _
      $region78: #{unet_forward.29} parent=5 // pred_fallthru
        _
    $region6: #{unet_forward.29} parent=1 // loop_footer
      %s13 = sadd.s32 1, %s9
    $region7: #{unet_forward.29} parent=1 // loop_footer_branch
      %8 = sbr.rel target = $region3
    $region8: #{unet_forward.29} parent=1 // loop_exit
      _

</llo_original>
